<compile_context>
chip_gen: v7x
topology: tpu7x:2x2x1
jax: 0.10.0
libtpu: 0.0.40
codegen_flags: <defaults>
</compile_context>

<pallas_src>
import jax
import jax.numpy as jnp
from jax.experimental import pallas as pl
from jax.experimental.pallas import tpu as pltpu

# ---- small synthetic BERT config ----
VOCAB = 100
TYPE_VOCAB = 2
MAX_POS = 16
HIDDEN = 32
NUM_HEADS = 4
HEAD_DIM = HIDDEN // NUM_HEADS
INTERMEDIATE = 64
NUM_LAYERS = 2
LN_EPS = 1e-12
MASK_VALUE = -1e9


# ------------------------- shared math helpers -------------------------
def _layer_norm(x, gamma, beta):
    mean = jnp.mean(x, axis=-1, keepdims=True)
    ctr = x - mean
    var = jnp.mean(ctr * ctr, axis=-1, keepdims=True)
    return ctr * jax.lax.rsqrt(var + LN_EPS) * gamma + beta


def _gelu(x):
    # tanh-approx GELU (HF "gelu_new"-style); tanh runs on the EUP.
    c = 0.7978845608028654  # sqrt(2/pi)
    return 0.5 * x * (1.0 + jnp.tanh(c * (x + 0.044715 * x * x * x)))


# ------------------------- fused Pallas kernel -------------------------
def _bert_fused_kernel(x_ref, mask_ref, emb_g_ref, emb_b_ref,
                       wqkv_ref, bqkv_ref, wo_ref, bo_ref,
                       g1_ref, b1_ref, w1_ref, bi1_ref, w2_ref, bi2_ref,
                       g2_ref, b2_ref, o_ref):
    # One batch element per grid program. x stays resident across all layers.
    x = _layer_norm(x_ref[0], emb_g_ref[...], emb_b_ref[...])   # (S, H)
    amask = mask_ref[0]                                          # (1, S) additive key mask

    for l in range(NUM_LAYERS):
        # ---- self-attention ----
        # fused QKV projection: one (H, 3H) MXU call; Wq/bq are pre-scaled by
        # 1/sqrt(head_dim) at parameter-prep time, so no per-score multiply.
        qkv = jnp.dot(x, wqkv_ref[l],
                      preferred_element_type=jnp.float32) + bqkv_ref[l]   # (S, 3H)

        ctx_heads = []
        for h in range(NUM_HEADS):
            lo = h * HEAD_DIM
            qh = qkv[:, lo:lo + HEAD_DIM]
            kh = qkv[:, HIDDEN + lo:HIDDEN + lo + HEAD_DIM]
            vh = qkv[:, 2 * HIDDEN + lo:2 * HIDDEN + lo + HEAD_DIM]
            # scores = qh @ kh^T  (contract head_dim, no explicit transpose)
            scores = jax.lax.dot_general(
                qh, kh, (((1,), (1,)), ((), ())),
                preferred_element_type=jnp.float32)                       # (S, S)
            scores = scores + amask
            scores = scores - jnp.max(scores, axis=-1, keepdims=True)
            p = jnp.exp(scores)
            p = p * pl.reciprocal(jnp.sum(p, axis=-1, keepdims=True), approx=True)
            ctx_heads.append(jnp.dot(p, vh,
                                     preferred_element_type=jnp.float32))  # (S, dh)

        ctx = jnp.concatenate(ctx_heads, axis=-1)                          # (S, H)
        # single fused output projection + bias
        attn = jnp.dot(ctx, wo_ref[l],
                       preferred_element_type=jnp.float32) + bo_ref[l]
        h1 = _layer_norm(attn + x, g1_ref[l], b1_ref[l])

        # ---- feed-forward ----
        ff = _gelu(jnp.dot(h1, w1_ref[l],
                           preferred_element_type=jnp.float32) + bi1_ref[l])
        ff2 = jnp.dot(ff, w2_ref[l],
                      preferred_element_type=jnp.float32) + bi2_ref[l]
        x = _layer_norm(ff2 + h1, g2_ref[l], b2_ref[l])

    # Only the CLS row is needed by the module's forward -> single tiny store.
    o_ref[0] = x[0:1, :]


# ------------------------- parameter prep (once) -------------------------
def prepare_fused_params(params):
    """Fuse/stack per-layer weights once, in exactly the layout the kernel DMAs."""
    scale = HEAD_DIM ** -0.5
    layers = params["layers"]

    def stack(fn):
        return jnp.stack([fn(lp) for lp in layers], axis=0)

    return {
        "emb_g": params["emb_ln_g"].reshape(1, HIDDEN),
        "emb_b": params["emb_ln_b"].reshape(1, HIDDEN),
        # fused QKV with the attention scale folded into Wq / bq
        "wqkv": stack(lambda lp: jnp.concatenate(
            [lp["wq"] * scale, lp["wk"], lp["wv"]], axis=1)),            # (L, H, 3H)
        "bqkv": stack(lambda lp: jnp.concatenate(
            [lp["bq"] * scale, lp["bk"], lp["bv"]], axis=0).reshape(1, 3 * HIDDEN)),
        "wo": stack(lambda lp: lp["wo"]),                                # (L, H, H)
        "bo": stack(lambda lp: lp["bo"].reshape(1, HIDDEN)),
        "g1": stack(lambda lp: lp["ln1_g"].reshape(1, HIDDEN)),
        "b1": stack(lambda lp: lp["ln1_b"].reshape(1, HIDDEN)),
        "w1": stack(lambda lp: lp["w1"]),                                # (L, H, I)
        "bi1": stack(lambda lp: lp["b1"].reshape(1, INTERMEDIATE)),
        "w2": stack(lambda lp: lp["w2"]),                                # (L, I, H)
        "bi2": stack(lambda lp: lp["b2"].reshape(1, HIDDEN)),
        "g2": stack(lambda lp: lp["ln2_g"].reshape(1, HIDDEN)),
        "b2": stack(lambda lp: lp["ln2_b"].reshape(1, HIDDEN)),
    }


# ------------------------- Pallas wrapper -------------------------
def bert_forward_pallas(params, fused, input_ids, attention_mask, token_type_ids):
    B, S = input_ids.shape
    pos = jnp.arange(S)
    # Embedding gathers are plain-JAX glue (data-dependent gather).
    emb = (jnp.take(params["word_emb"], input_ids, axis=0)
           + jnp.take(params["pos_emb"], pos, axis=0)[None, :, :]
           + jnp.take(params["type_emb"], token_type_ids, axis=0))        # (B, S, H)
    amask = ((1.0 - attention_mask.astype(jnp.float32)) * MASK_VALUE)[:, None, :]  # (B,1,S)

    args = (emb, amask, fused["emb_g"], fused["emb_b"],
            fused["wqkv"], fused["bqkv"], fused["wo"], fused["bo"],
            fused["g1"], fused["b1"], fused["w1"], fused["bi1"],
            fused["w2"], fused["bi2"], fused["g2"], fused["b2"])

    def rep_spec(a):  # full-array block, same for every grid step
        nd = a.ndim
        return pl.BlockSpec(a.shape, lambda b, _nd=nd: (0,) * _nd)

    in_specs = [pl.BlockSpec((1, S, HIDDEN), lambda b: (b, 0, 0)),
                pl.BlockSpec((1, 1, S), lambda b: (b, 0, 0))]
    in_specs += [rep_spec(a) for a in args[2:]]

    out = pl.pallas_call(
        _bert_fused_kernel,
        out_shape=jax.ShapeDtypeStruct((B, 1, HIDDEN), jnp.float32),
        grid=(B,),
        in_specs=in_specs,
        out_specs=pl.BlockSpec((1, 1, HIDDEN), lambda b: (b, 0, 0)),
        # batch elements are independent -> megacore-shardable on v7x
        compiler_params=pltpu.CompilerParams(dimension_semantics=("parallel",)),
    )(*args)
    return out[:, 0, :]   # == last_hidden_state[:, 0, :]


# ------------------------- pure-JAX reference -------------------------
def reference_forward(params, input_ids, attention_mask, token_type_ids):
    B, S = input_ids.shape
    pos = jnp.arange(S)
    x = (params["word_emb"][input_ids]
         + params["pos_emb"][pos][None]
         + params["type_emb"][token_type_ids])
    x = _layer_norm(x, params["emb_ln_g"], params["emb_ln_b"])
    amask = (1.0 - attention_mask.astype(jnp.float32)) * MASK_VALUE
    for lp in params["layers"]:
        q = x @ lp["wq"] + lp["bq"]
        k = x @ lp["wk"] + lp["bk"]
        v = x @ lp["wv"] + lp["bv"]
        q = q.reshape(B, S, NUM_HEADS, HEAD_DIM).transpose(0, 2, 1, 3)
        k = k.reshape(B, S, NUM_HEADS, HEAD_DIM).transpose(0, 2, 1, 3)
        v = v.reshape(B, S, NUM_HEADS, HEAD_DIM).transpose(0, 2, 1, 3)
        scores = jnp.einsum("bhqd,bhkd->bhqk", q, k) * (HEAD_DIM ** -0.5)
        scores = scores + amask[:, None, None, :]
        p = jax.nn.softmax(scores, axis=-1)
        ctx = jnp.einsum("bhqk,bhkd->bhqd", p, v).transpose(0, 2, 1, 3)
        ctx = ctx.reshape(B, S, HIDDEN)
        attn = ctx @ lp["wo"] + lp["bo"]
        h1 = _layer_norm(attn + x, lp["ln1_g"], lp["ln1_b"])
        ff = _gelu(h1 @ lp["w1"] + lp["b1"])
        ff2 = ff @ lp["w2"] + lp["b2"]
        x = _layer_norm(ff2 + h1, lp["ln2_g"], lp["ln2_b"])
    return x[:, 0, :]


# ------------------------- deterministic parameter init -------------------------
def init_params(key):
    def nrm(k, shape):
        return 0.02 * jax.random.normal(k, shape, dtype=jnp.float32)

    k_word, k_pos, k_type, *layer_keys = jax.random.split(key, 3 + NUM_LAYERS)
    params = {
        "word_emb": nrm(k_word, (VOCAB, HIDDEN)),
        "pos_emb": nrm(k_pos, (MAX_POS, HIDDEN)),
        "type_emb": nrm(k_type, (TYPE_VOCAB, HIDDEN)),
        "emb_ln_g": jnp.ones((HIDDEN,), jnp.float32),
        "emb_ln_b": jnp.zeros((HIDDEN,), jnp.float32),
        "layers": [],
    }
    for lk in layer_keys:
        ks = jax.random.split(lk, 12)
        params["layers"].append({
            "wq": nrm(ks[0], (HIDDEN, HIDDEN)), "bq": nrm(ks[6], (HIDDEN,)),
            "wk": nrm(ks[1], (HIDDEN, HIDDEN)), "bk": nrm(ks[7], (HIDDEN,)),
            "wv": nrm(ks[2], (HIDDEN, HIDDEN)), "bv": nrm(ks[8], (HIDDEN,)),
            "wo": nrm(ks[3], (HIDDEN, HIDDEN)), "bo": nrm(ks[9], (HIDDEN,)),
            "w1": nrm(ks[4], (HIDDEN, INTERMEDIATE)), "b1": nrm(ks[10], (INTERMEDIATE,)),
            "w2": nrm(ks[5], (INTERMEDIATE, HIDDEN)), "b2": nrm(ks[11], (HIDDEN,)),
            "ln1_g": jnp.ones((HIDDEN,), jnp.float32),
            "ln1_b": jnp.zeros((HIDDEN,), jnp.float32),
            "ln2_g": jnp.ones((HIDDEN,), jnp.float32),
            "ln2_b": jnp.zeros((HIDDEN,), jnp.float32),
        })
    return params


if __name__ == "__main__":
    key = jax.random.PRNGKey(0)
    kp, kid = jax.random.split(key, 2)
    params = init_params(kp)
    fused = prepare_fused_params(params)   # weight fusion/stacking done once

    B, S = 2, 8
    input_ids = jax.random.randint(kid, (B, S), 0, VOCAB, dtype=jnp.int32)
    token_type_ids = jnp.concatenate(
        [jnp.zeros((B, S // 2), jnp.int32), jnp.ones((B, S // 2), jnp.int32)], axis=1)
    # second batch element has 2 padded positions
    attention_mask = jnp.array([[1] * S, [1] * (S - 2) + [0, 0]], dtype=jnp.int32)

    forward = jax.jit(bert_forward_pallas)
    cls = forward(params, fused, input_ids, attention_mask, token_type_ids)
    cls = jax.block_until_ready(cls)

    ref = reference_forward(params, input_ids, attention_mask, token_type_ids)
    assert cls.shape == (B, HIDDEN), cls.shape
    assert jnp.allclose(cls, ref, atol=1e-2, rtol=1e-2), "kernel/reference mismatch"
    print("KERNEL_OK")
</pallas_src>

<mosaic_0001>
module attributes {stable_mosaic.version = 11 : i64} {
  func.func @_bert_fused_kernel(%arg0: i32, %arg1: memref<1x8x32xf32, #tpu.memory_space<vmem>>, %arg2: memref<1x1x8xf32, #tpu.memory_space<vmem>>, %arg3: memref<1x32xf32, #tpu.memory_space<vmem>>, %arg4: memref<1x32xf32, #tpu.memory_space<vmem>>, %arg5: memref<2x32x96xf32, #tpu.memory_space<vmem>>, %arg6: memref<2x1x96xf32, #tpu.memory_space<vmem>>, %arg7: memref<2x32x32xf32, #tpu.memory_space<vmem>>, %arg8: memref<2x1x32xf32, #tpu.memory_space<vmem>>, %arg9: memref<2x1x32xf32, #tpu.memory_space<vmem>>, %arg10: memref<2x1x32xf32, #tpu.memory_space<vmem>>, %arg11: memref<2x32x64xf32, #tpu.memory_space<vmem>>, %arg12: memref<2x1x64xf32, #tpu.memory_space<vmem>>, %arg13: memref<2x64x32xf32, #tpu.memory_space<vmem>>, %arg14: memref<2x1x32xf32, #tpu.memory_space<vmem>>, %arg15: memref<2x1x32xf32, #tpu.memory_space<vmem>>, %arg16: memref<2x1x32xf32, #tpu.memory_space<vmem>>, %arg17: memref<1x1x32xf32, #tpu.memory_space<vmem>>) attributes {dimension_semantics = [#tpu.dimension_semantics<parallel>], iteration_bounds = array<i64: 2>, scalar_prefetch = 0 : i64, scratch_operands = 0 : i64, tpu.core_type = #tpu.core_type<tc>, window_params = [{transform_indices = @transform_0, window_bounds = array<i64: 1, 8, 32>}, {transform_indices = @transform_1, window_bounds = array<i64: 1, 1, 8>}, {pipeline_mode = #tpu.pipeline_mode<synchronous>, transform_indices = @transform_2, window_bounds = array<i64: 1, 32>}, {pipeline_mode = #tpu.pipeline_mode<synchronous>, transform_indices = @transform_3, window_bounds = array<i64: 1, 32>}, {pipeline_mode = #tpu.pipeline_mode<synchronous>, transform_indices = @transform_4, window_bounds = array<i64: 2, 32, 96>}, {pipeline_mode = #tpu.pipeline_mode<synchronous>, transform_indices = @transform_5, window_bounds = array<i64: 2, 1, 96>}, {pipeline_mode = #tpu.pipeline_mode<synchronous>, transform_indices = @transform_6, window_bounds = array<i64: 2, 32, 32>}, {pipeline_mode = #tpu.pipeline_mode<synchronous>, transform_indices = @transform_7, window_bounds = array<i64: 2, 1, 32>}, {pipeline_mode = #tpu.pipeline_mode<synchronous>, transform_indices = @transform_8, window_bounds = array<i64: 2, 1, 32>}, {pipeline_mode = #tpu.pipeline_mode<synchronous>, transform_indices = @transform_9, window_bounds = array<i64: 2, 1, 32>}, {pipeline_mode = #tpu.pipeline_mode<synchronous>, transform_indices = @transform_10, window_bounds = array<i64: 2, 32, 64>}, {pipeline_mode = #tpu.pipeline_mode<synchronous>, transform_indices = @transform_11, window_bounds = array<i64: 2, 1, 64>}, {pipeline_mode = #tpu.pipeline_mode<synchronous>, transform_indices = @transform_12, window_bounds = array<i64: 2, 64, 32>}, {pipeline_mode = #tpu.pipeline_mode<synchronous>, transform_indices = @transform_13, window_bounds = array<i64: 2, 1, 32>}, {pipeline_mode = #tpu.pipeline_mode<synchronous>, transform_indices = @transform_14, window_bounds = array<i64: 2, 1, 32>}, {pipeline_mode = #tpu.pipeline_mode<synchronous>, transform_indices = @transform_15, window_bounds = array<i64: 2, 1, 32>}, {transform_indices = @transform_16, window_bounds = array<i64: 1, 1, 32>}]} {
    %c0 = arith.constant 0 : index
    %c0_0 = arith.constant 0 : index
    %c0_1 = arith.constant 0 : index
    %0 = vector.load %arg1[%c0, %c0_0, %c0_1] : memref<1x8x32xf32, #tpu.memory_space<vmem>>, vector<1x8x32xf32>
    %1 = vector.shape_cast %0 : vector<1x8x32xf32> to vector<8x32xf32>
    %c0_2 = arith.constant 0 : index
    %c0_3 = arith.constant 0 : index
    %2 = vector.load %arg3[%c0_2, %c0_3] : memref<1x32xf32, #tpu.memory_space<vmem>>, vector<1x32xf32>
    %c0_4 = arith.constant 0 : index
    %c0_5 = arith.constant 0 : index
    %3 = vector.load %arg4[%c0_4, %c0_5] : memref<1x32xf32, #tpu.memory_space<vmem>>, vector<1x32xf32>
    %cst = arith.constant dense<0.000000e+00> : vector<8xf32>
    %4 = vector.multi_reduction <add>, %1, %cst [1] : vector<8x32xf32> to vector<8xf32>
    %5 = vector.shape_cast %4 : vector<8xf32> to vector<8x1xf32>
    %cst_6 = arith.constant 3.200000e+01 : f32
    %6 = vector.broadcast %cst_6 : f32 to vector<8x1xf32>
    %7 = arith.divf %5, %6 : vector<8x1xf32>
    %8 = vector.broadcast %7 : vector<8x1xf32> to vector<8x32xf32>
    %9 = arith.subf %1, %8 : vector<8x32xf32>
    %10 = arith.mulf %9, %9 : vector<8x32xf32>
    %cst_7 = arith.constant dense<0.000000e+00> : vector<8xf32>
    %11 = vector.multi_reduction <add>, %10, %cst_7 [1] : vector<8x32xf32> to vector<8xf32>
    %12 = vector.shape_cast %11 : vector<8xf32> to vector<8x1xf32>
    %cst_8 = arith.constant 3.200000e+01 : f32
    %13 = vector.broadcast %cst_8 : f32 to vector<8x1xf32>
    %14 = arith.divf %12, %13 : vector<8x1xf32>
    %cst_9 = arith.constant 9.99999996E-13 : f32
    %15 = vector.broadcast %cst_9 : f32 to vector<8x1xf32>
    %16 = arith.addf %14, %15 : vector<8x1xf32>
    %17 = math.rsqrt %16 : vector<8x1xf32>
    %18 = vector.broadcast %17 : vector<8x1xf32> to vector<8x32xf32>
    %19 = arith.mulf %9, %18 : vector<8x32xf32>
    %20 = vector.broadcast %2 : vector<1x32xf32> to vector<8x32xf32>
    %21 = arith.mulf %19, %20 : vector<8x32xf32>
    %22 = vector.broadcast %3 : vector<1x32xf32> to vector<8x32xf32>
    %23 = arith.addf %21, %22 : vector<8x32xf32>
    %c0_10 = arith.constant 0 : index
    %c0_11 = arith.constant 0 : index
    %c0_12 = arith.constant 0 : index
    %24 = vector.load %arg2[%c0_10, %c0_11, %c0_12] : memref<1x1x8xf32, #tpu.memory_space<vmem>>, vector<1x1x8xf32>
    %25 = vector.shape_cast %24 : vector<1x1x8xf32> to vector<1x8xf32>
    %c0_13 = arith.constant 0 : index
    %c0_14 = arith.constant 0 : index
    %c0_15 = arith.constant 0 : index
    %26 = vector.load %arg5[%c0_13, %c0_14, %c0_15] : memref<2x32x96xf32, #tpu.memory_space<vmem>>, vector<1x32x96xf32>
    %27 = vector.shape_cast %26 : vector<1x32x96xf32> to vector<32x96xf32>
    %cst_16 = arith.constant dense<0.000000e+00> : vector<8x96xf32>
    %28 = tpu.matmul %23, %27, %cst_16 {dimension_numbers = #tpu.dot_dimension_numbers<[1], [0], [0], [1], [0, 0, 1, 1], [], []>} : vector<8x32xf32>, vector<32x96xf32>, vector<8x96xf32> -> vector<8x96xf32>
    %c0_17 = arith.constant 0 : index
    %c0_18 = arith.constant 0 : index
    %c0_19 = arith.constant 0 : index
    %29 = vector.load %arg6[%c0_17, %c0_18, %c0_19] : memref<2x1x96xf32, #tpu.memory_space<vmem>>, vector<1x1x96xf32>
    %30 = vector.shape_cast %29 : vector<1x1x96xf32> to vector<1x96xf32>
    %31 = vector.broadcast %30 : vector<1x96xf32> to vector<8x96xf32>
    %32 = arith.addf %28, %31 : vector<8x96xf32>
    %33 = vector.extract_strided_slice %32 {offsets = [0, 0], sizes = [8, 8], strides = [1, 1]} : vector<8x96xf32> to vector<8x8xf32>
    %34 = vector.extract_strided_slice %32 {offsets = [0, 32], sizes = [8, 8], strides = [1, 1]} : vector<8x96xf32> to vector<8x8xf32>
    %35 = vector.extract_strided_slice %32 {offsets = [0, 64], sizes = [8, 8], strides = [1, 1]} : vector<8x96xf32> to vector<8x8xf32>
    %cst_20 = arith.constant dense<0.000000e+00> : vector<8x8xf32>
    %36 = tpu.matmul %33, %34, %cst_20 {dimension_numbers = #tpu.dot_dimension_numbers<[1], [1], [0], [0], [0, 0, 1, 0], [], []>} : vector<8x8xf32>, vector<8x8xf32>, vector<8x8xf32> -> vector<8x8xf32>
    %37 = vector.broadcast %25 : vector<1x8xf32> to vector<8x8xf32>
    %38 = arith.addf %36, %37 : vector<8x8xf32>
    %cst_21 = arith.constant dense<0xFF800000> : vector<8xf32>
    %39 = vector.multi_reduction <maximumf>, %38, %cst_21 [1] : vector<8x8xf32> to vector<8xf32>
    %40 = vector.shape_cast %39 : vector<8xf32> to vector<8x1xf32>
    %41 = vector.broadcast %40 : vector<8x1xf32> to vector<8x8xf32>
    %42 = arith.subf %38, %41 : vector<8x8xf32>
    %43 = math.exp %42 : vector<8x8xf32>
    %cst_22 = arith.constant dense<0.000000e+00> : vector<8xf32>
    %44 = vector.multi_reduction <add>, %43, %cst_22 [1] : vector<8x8xf32> to vector<8xf32>
    %45 = vector.shape_cast %44 : vector<8xf32> to vector<8x1xf32>
    %46 = tpu.reciprocal %45 {approx = true} : vector<8x1xf32> -> vector<8x1xf32>
    %47 = vector.broadcast %46 : vector<8x1xf32> to vector<8x8xf32>
    %48 = arith.mulf %43, %47 : vector<8x8xf32>
    %cst_23 = arith.constant dense<0.000000e+00> : vector<8x8xf32>
    %49 = tpu.matmul %48, %35, %cst_23 {dimension_numbers = #tpu.dot_dimension_numbers<[1], [0], [0], [1], [0, 0, 1, 1], [], []>} : vector<8x8xf32>, vector<8x8xf32>, vector<8x8xf32> -> vector<8x8xf32>
    %50 = vector.extract_strided_slice %32 {offsets = [0, 8], sizes = [8, 8], strides = [1, 1]} : vector<8x96xf32> to vector<8x8xf32>
    %51 = vector.extract_strided_slice %32 {offsets = [0, 40], sizes = [8, 8], strides = [1, 1]} : vector<8x96xf32> to vector<8x8xf32>
    %52 = vector.extract_strided_slice %32 {offsets = [0, 72], sizes = [8, 8], strides = [1, 1]} : vector<8x96xf32> to vector<8x8xf32>
    %cst_24 = arith.constant dense<0.000000e+00> : vector<8x8xf32>
    %53 = tpu.matmul %50, %51, %cst_24 {dimension_numbers = #tpu.dot_dimension_numbers<[1], [1], [0], [0], [0, 0, 1, 0], [], []>} : vector<8x8xf32>, vector<8x8xf32>, vector<8x8xf32> -> vector<8x8xf32>
    %54 = vector.broadcast %25 : vector<1x8xf32> to vector<8x8xf32>
    %55 = arith.addf %53, %54 : vector<8x8xf32>
    %cst_25 = arith.constant dense<0xFF800000> : vector<8xf32>
    %56 = vector.multi_reduction <maximumf>, %55, %cst_25 [1] : vector<8x8xf32> to vector<8xf32>
    %57 = vector.shape_cast %56 : vector<8xf32> to vector<8x1xf32>
    %58 = vector.broadcast %57 : vector<8x1xf32> to vector<8x8xf32>
    %59 = arith.subf %55, %58 : vector<8x8xf32>
    %60 = math.exp %59 : vector<8x8xf32>
    %cst_26 = arith.constant dense<0.000000e+00> : vector<8xf32>
    %61 = vector.multi_reduction <add>, %60, %cst_26 [1] : vector<8x8xf32> to vector<8xf32>
    %62 = vector.shape_cast %61 : vector<8xf32> to vector<8x1xf32>
    %63 = tpu.reciprocal %62 {approx = true} : vector<8x1xf32> -> vector<8x1xf32>
    %64 = vector.broadcast %63 : vector<8x1xf32> to vector<8x8xf32>
    %65 = arith.mulf %60, %64 : vector<8x8xf32>
    %cst_27 = arith.constant dense<0.000000e+00> : vector<8x8xf32>
    %66 = tpu.matmul %65, %52, %cst_27 {dimension_numbers = #tpu.dot_dimension_numbers<[1], [0], [0], [1], [0, 0, 1, 1], [], []>} : vector<8x8xf32>, vector<8x8xf32>, vector<8x8xf32> -> vector<8x8xf32>
    %67 = vector.extract_strided_slice %32 {offsets = [0, 16], sizes = [8, 8], strides = [1, 1]} : vector<8x96xf32> to vector<8x8xf32>
    %68 = vector.extract_strided_slice %32 {offsets = [0, 48], sizes = [8, 8], strides = [1, 1]} : vector<8x96xf32> to vector<8x8xf32>
    %69 = vector.extract_strided_slice %32 {offsets = [0, 80], sizes = [8, 8], strides = [1, 1]} : vector<8x96xf32> to vector<8x8xf32>
    %cst_28 = arith.constant dense<0.000000e+00> : vector<8x8xf32>
    %70 = tpu.matmul %67, %68, %cst_28 {dimension_numbers = #tpu.dot_dimension_numbers<[1], [1], [0], [0], [0, 0, 1, 0], [], []>} : vector<8x8xf32>, vector<8x8xf32>, vector<8x8xf32> -> vector<8x8xf32>
    %71 = vector.broadcast %25 : vector<1x8xf32> to vector<8x8xf32>
    %72 = arith.addf %70, %71 : vector<8x8xf32>
    %cst_29 = arith.constant dense<0xFF800000> : vector<8xf32>
    %73 = vector.multi_reduction <maximumf>, %72, %cst_29 [1] : vector<8x8xf32> to vector<8xf32>
    %74 = vector.shape_cast %73 : vector<8xf32> to vector<8x1xf32>
    %75 = vector.broadcast %74 : vector<8x1xf32> to vector<8x8xf32>
    %76 = arith.subf %72, %75 : vector<8x8xf32>
    %77 = math.exp %76 : vector<8x8xf32>
    %cst_30 = arith.constant dense<0.000000e+00> : vector<8xf32>
    %78 = vector.multi_reduction <add>, %77, %cst_30 [1] : vector<8x8xf32> to vector<8xf32>
    %79 = vector.shape_cast %78 : vector<8xf32> to vector<8x1xf32>
    %80 = tpu.reciprocal %79 {approx = true} : vector<8x1xf32> -> vector<8x1xf32>
    %81 = vector.broadcast %80 : vector<8x1xf32> to vector<8x8xf32>
    %82 = arith.mulf %77, %81 : vector<8x8xf32>
    %cst_31 = arith.constant dense<0.000000e+00> : vector<8x8xf32>
    %83 = tpu.matmul %82, %69, %cst_31 {dimension_numbers = #tpu.dot_dimension_numbers<[1], [0], [0], [1], [0, 0, 1, 1], [], []>} : vector<8x8xf32>, vector<8x8xf32>, vector<8x8xf32> -> vector<8x8xf32>
    %84 = vector.extract_strided_slice %32 {offsets = [0, 24], sizes = [8, 8], strides = [1, 1]} : vector<8x96xf32> to vector<8x8xf32>
    %85 = vector.extract_strided_slice %32 {offsets = [0, 56], sizes = [8, 8], strides = [1, 1]} : vector<8x96xf32> to vector<8x8xf32>
    %86 = vector.extract_strided_slice %32 {offsets = [0, 88], sizes = [8, 8], strides = [1, 1]} : vector<8x96xf32> to vector<8x8xf32>
    %cst_32 = arith.constant dense<0.000000e+00> : vector<8x8xf32>
    %87 = tpu.matmul %84, %85, %cst_32 {dimension_numbers = #tpu.dot_dimension_numbers<[1], [1], [0], [0], [0, 0, 1, 0], [], []>} : vector<8x8xf32>, vector<8x8xf32>, vector<8x8xf32> -> vector<8x8xf32>
    %88 = vector.broadcast %25 : vector<1x8xf32> to vector<8x8xf32>
    %89 = arith.addf %87, %88 : vector<8x8xf32>
    %cst_33 = arith.constant dense<0xFF800000> : vector<8xf32>
    %90 = vector.multi_reduction <maximumf>, %89, %cst_33 [1] : vector<8x8xf32> to vector<8xf32>
    %91 = vector.shape_cast %90 : vector<8xf32> to vector<8x1xf32>
    %92 = vector.broadcast %91 : vector<8x1xf32> to vector<8x8xf32>
    %93 = arith.subf %89, %92 : vector<8x8xf32>
    %94 = math.exp %93 : vector<8x8xf32>
    %cst_34 = arith.constant dense<0.000000e+00> : vector<8xf32>
    %95 = vector.multi_reduction <add>, %94, %cst_34 [1] : vector<8x8xf32> to vector<8xf32>
    %96 = vector.shape_cast %95 : vector<8xf32> to vector<8x1xf32>
    %97 = tpu.reciprocal %96 {approx = true} : vector<8x1xf32> -> vector<8x1xf32>
    %98 = vector.broadcast %97 : vector<8x1xf32> to vector<8x8xf32>
    %99 = arith.mulf %94, %98 : vector<8x8xf32>
    %cst_35 = arith.constant dense<0.000000e+00> : vector<8x8xf32>
    %100 = tpu.matmul %99, %86, %cst_35 {dimension_numbers = #tpu.dot_dimension_numbers<[1], [0], [0], [1], [0, 0, 1, 1], [], []>} : vector<8x8xf32>, vector<8x8xf32>, vector<8x8xf32> -> vector<8x8xf32>
    %101 = tpu.concatenate %49, %66, %83, %100 in 1 : vector<8x8xf32>, vector<8x8xf32>, vector<8x8xf32>, vector<8x8xf32> -> vector<8x32xf32>
    %c0_36 = arith.constant 0 : index
    %c0_37 = arith.constant 0 : index
    %c0_38 = arith.constant 0 : index
    %102 = vector.load %arg7[%c0_36, %c0_37, %c0_38] : memref<2x32x32xf32, #tpu.memory_space<vmem>>, vector<1x32x32xf32>
    %103 = vector.shape_cast %102 : vector<1x32x32xf32> to vector<32x32xf32>
    %cst_39 = arith.constant dense<0.000000e+00> : vector<8x32xf32>
    %104 = tpu.matmul %101, %103, %cst_39 {dimension_numbers = #tpu.dot_dimension_numbers<[1], [0], [0], [1], [0, 0, 1, 1], [], []>} : vector<8x32xf32>, vector<32x32xf32>, vector<8x32xf32> -> vector<8x32xf32>
    %c0_40 = arith.constant 0 : index
    %c0_41 = arith.constant 0 : index
    %c0_42 = arith.constant 0 : index
    %105 = vector.load %arg8[%c0_40, %c0_41, %c0_42] : memref<2x1x32xf32, #tpu.memory_space<vmem>>, vector<1x1x32xf32>
    %106 = vector.shape_cast %105 : vector<1x1x32xf32> to vector<1x32xf32>
    %107 = vector.broadcast %106 : vector<1x32xf32> to vector<8x32xf32>
    %108 = arith.addf %104, %107 : vector<8x32xf32>
    %109 = arith.addf %108, %23 : vector<8x32xf32>
    %c0_43 = arith.constant 0 : index
    %c0_44 = arith.constant 0 : index
    %c0_45 = arith.constant 0 : index
    %110 = vector.load %arg9[%c0_43, %c0_44, %c0_45] : memref<2x1x32xf32, #tpu.memory_space<vmem>>, vector<1x1x32xf32>
    %111 = vector.shape_cast %110 : vector<1x1x32xf32> to vector<1x32xf32>
    %c0_46 = arith.constant 0 : index
    %c0_47 = arith.constant 0 : index
    %c0_48 = arith.constant 0 : index
    %112 = vector.load %arg10[%c0_46, %c0_47, %c0_48] : memref<2x1x32xf32, #tpu.memory_space<vmem>>, vector<1x1x32xf32>
    %113 = vector.shape_cast %112 : vector<1x1x32xf32> to vector<1x32xf32>
    %cst_49 = arith.constant dense<0.000000e+00> : vector<8xf32>
    %114 = vector.multi_reduction <add>, %109, %cst_49 [1] : vector<8x32xf32> to vector<8xf32>
    %115 = vector.shape_cast %114 : vector<8xf32> to vector<8x1xf32>
    %cst_50 = arith.constant 3.200000e+01 : f32
    %116 = vector.broadcast %cst_50 : f32 to vector<8x1xf32>
    %117 = arith.divf %115, %116 : vector<8x1xf32>
    %118 = vector.broadcast %117 : vector<8x1xf32> to vector<8x32xf32>
    %119 = arith.subf %109, %118 : vector<8x32xf32>
    %120 = arith.mulf %119, %119 : vector<8x32xf32>
    %cst_51 = arith.constant dense<0.000000e+00> : vector<8xf32>
    %121 = vector.multi_reduction <add>, %120, %cst_51 [1] : vector<8x32xf32> to vector<8xf32>
    %122 = vector.shape_cast %121 : vector<8xf32> to vector<8x1xf32>
    %cst_52 = arith.constant 3.200000e+01 : f32
    %123 = vector.broadcast %cst_52 : f32 to vector<8x1xf32>
    %124 = arith.divf %122, %123 : vector<8x1xf32>
    %cst_53 = arith.constant 9.99999996E-13 : f32
    %125 = vector.broadcast %cst_53 : f32 to vector<8x1xf32>
    %126 = arith.addf %124, %125 : vector<8x1xf32>
    %127 = math.rsqrt %126 : vector<8x1xf32>
    %128 = vector.broadcast %127 : vector<8x1xf32> to vector<8x32xf32>
    %129 = arith.mulf %119, %128 : vector<8x32xf32>
    %130 = vector.broadcast %111 : vector<1x32xf32> to vector<8x32xf32>
    %131 = arith.mulf %129, %130 : vector<8x32xf32>
    %132 = vector.broadcast %113 : vector<1x32xf32> to vector<8x32xf32>
    %133 = arith.addf %131, %132 : vector<8x32xf32>
    %c0_54 = arith.constant 0 : index
    %c0_55 = arith.constant 0 : index
    %c0_56 = arith.constant 0 : index
    %134 = vector.load %arg11[%c0_54, %c0_55, %c0_56] : memref<2x32x64xf32, #tpu.memory_space<vmem>>, vector<1x32x64xf32>
    %135 = vector.shape_cast %134 : vector<1x32x64xf32> to vector<32x64xf32>
    %cst_57 = arith.constant dense<0.000000e+00> : vector<8x64xf32>
    %136 = tpu.matmul %133, %135, %cst_57 {dimension_numbers = #tpu.dot_dimension_numbers<[1], [0], [0], [1], [0, 0, 1, 1], [], []>} : vector<8x32xf32>, vector<32x64xf32>, vector<8x64xf32> -> vector<8x64xf32>
    %c0_58 = arith.constant 0 : index
    %c0_59 = arith.constant 0 : index
    %c0_60 = arith.constant 0 : index
    %137 = vector.load %arg12[%c0_58, %c0_59, %c0_60] : memref<2x1x64xf32, #tpu.memory_space<vmem>>, vector<1x1x64xf32>
    %138 = vector.shape_cast %137 : vector<1x1x64xf32> to vector<1x64xf32>
    %139 = vector.broadcast %138 : vector<1x64xf32> to vector<8x64xf32>
    %140 = arith.addf %136, %139 : vector<8x64xf32>
    %cst_61 = arith.constant 5.000000e-01 : f32
    %141 = vector.broadcast %cst_61 : f32 to vector<8x64xf32>
    %142 = arith.mulf %141, %140 : vector<8x64xf32>
    %cst_62 = arith.constant 4.471500e-02 : f32
    %143 = vector.broadcast %cst_62 : f32 to vector<8x64xf32>
    %144 = arith.mulf %143, %140 : vector<8x64xf32>
    %145 = arith.mulf %144, %140 : vector<8x64xf32>
    %146 = arith.mulf %145, %140 : vector<8x64xf32>
    %147 = arith.addf %140, %146 : vector<8x64xf32>
    %cst_63 = arith.constant 0.797884583 : f32
    %148 = vector.broadcast %cst_63 : f32 to vector<8x64xf32>
    %149 = arith.mulf %148, %147 : vector<8x64xf32>
    %150 = math.tanh %149 : vector<8x64xf32>
    %cst_64 = arith.constant 1.000000e+00 : f32
    %151 = vector.broadcast %cst_64 : f32 to vector<8x64xf32>
    %152 = arith.addf %151, %150 : vector<8x64xf32>
    %153 = arith.mulf %142, %152 : vector<8x64xf32>
    %c0_65 = arith.constant 0 : index
    %c0_66 = arith.constant 0 : index
    %c0_67 = arith.constant 0 : index
    %154 = vector.load %arg13[%c0_65, %c0_66, %c0_67] : memref<2x64x32xf32, #tpu.memory_space<vmem>>, vector<1x64x32xf32>
    %155 = vector.shape_cast %154 : vector<1x64x32xf32> to vector<64x32xf32>
    %cst_68 = arith.constant dense<0.000000e+00> : vector<8x32xf32>
    %156 = tpu.matmul %153, %155, %cst_68 {dimension_numbers = #tpu.dot_dimension_numbers<[1], [0], [0], [1], [0, 0, 1, 1], [], []>} : vector<8x64xf32>, vector<64x32xf32>, vector<8x32xf32> -> vector<8x32xf32>
    %c0_69 = arith.constant 0 : index
    %c0_70 = arith.constant 0 : index
    %c0_71 = arith.constant 0 : index
    %157 = vector.load %arg14[%c0_69, %c0_70, %c0_71] : memref<2x1x32xf32, #tpu.memory_space<vmem>>, vector<1x1x32xf32>
    %158 = vector.shape_cast %157 : vector<1x1x32xf32> to vector<1x32xf32>
    %159 = vector.broadcast %158 : vector<1x32xf32> to vector<8x32xf32>
    %160 = arith.addf %156, %159 : vector<8x32xf32>
    %161 = arith.addf %160, %133 : vector<8x32xf32>
    %c0_72 = arith.constant 0 : index
    %c0_73 = arith.constant 0 : index
    %c0_74 = arith.constant 0 : index
    %162 = vector.load %arg15[%c0_72, %c0_73, %c0_74] : memref<2x1x32xf32, #tpu.memory_space<vmem>>, vector<1x1x32xf32>
    %163 = vector.shape_cast %162 : vector<1x1x32xf32> to vector<1x32xf32>
    %c0_75 = arith.constant 0 : index
    %c0_76 = arith.constant 0 : index
    %c0_77 = arith.constant 0 : index
    %164 = vector.load %arg16[%c0_75, %c0_76, %c0_77] : memref<2x1x32xf32, #tpu.memory_space<vmem>>, vector<1x1x32xf32>
    %165 = vector.shape_cast %164 : vector<1x1x32xf32> to vector<1x32xf32>
    %cst_78 = arith.constant dense<0.000000e+00> : vector<8xf32>
    %166 = vector.multi_reduction <add>, %161, %cst_78 [1] : vector<8x32xf32> to vector<8xf32>
    %167 = vector.shape_cast %166 : vector<8xf32> to vector<8x1xf32>
    %cst_79 = arith.constant 3.200000e+01 : f32
    %168 = vector.broadcast %cst_79 : f32 to vector<8x1xf32>
    %169 = arith.divf %167, %168 : vector<8x1xf32>
    %170 = vector.broadcast %169 : vector<8x1xf32> to vector<8x32xf32>
    %171 = arith.subf %161, %170 : vector<8x32xf32>
    %172 = arith.mulf %171, %171 : vector<8x32xf32>
    %cst_80 = arith.constant dense<0.000000e+00> : vector<8xf32>
    %173 = vector.multi_reduction <add>, %172, %cst_80 [1] : vector<8x32xf32> to vector<8xf32>
    %174 = vector.shape_cast %173 : vector<8xf32> to vector<8x1xf32>
    %cst_81 = arith.constant 3.200000e+01 : f32
    %175 = vector.broadcast %cst_81 : f32 to vector<8x1xf32>
    %176 = arith.divf %174, %175 : vector<8x1xf32>
    %cst_82 = arith.constant 9.99999996E-13 : f32
    %177 = vector.broadcast %cst_82 : f32 to vector<8x1xf32>
    %178 = arith.addf %176, %177 : vector<8x1xf32>
    %179 = math.rsqrt %178 : vector<8x1xf32>
    %180 = vector.broadcast %179 : vector<8x1xf32> to vector<8x32xf32>
    %181 = arith.mulf %171, %180 : vector<8x32xf32>
    %182 = vector.broadcast %163 : vector<1x32xf32> to vector<8x32xf32>
    %183 = arith.mulf %181, %182 : vector<8x32xf32>
    %184 = vector.broadcast %165 : vector<1x32xf32> to vector<8x32xf32>
    %185 = arith.addf %183, %184 : vector<8x32xf32>
    %c1 = arith.constant 1 : index
    %c0_83 = arith.constant 0 : index
    %c0_84 = arith.constant 0 : index
    %186 = vector.load %arg5[%c1, %c0_83, %c0_84] : memref<2x32x96xf32, #tpu.memory_space<vmem>>, vector<1x32x96xf32>
    %187 = vector.shape_cast %186 : vector<1x32x96xf32> to vector<32x96xf32>
    %cst_85 = arith.constant dense<0.000000e+00> : vector<8x96xf32>
    %188 = tpu.matmul %185, %187, %cst_85 {dimension_numbers = #tpu.dot_dimension_numbers<[1], [0], [0], [1], [0, 0, 1, 1], [], []>} : vector<8x32xf32>, vector<32x96xf32>, vector<8x96xf32> -> vector<8x96xf32>
    %c1_86 = arith.constant 1 : index
    %c0_87 = arith.constant 0 : index
    %c0_88 = arith.constant 0 : index
    %189 = vector.load %arg6[%c1_86, %c0_87, %c0_88] : memref<2x1x96xf32, #tpu.memory_space<vmem>>, vector<1x1x96xf32>
    %190 = vector.shape_cast %189 : vector<1x1x96xf32> to vector<1x96xf32>
    %191 = vector.broadcast %190 : vector<1x96xf32> to vector<8x96xf32>
    %192 = arith.addf %188, %191 : vector<8x96xf32>
    %193 = vector.extract_strided_slice %192 {offsets = [0, 0], sizes = [8, 8], strides = [1, 1]} : vector<8x96xf32> to vector<8x8xf32>
    %194 = vector.extract_strided_slice %192 {offsets = [0, 32], sizes = [8, 8], strides = [1, 1]} : vector<8x96xf32> to vector<8x8xf32>
    %195 = vector.extract_strided_slice %192 {offsets = [0, 64], sizes = [8, 8], strides = [1, 1]} : vector<8x96xf32> to vector<8x8xf32>
    %cst_89 = arith.constant dense<0.000000e+00> : vector<8x8xf32>
    %196 = tpu.matmul %193, %194, %cst_89 {dimension_numbers = #tpu.dot_dimension_numbers<[1], [1], [0], [0], [0, 0, 1, 0], [], []>} : vector<8x8xf32>, vector<8x8xf32>, vector<8x8xf32> -> vector<8x8xf32>
    %197 = vector.broadcast %25 : vector<1x8xf32> to vector<8x8xf32>
    %198 = arith.addf %196, %197 : vector<8x8xf32>
    %cst_90 = arith.constant dense<0xFF800000> : vector<8xf32>
    %199 = vector.multi_reduction <maximumf>, %198, %cst_90 [1] : vector<8x8xf32> to vector<8xf32>
    %200 = vector.shape_cast %199 : vector<8xf32> to vector<8x1xf32>
    %201 = vector.broadcast %200 : vector<8x1xf32> to vector<8x8xf32>
    %202 = arith.subf %198, %201 : vector<8x8xf32>
    %203 = math.exp %202 : vector<8x8xf32>
    %cst_91 = arith.constant dense<0.000000e+00> : vector<8xf32>
    %204 = vector.multi_reduction <add>, %203, %cst_91 [1] : vector<8x8xf32> to vector<8xf32>
    %205 = vector.shape_cast %204 : vector<8xf32> to vector<8x1xf32>
    %206 = tpu.reciprocal %205 {approx = true} : vector<8x1xf32> -> vector<8x1xf32>
    %207 = vector.broadcast %206 : vector<8x1xf32> to vector<8x8xf32>
    %208 = arith.mulf %203, %207 : vector<8x8xf32>
    %cst_92 = arith.constant dense<0.000000e+00> : vector<8x8xf32>
    %209 = tpu.matmul %208, %195, %cst_92 {dimension_numbers = #tpu.dot_dimension_numbers<[1], [0], [0], [1], [0, 0, 1, 1], [], []>} : vector<8x8xf32>, vector<8x8xf32>, vector<8x8xf32> -> vector<8x8xf32>
    %210 = vector.extract_strided_slice %192 {offsets = [0, 8], sizes = [8, 8], strides = [1, 1]} : vector<8x96xf32> to vector<8x8xf32>
    %211 = vector.extract_strided_slice %192 {offsets = [0, 40], sizes = [8, 8], strides = [1, 1]} : vector<8x96xf32> to vector<8x8xf32>
    %212 = vector.extract_strided_slice %192 {offsets = [0, 72], sizes = [8, 8], strides = [1, 1]} : vector<8x96xf32> to vector<8x8xf32>
    %cst_93 = arith.constant dense<0.000000e+00> : vector<8x8xf32>
    %213 = tpu.matmul %210, %211, %cst_93 {dimension_numbers = #tpu.dot_dimension_numbers<[1], [1], [0], [0], [0, 0, 1, 0], [], []>} : vector<8x8xf32>, vector<8x8xf32>, vector<8x8xf32> -> vector<8x8xf32>
    %214 = vector.broadcast %25 : vector<1x8xf32> to vector<8x8xf32>
    %215 = arith.addf %213, %214 : vector<8x8xf32>
    %cst_94 = arith.constant dense<0xFF800000> : vector<8xf32>
    %216 = vector.multi_reduction <maximumf>, %215, %cst_94 [1] : vector<8x8xf32> to vector<8xf32>
    %217 = vector.shape_cast %216 : vector<8xf32> to vector<8x1xf32>
    %218 = vector.broadcast %217 : vector<8x1xf32> to vector<8x8xf32>
    %219 = arith.subf %215, %218 : vector<8x8xf32>
    %220 = math.exp %219 : vector<8x8xf32>
    %cst_95 = arith.constant dense<0.000000e+00> : vector<8xf32>
    %221 = vector.multi_reduction <add>, %220, %cst_95 [1] : vector<8x8xf32> to vector<8xf32>
    %222 = vector.shape_cast %221 : vector<8xf32> to vector<8x1xf32>
    %223 = tpu.reciprocal %222 {approx = true} : vector<8x1xf32> -> vector<8x1xf32>
    %224 = vector.broadcast %223 : vector<8x1xf32> to vector<8x8xf32>
    %225 = arith.mulf %220, %224 : vector<8x8xf32>
    %cst_96 = arith.constant dense<0.000000e+00> : vector<8x8xf32>
    %226 = tpu.matmul %225, %212, %cst_96 {dimension_numbers = #tpu.dot_dimension_numbers<[1], [0], [0], [1], [0, 0, 1, 1], [], []>} : vector<8x8xf32>, vector<8x8xf32>, vector<8x8xf32> -> vector<8x8xf32>
    %227 = vector.extract_strided_slice %192 {offsets = [0, 16], sizes = [8, 8], strides = [1, 1]} : vector<8x96xf32> to vector<8x8xf32>
    %228 = vector.extract_strided_slice %192 {offsets = [0, 48], sizes = [8, 8], strides = [1, 1]} : vector<8x96xf32> to vector<8x8xf32>
    %229 = vector.extract_strided_slice %192 {offsets = [0, 80], sizes = [8, 8], strides = [1, 1]} : vector<8x96xf32> to vector<8x8xf32>
    %cst_97 = arith.constant dense<0.000000e+00> : vector<8x8xf32>
    %230 = tpu.matmul %227, %228, %cst_97 {dimension_numbers = #tpu.dot_dimension_numbers<[1], [1], [0], [0], [0, 0, 1, 0], [], []>} : vector<8x8xf32>, vector<8x8xf32>, vector<8x8xf32> -> vector<8x8xf32>
    %231 = vector.broadcast %25 : vector<1x8xf32> to vector<8x8xf32>
    %232 = arith.addf %230, %231 : vector<8x8xf32>
    %cst_98 = arith.constant dense<0xFF800000> : vector<8xf32>
    %233 = vector.multi_reduction <maximumf>, %232, %cst_98 [1] : vector<8x8xf32> to vector<8xf32>
    %234 = vector.shape_cast %233 : vector<8xf32> to vector<8x1xf32>
    %235 = vector.broadcast %234 : vector<8x1xf32> to vector<8x8xf32>
    %236 = arith.subf %232, %235 : vector<8x8xf32>
    %237 = math.exp %236 : vector<8x8xf32>
    %cst_99 = arith.constant dense<0.000000e+00> : vector<8xf32>
    %238 = vector.multi_reduction <add>, %237, %cst_99 [1] : vector<8x8xf32> to vector<8xf32>
    %239 = vector.shape_cast %238 : vector<8xf32> to vector<8x1xf32>
    %240 = tpu.reciprocal %239 {approx = true} : vector<8x1xf32> -> vector<8x1xf32>
    %241 = vector.broadcast %240 : vector<8x1xf32> to vector<8x8xf32>
    %242 = arith.mulf %237, %241 : vector<8x8xf32>
    %cst_100 = arith.constant dense<0.000000e+00> : vector<8x8xf32>
    %243 = tpu.matmul %242, %229, %cst_100 {dimension_numbers = #tpu.dot_dimension_numbers<[1], [0], [0], [1], [0, 0, 1, 1], [], []>} : vector<8x8xf32>, vector<8x8xf32>, vector<8x8xf32> -> vector<8x8xf32>
    %244 = vector.extract_strided_slice %192 {offsets = [0, 24], sizes = [8, 8], strides = [1, 1]} : vector<8x96xf32> to vector<8x8xf32>
    %245 = vector.extract_strided_slice %192 {offsets = [0, 56], sizes = [8, 8], strides = [1, 1]} : vector<8x96xf32> to vector<8x8xf32>
    %246 = vector.extract_strided_slice %192 {offsets = [0, 88], sizes = [8, 8], strides = [1, 1]} : vector<8x96xf32> to vector<8x8xf32>
    %cst_101 = arith.constant dense<0.000000e+00> : vector<8x8xf32>
    %247 = tpu.matmul %244, %245, %cst_101 {dimension_numbers = #tpu.dot_dimension_numbers<[1], [1], [0], [0], [0, 0, 1, 0], [], []>} : vector<8x8xf32>, vector<8x8xf32>, vector<8x8xf32> -> vector<8x8xf32>
    %248 = vector.broadcast %25 : vector<1x8xf32> to vector<8x8xf32>
    %249 = arith.addf %247, %248 : vector<8x8xf32>
    %cst_102 = arith.constant dense<0xFF800000> : vector<8xf32>
    %250 = vector.multi_reduction <maximumf>, %249, %cst_102 [1] : vector<8x8xf32> to vector<8xf32>
    %251 = vector.shape_cast %250 : vector<8xf32> to vector<8x1xf32>
    %252 = vector.broadcast %251 : vector<8x1xf32> to vector<8x8xf32>
    %253 = arith.subf %249, %252 : vector<8x8xf32>
    %254 = math.exp %253 : vector<8x8xf32>
    %cst_103 = arith.constant dense<0.000000e+00> : vector<8xf32>
    %255 = vector.multi_reduction <add>, %254, %cst_103 [1] : vector<8x8xf32> to vector<8xf32>
    %256 = vector.shape_cast %255 : vector<8xf32> to vector<8x1xf32>
    %257 = tpu.reciprocal %256 {approx = true} : vector<8x1xf32> -> vector<8x1xf32>
    %258 = vector.broadcast %257 : vector<8x1xf32> to vector<8x8xf32>
    %259 = arith.mulf %254, %258 : vector<8x8xf32>
    %cst_104 = arith.constant dense<0.000000e+00> : vector<8x8xf32>
    %260 = tpu.matmul %259, %246, %cst_104 {dimension_numbers = #tpu.dot_dimension_numbers<[1], [0], [0], [1], [0, 0, 1, 1], [], []>} : vector<8x8xf32>, vector<8x8xf32>, vector<8x8xf32> -> vector<8x8xf32>
    %261 = tpu.concatenate %209, %226, %243, %260 in 1 : vector<8x8xf32>, vector<8x8xf32>, vector<8x8xf32>, vector<8x8xf32> -> vector<8x32xf32>
    %c1_105 = arith.constant 1 : index
    %c0_106 = arith.constant 0 : index
    %c0_107 = arith.constant 0 : index
    %262 = vector.load %arg7[%c1_105, %c0_106, %c0_107] : memref<2x32x32xf32, #tpu.memory_space<vmem>>, vector<1x32x32xf32>
    %263 = vector.shape_cast %262 : vector<1x32x32xf32> to vector<32x32xf32>
    %cst_108 = arith.constant dense<0.000000e+00> : vector<8x32xf32>
    %264 = tpu.matmul %261, %263, %cst_108 {dimension_numbers = #tpu.dot_dimension_numbers<[1], [0], [0], [1], [0, 0, 1, 1], [], []>} : vector<8x32xf32>, vector<32x32xf32>, vector<8x32xf32> -> vector<8x32xf32>
    %c1_109 = arith.constant 1 : index
    %c0_110 = arith.constant 0 : index
    %c0_111 = arith.constant 0 : index
    %265 = vector.load %arg8[%c1_109, %c0_110, %c0_111] : memref<2x1x32xf32, #tpu.memory_space<vmem>>, vector<1x1x32xf32>
    %266 = vector.shape_cast %265 : vector<1x1x32xf32> to vector<1x32xf32>
    %267 = vector.broadcast %266 : vector<1x32xf32> to vector<8x32xf32>
    %268 = arith.addf %264, %267 : vector<8x32xf32>
    %269 = arith.addf %268, %185 : vector<8x32xf32>
    %c1_112 = arith.constant 1 : index
    %c0_113 = arith.constant 0 : index
    %c0_114 = arith.constant 0 : index
    %270 = vector.load %arg9[%c1_112, %c0_113, %c0_114] : memref<2x1x32xf32, #tpu.memory_space<vmem>>, vector<1x1x32xf32>
    %271 = vector.shape_cast %270 : vector<1x1x32xf32> to vector<1x32xf32>
    %c1_115 = arith.constant 1 : index
    %c0_116 = arith.constant 0 : index
    %c0_117 = arith.constant 0 : index
    %272 = vector.load %arg10[%c1_115, %c0_116, %c0_117] : memref<2x1x32xf32, #tpu.memory_space<vmem>>, vector<1x1x32xf32>
    %273 = vector.shape_cast %272 : vector<1x1x32xf32> to vector<1x32xf32>
    %cst_118 = arith.constant dense<0.000000e+00> : vector<8xf32>
    %274 = vector.multi_reduction <add>, %269, %cst_118 [1] : vector<8x32xf32> to vector<8xf32>
    %275 = vector.shape_cast %274 : vector<8xf32> to vector<8x1xf32>
    %cst_119 = arith.constant 3.200000e+01 : f32
    %276 = vector.broadcast %cst_119 : f32 to vector<8x1xf32>
    %277 = arith.divf %275, %276 : vector<8x1xf32>
    %278 = vector.broadcast %277 : vector<8x1xf32> to vector<8x32xf32>
    %279 = arith.subf %269, %278 : vector<8x32xf32>
    %280 = arith.mulf %279, %279 : vector<8x32xf32>
    %cst_120 = arith.constant dense<0.000000e+00> : vector<8xf32>
    %281 = vector.multi_reduction <add>, %280, %cst_120 [1] : vector<8x32xf32> to vector<8xf32>
    %282 = vector.shape_cast %281 : vector<8xf32> to vector<8x1xf32>
    %cst_121 = arith.constant 3.200000e+01 : f32
    %283 = vector.broadcast %cst_121 : f32 to vector<8x1xf32>
    %284 = arith.divf %282, %283 : vector<8x1xf32>
    %cst_122 = arith.constant 9.99999996E-13 : f32
    %285 = vector.broadcast %cst_122 : f32 to vector<8x1xf32>
    %286 = arith.addf %284, %285 : vector<8x1xf32>
    %287 = math.rsqrt %286 : vector<8x1xf32>
    %288 = vector.broadcast %287 : vector<8x1xf32> to vector<8x32xf32>
    %289 = arith.mulf %279, %288 : vector<8x32xf32>
    %290 = vector.broadcast %271 : vector<1x32xf32> to vector<8x32xf32>
    %291 = arith.mulf %289, %290 : vector<8x32xf32>
    %292 = vector.broadcast %273 : vector<1x32xf32> to vector<8x32xf32>
    %293 = arith.addf %291, %292 : vector<8x32xf32>
    %c1_123 = arith.constant 1 : index
    %c0_124 = arith.constant 0 : index
    %c0_125 = arith.constant 0 : index
    %294 = vector.load %arg11[%c1_123, %c0_124, %c0_125] : memref<2x32x64xf32, #tpu.memory_space<vmem>>, vector<1x32x64xf32>
    %295 = vector.shape_cast %294 : vector<1x32x64xf32> to vector<32x64xf32>
    %cst_126 = arith.constant dense<0.000000e+00> : vector<8x64xf32>
    %296 = tpu.matmul %293, %295, %cst_126 {dimension_numbers = #tpu.dot_dimension_numbers<[1], [0], [0], [1], [0, 0, 1, 1], [], []>} : vector<8x32xf32>, vector<32x64xf32>, vector<8x64xf32> -> vector<8x64xf32>
    %c1_127 = arith.constant 1 : index
    %c0_128 = arith.constant 0 : index
    %c0_129 = arith.constant 0 : index
    %297 = vector.load %arg12[%c1_127, %c0_128, %c0_129] : memref<2x1x64xf32, #tpu.memory_space<vmem>>, vector<1x1x64xf32>
    %298 = vector.shape_cast %297 : vector<1x1x64xf32> to vector<1x64xf32>
    %299 = vector.broadcast %298 : vector<1x64xf32> to vector<8x64xf32>
    %300 = arith.addf %296, %299 : vector<8x64xf32>
    %cst_130 = arith.constant 5.000000e-01 : f32
    %301 = vector.broadcast %cst_130 : f32 to vector<8x64xf32>
    %302 = arith.mulf %301, %300 : vector<8x64xf32>
    %cst_131 = arith.constant 4.471500e-02 : f32
    %303 = vector.broadcast %cst_131 : f32 to vector<8x64xf32>
    %304 = arith.mulf %303, %300 : vector<8x64xf32>
    %305 = arith.mulf %304, %300 : vector<8x64xf32>
    %306 = arith.mulf %305, %300 : vector<8x64xf32>
    %307 = arith.addf %300, %306 : vector<8x64xf32>
    %cst_132 = arith.constant 0.797884583 : f32
    %308 = vector.broadcast %cst_132 : f32 to vector<8x64xf32>
    %309 = arith.mulf %308, %307 : vector<8x64xf32>
    %310 = math.tanh %309 : vector<8x64xf32>
    %cst_133 = arith.constant 1.000000e+00 : f32
    %311 = vector.broadcast %cst_133 : f32 to vector<8x64xf32>
    %312 = arith.addf %311, %310 : vector<8x64xf32>
    %313 = arith.mulf %302, %312 : vector<8x64xf32>
    %c1_134 = arith.constant 1 : index
    %c0_135 = arith.constant 0 : index
    %c0_136 = arith.constant 0 : index
    %314 = vector.load %arg13[%c1_134, %c0_135, %c0_136] : memref<2x64x32xf32, #tpu.memory_space<vmem>>, vector<1x64x32xf32>
    %315 = vector.shape_cast %314 : vector<1x64x32xf32> to vector<64x32xf32>
    %cst_137 = arith.constant dense<0.000000e+00> : vector<8x32xf32>
    %316 = tpu.matmul %313, %315, %cst_137 {dimension_numbers = #tpu.dot_dimension_numbers<[1], [0], [0], [1], [0, 0, 1, 1], [], []>} : vector<8x64xf32>, vector<64x32xf32>, vector<8x32xf32> -> vector<8x32xf32>
    %c1_138 = arith.constant 1 : index
    %c0_139 = arith.constant 0 : index
    %c0_140 = arith.constant 0 : index
    %317 = vector.load %arg14[%c1_138, %c0_139, %c0_140] : memref<2x1x32xf32, #tpu.memory_space<vmem>>, vector<1x1x32xf32>
    %318 = vector.shape_cast %317 : vector<1x1x32xf32> to vector<1x32xf32>
    %319 = vector.broadcast %318 : vector<1x32xf32> to vector<8x32xf32>
    %320 = arith.addf %316, %319 : vector<8x32xf32>
    %321 = arith.addf %320, %293 : vector<8x32xf32>
    %c1_141 = arith.constant 1 : index
    %c0_142 = arith.constant 0 : index
    %c0_143 = arith.constant 0 : index
    %322 = vector.load %arg15[%c1_141, %c0_142, %c0_143] : memref<2x1x32xf32, #tpu.memory_space<vmem>>, vector<1x1x32xf32>
    %323 = vector.shape_cast %322 : vector<1x1x32xf32> to vector<1x32xf32>
    %c1_144 = arith.constant 1 : index
    %c0_145 = arith.constant 0 : index
    %c0_146 = arith.constant 0 : index
    %324 = vector.load %arg16[%c1_144, %c0_145, %c0_146] : memref<2x1x32xf32, #tpu.memory_space<vmem>>, vector<1x1x32xf32>
    %325 = vector.shape_cast %324 : vector<1x1x32xf32> to vector<1x32xf32>
    %cst_147 = arith.constant dense<0.000000e+00> : vector<8xf32>
    %326 = vector.multi_reduction <add>, %321, %cst_147 [1] : vector<8x32xf32> to vector<8xf32>
    %327 = vector.shape_cast %326 : vector<8xf32> to vector<8x1xf32>
    %cst_148 = arith.constant 3.200000e+01 : f32
    %328 = vector.broadcast %cst_148 : f32 to vector<8x1xf32>
    %329 = arith.divf %327, %328 : vector<8x1xf32>
    %330 = vector.broadcast %329 : vector<8x1xf32> to vector<8x32xf32>
    %331 = arith.subf %321, %330 : vector<8x32xf32>
    %332 = arith.mulf %331, %331 : vector<8x32xf32>
    %cst_149 = arith.constant dense<0.000000e+00> : vector<8xf32>
    %333 = vector.multi_reduction <add>, %332, %cst_149 [1] : vector<8x32xf32> to vector<8xf32>
    %334 = vector.shape_cast %333 : vector<8xf32> to vector<8x1xf32>
    %cst_150 = arith.constant 3.200000e+01 : f32
    %335 = vector.broadcast %cst_150 : f32 to vector<8x1xf32>
    %336 = arith.divf %334, %335 : vector<8x1xf32>
    %cst_151 = arith.constant 9.99999996E-13 : f32
    %337 = vector.broadcast %cst_151 : f32 to vector<8x1xf32>
    %338 = arith.addf %336, %337 : vector<8x1xf32>
    %339 = math.rsqrt %338 : vector<8x1xf32>
    %340 = vector.broadcast %339 : vector<8x1xf32> to vector<8x32xf32>
    %341 = arith.mulf %331, %340 : vector<8x32xf32>
    %342 = vector.broadcast %323 : vector<1x32xf32> to vector<8x32xf32>
    %343 = arith.mulf %341, %342 : vector<8x32xf32>
    %344 = vector.broadcast %325 : vector<1x32xf32> to vector<8x32xf32>
    %345 = arith.addf %343, %344 : vector<8x32xf32>
    %346 = vector.extract_strided_slice %345 {offsets = [0, 0], sizes = [1, 32], strides = [1, 1]} : vector<8x32xf32> to vector<1x32xf32>
    %c0_152 = arith.constant 0 : index
    %c0_153 = arith.constant 0 : index
    %c0_154 = arith.constant 0 : index
    %347 = vector.load %arg17[%c0_152, %c0_153, %c0_154] : memref<1x1x32xf32, #tpu.memory_space<vmem>>, vector<1x1x32xf32>
    %348 = vector.shape_cast %347 : vector<1x1x32xf32> to vector<1x32xf32>
    %349 = vector.shape_cast %346 : vector<1x32xf32> to vector<1x1x32xf32>
    tpu.vector_store %arg17[%c0_152, %c0_153, %c0_154], %349 {strides = array<i32>} : memref<1x1x32xf32, #tpu.memory_space<vmem>>, vector<1x1x32xf32>,
    return
  }
  func.func @transform_0(%arg0: i32) -> (i32, i32, i32) {
    %c0_i32 = arith.constant 0 : i32
    %c0_i32_0 = arith.constant 0 : i32
    %c0_i32_1 = arith.constant 0 : i32
    return %arg0, %c0_i32, %c0_i32_0 : i32, i32, i32
  }
  func.func @transform_1(%arg0: i32) -> (i32, i32, i32) {
    %c0_i32 = arith.constant 0 : i32
    %c0_i32_0 = arith.constant 0 : i32
    %c0_i32_1 = arith.constant 0 : i32
    return %arg0, %c0_i32, %c0_i32_0 : i32, i32, i32
  }
  func.func @transform_2(%arg0: i32) -> (i32, i32) {
    %c0_i32 = arith.constant 0 : i32
    %c0_i32_0 = arith.constant 0 : i32
    %c0_i32_1 = arith.constant 0 : i32
    return %c0_i32, %c0_i32_0 : i32, i32
  }
  func.func @transform_3(%arg0: i32) -> (i32, i32) {
    %c0_i32 = arith.constant 0 : i32
    %c0_i32_0 = arith.constant 0 : i32
    %c0_i32_1 = arith.constant 0 : i32
    return %c0_i32, %c0_i32_0 : i32, i32
  }
  func.func @transform_4(%arg0: i32) -> (i32, i32, i32) {
    %c0_i32 = arith.constant 0 : i32
    %c0_i32_0 = arith.constant 0 : i32
    %c0_i32_1 = arith.constant 0 : i32
    %c0_i32_2 = arith.constant 0 : i32
    return %c0_i32, %c0_i32_0, %c0_i32_1 : i32, i32, i32
  }
  func.func @transform_5(%arg0: i32) -> (i32, i32, i32) {
    %c0_i32 = arith.constant 0 : i32
    %c0_i32_0 = arith.constant 0 : i32
    %c0_i32_1 = arith.constant 0 : i32
    %c0_i32_2 = arith.constant 0 : i32
    return %c0_i32, %c0_i32_0, %c0_i32_1 : i32, i32, i32
  }
  func.func @transform_6(%arg0: i32) -> (i32, i32, i32) {
    %c0_i32 = arith.constant 0 : i32
    %c0_i32_0 = arith.constant 0 : i32
    %c0_i32_1 = arith.constant 0 : i32
    %c0_i32_2 = arith.constant 0 : i32
    return %c0_i32, %c0_i32_0, %c0_i32_1 : i32, i32, i32
  }
  func.func @transform_7(%arg0: i32) -> (i32, i32, i32) {
    %c0_i32 = arith.constant 0 : i32
    %c0_i32_0 = arith.constant 0 : i32
    %c0_i32_1 = arith.constant 0 : i32
    %c0_i32_2 = arith.constant 0 : i32
    return %c0_i32, %c0_i32_0, %c0_i32_1 : i32, i32, i32
  }
  func.func @transform_8(%arg0: i32) -> (i32, i32, i32) {
    %c0_i32 = arith.constant 0 : i32
    %c0_i32_0 = arith.constant 0 : i32
    %c0_i32_1 = arith.constant 0 : i32
    %c0_i32_2 = arith.constant 0 : i32
    return %c0_i32, %c0_i32_0, %c0_i32_1 : i32, i32, i32
  }
  func.func @transform_9(%arg0: i32) -> (i32, i32, i32) {
    %c0_i32 = arith.constant 0 : i32
    %c0_i32_0 = arith.constant 0 : i32
    %c0_i32_1 = arith.constant 0 : i32
    %c0_i32_2 = arith.constant 0 : i32
    return %c0_i32, %c0_i32_0, %c0_i32_1 : i32, i32, i32
  }
  func.func @transform_10(%arg0: i32) -> (i32, i32, i32) {
    %c0_i32 = arith.constant 0 : i32
    %c0_i32_0 = arith.constant 0 : i32
    %c0_i32_1 = arith.constant 0 : i32
    %c0_i32_2 = arith.constant 0 : i32
    return %c0_i32, %c0_i32_0, %c0_i32_1 : i32, i32, i32
  }
  func.func @transform_11(%arg0: i32) -> (i32, i32, i32) {
    %c0_i32 = arith.constant 0 : i32
    %c0_i32_0 = arith.constant 0 : i32
    %c0_i32_1 = arith.constant 0 : i32
    %c0_i32_2 = arith.constant 0 : i32
    return %c0_i32, %c0_i32_0, %c0_i32_1 : i32, i32, i32
  }
  func.func @transform_12(%arg0: i32) -> (i32, i32, i32) {
    %c0_i32 = arith.constant 0 : i32
    %c0_i32_0 = arith.constant 0 : i32
    %c0_i32_1 = arith.constant 0 : i32
    %c0_i32_2 = arith.constant 0 : i32
    return %c0_i32, %c0_i32_0, %c0_i32_1 : i32, i32, i32
  }
  func.func @transform_13(%arg0: i32) -> (i32, i32, i32) {
    %c0_i32 = arith.constant 0 : i32
    %c0_i32_0 = arith.constant 0 : i32
    %c0_i32_1 = arith.constant 0 : i32
    %c0_i32_2 = arith.constant 0 : i32
    return %c0_i32, %c0_i32_0, %c0_i32_1 : i32, i32, i32
  }
  func.func @transform_14(%arg0: i32) -> (i32, i32, i32) {
    %c0_i32 = arith.constant 0 : i32
    %c0_i32_0 = arith.constant 0 : i32
    %c0_i32_1 = arith.constant 0 : i32
    %c0_i32_2 = arith.constant 0 : i32
    return %c0_i32, %c0_i32_0, %c0_i32_1 : i32, i32, i32
  }
  func.func @transform_15(%arg0: i32) -> (i32, i32, i32) {
    %c0_i32 = arith.constant 0 : i32
    %c0_i32_0 = arith.constant 0 : i32
    %c0_i32_1 = arith.constant 0 : i32
    %c0_i32_2 = arith.constant 0 : i32
    return %c0_i32, %c0_i32_0, %c0_i32_1 : i32, i32, i32
  }
  func.func @transform_16(%arg0: i32) -> (i32, i32, i32) {
    %c0_i32 = arith.constant 0 : i32
    %c0_i32_0 = arith.constant 0 : i32
    %c0_i32_1 = arith.constant 0 : i32
    return %arg0, %c0_i32, %c0_i32_0 : i32, i32, i32
  }
}

</mosaic_0001>

<llo_original>
// kernel: bert_forward_pallas.1
$region0: #{bert_forward_pallas.1}
  #allocation0 [shape = 'u32[]', space=smem, size = 0x4, offset = 0x4, fixed_abs, tag = 'smem constant byte address 0x4 - core index']
  #allocation1 [shape = 'u32[144,128]{1,0:T(1,128)}', space=vmem, size = 0x12000, scoped, tag = 'internal scratch']
  %s0 = inlined_call_operand.vmem [shape: f32[2,8,32], index: 0, kind: input, shape index: {}]
  %s1 = inlined_call_operand.vmem [shape: f32[2,1,8], index: 1, kind: input, shape index: {}]
  %s2 = inlined_call_operand.vmem [shape: f32[1,32], index: 2, kind: input, shape index: {}]
  %s3 = inlined_call_operand.vmem [shape: f32[1,32], index: 3, kind: input, shape index: {}]
  %s4 = inlined_call_operand.vmem [shape: f32[2,32,96], index: 4, kind: input, shape index: {}]
  %s5 = inlined_call_operand.vmem [shape: f32[2,1,96], index: 5, kind: input, shape index: {}]
  %s6 = inlined_call_operand.vmem [shape: f32[2,32,32], index: 6, kind: input, shape index: {}]
  %s7 = inlined_call_operand.vmem [shape: f32[2,1,32], index: 7, kind: input, shape index: {}]
  %s8 = inlined_call_operand.vmem [shape: f32[2,1,32], index: 8, kind: input, shape index: {}]
  %s9 = inlined_call_operand.vmem [shape: f32[2,1,32], index: 9, kind: input, shape index: {}]
  %s10 = inlined_call_operand.vmem [shape: f32[2,32,64], index: 10, kind: input, shape index: {}]
  %s11 = inlined_call_operand.vmem [shape: f32[2,1,64], index: 11, kind: input, shape index: {}]
  %s12 = inlined_call_operand.vmem [shape: f32[2,64,32], index: 12, kind: input, shape index: {}]
  %s13 = inlined_call_operand.vmem [shape: f32[2,1,32], index: 13, kind: input, shape index: {}]
  %s14 = inlined_call_operand.vmem [shape: f32[2,1,32], index: 14, kind: input, shape index: {}]
  %s15 = inlined_call_operand.vmem [shape: f32[2,1,32], index: 15, kind: input, shape index: {}]
  %s16 = inlined_call_operand.hbm [shape: f32[2,1,32], index: 16, kind: output, shape index: {}]
  %s17 = sld [smem:[#allocation0]]
  $region97: #{bert_forward_pallas.1} parent=0
    _
  %s19 = ssub.s32 1, %s17
  %s20 = scalar_select 0, %s19, %s17
  $region1: #{bert_forward_pallas.1} parent=0
    #allocation2 [shape = 'u8[1024]{0}', space=vmem, size = 0x400, scoped, tag = 'output window, operand 0']
    #allocation3 [shape = 's32[2]{0}', space=sflag, size = 0x8, scoped, tag = 'scoped memory for bert_forward_pallas.1']
    %21 = vsyncpa [#allocation3], 0
    %s22 = scalar_lea.sflag [#allocation3], 1
    %23 = vsyncpa %s22, 0
    loop: start=0, step=1, limit=4
    $region2: #{bert_forward_pallas.1} parent=1 // loop_pre_header
      _
    $region3: #{bert_forward_pallas.1} parent=1 // loop_header
      %s25 = sphi 0, %s29
      %p26 = scmp.ge.s32.totalorder %s25, 4
      %s35 = sphi 0, %s37
      %s38 = sphi 0, %s35
      %s39 = sphi 0, %s38
      %s55 = sphi 0, %s39
      %s61 = sphi 0, %s63
      %s64 = sphi 0, %s61
      %s65 = sphi 0, %s64
      %s81 = sphi 0, %s65
      %s85 = sphi 0, %s85
      %s87 = sphi 0, %s85
      %s88 = sphi 0, %s87
      %s102 = sphi 0, %s88
      %s106 = sphi 0, %s106
      %s108 = sphi 0, %s106
      %s109 = sphi 0, %s108
      %s123 = sphi 0, %s109
      %s127 = sphi 0, %s127
      %s129 = sphi 0, %s127
      %s130 = sphi 0, %s129
      %s144 = sphi 0, %s130
      %s148 = sphi 0, %s148
      %s150 = sphi 0, %s148
      %s151 = sphi 0, %s150
      %s165 = sphi 0, %s151
      %s169 = sphi 0, %s169
      %s171 = sphi 0, %s169
      %s172 = sphi 0, %s171
      %s186 = sphi 0, %s172
      %s190 = sphi 0, %s190
      %s192 = sphi 0, %s190
      %s193 = sphi 0, %s192
      %s207 = sphi 0, %s193
      %s211 = sphi 0, %s211
      %s213 = sphi 0, %s211
      %s214 = sphi 0, %s213
      %s228 = sphi 0, %s214
      %s232 = sphi 0, %s232
      %s234 = sphi 0, %s232
      %s235 = sphi 0, %s234
      %s249 = sphi 0, %s235
      %s253 = sphi 0, %s253
      %s255 = sphi 0, %s253
      %s256 = sphi 0, %s255
      %s270 = sphi 0, %s256
      %s274 = sphi 0, %s274
      %s276 = sphi 0, %s274
      %s277 = sphi 0, %s276
      %s291 = sphi 0, %s277
      %s295 = sphi 0, %s295
      %s297 = sphi 0, %s295
      %s298 = sphi 0, %s297
      %s312 = sphi 0, %s298
      %s316 = sphi 0, %s316
      %s318 = sphi 0, %s316
      %s319 = sphi 0, %s318
      %s333 = sphi 0, %s319
      %s337 = sphi 0, %s337
      %s339 = sphi 0, %s337
      %s340 = sphi 0, %s339
      %s354 = sphi 0, %s340
      %s358 = sphi 0, %s358
      %s360 = sphi 0, %s358
      %s361 = sphi 0, %s360
      %s375 = sphi 0, %s361
      %s381 = sphi 0, %s383
      %s384 = sphi 0, %s381
      %s385 = sphi 0, %s384
      %s401 = sphi 0, %s385
    $region4: #{bert_forward_pallas.1} parent=1 // loop_header_branch
      %28 = sbr.rel (%p26) target = $region8
    $region5: #{bert_forward_pallas.1} parent=1 // loop_body
      %s30 = ssub.s32 %s25, 1
      %s31 = ssub.s32 %s25, 2
      %s32 = sadd.s32 %s25, 1
      %s33 = ssub.s32 %s25, %s32
      %p34 = scmp.eq.s32.totalorder %s33, 0
      %s36 = sadd.s32 %s35, 1
      %s37 = scalar_select %p34, %s35, %s36
      %p40 = pneg %p34
      %p41 = scmp.eq.s32.totalorder %s25, 1
      %p42 = por %p40, %p41
      %p43 = scmp.ne.s32.totalorder %s35, %s38
      %p44 = scmp.eq.s32.totalorder %s25, 0
      %p45 = por %p43, %p44
      %p46 = scmp.ne.s32.totalorder %s35, %s38
      %p47 = scmp.eq.s32.totalorder %s30, 1
      %p48 = por %p46, %p47
      %p49 = scmp.ne.s32.totalorder %s38, %s39
      %p50 = scmp.eq.s32.totalorder %s30, 0
      %p51 = por %p49, %p50
      %p52 = scmp.ne.s32.totalorder %s38, %s39
      %p53 = scmp.eq.s32.totalorder %s31, 1
      %p54 = por %p52, %p53
      %p56 = scmp.ne.s32.totalorder %s39, %s55
      %p57 = scmp.eq.s32.totalorder %s31, 0
      %p58 = por %p56, %p57
      %s59 = ssub.s32 %s25, %s32
      %p60 = scmp.eq.s32.totalorder %s59, 0
      %s62 = sadd.s32 %s61, 1
      %s63 = scalar_select %p60, %s61, %s62
      %p66 = pneg %p60
      %p67 = scmp.eq.s32.totalorder %s25, 1
      %p68 = por %p66, %p67
      %p69 = scmp.ne.s32.totalorder %s61, %s64
      %p70 = scmp.eq.s32.totalorder %s25, 0
      %p71 = por %p69, %p70
      %p72 = scmp.ne.s32.totalorder %s61, %s64
      %p73 = scmp.eq.s32.totalorder %s30, 1
      %p74 = por %p72, %p73
      %p75 = scmp.ne.s32.totalorder %s64, %s65
      %p76 = scmp.eq.s32.totalorder %s30, 0
      %p77 = por %p75, %p76
      %p78 = scmp.ne.s32.totalorder %s64, %s65
      %p79 = scmp.eq.s32.totalorder %s31, 1
      %p80 = por %p78, %p79
      %p82 = scmp.ne.s32.totalorder %s65, %s81
      %p83 = scmp.eq.s32.totalorder %s31, 0
      %p84 = por %p82, %p83
      %s86 = sadd.s32 %s85, 1
      %p89 = scmp.eq.s32.totalorder %s25, 1
      %p90 = scmp.ne.s32.totalorder %s85, %s87
      %p91 = scmp.eq.s32.totalorder %s25, 0
      %p92 = por %p90, %p91
      %p93 = scmp.ne.s32.totalorder %s85, %s87
      %p94 = scmp.eq.s32.totalorder %s30, 1
      %p95 = por %p93, %p94
      %p96 = scmp.ne.s32.totalorder %s87, %s88
      %p97 = scmp.eq.s32.totalorder %s30, 0
      %p98 = por %p96, %p97
      %p99 = scmp.ne.s32.totalorder %s87, %s88
      %p100 = scmp.eq.s32.totalorder %s31, 1
      %p101 = por %p99, %p100
      %p103 = scmp.ne.s32.totalorder %s88, %s102
      %p104 = scmp.eq.s32.totalorder %s31, 0
      %p105 = por %p103, %p104
      %s107 = sadd.s32 %s106, 1
      %p110 = scmp.eq.s32.totalorder %s25, 1
      %p111 = scmp.ne.s32.totalorder %s106, %s108
      %p112 = scmp.eq.s32.totalorder %s25, 0
      %p113 = por %p111, %p112
      %p114 = scmp.ne.s32.totalorder %s106, %s108
      %p115 = scmp.eq.s32.totalorder %s30, 1
      %p116 = por %p114, %p115
      %p117 = scmp.ne.s32.totalorder %s108, %s109
      %p118 = scmp.eq.s32.totalorder %s30, 0
      %p119 = por %p117, %p118
      %p120 = scmp.ne.s32.totalorder %s108, %s109
      %p121 = scmp.eq.s32.totalorder %s31, 1
      %p122 = por %p120, %p121
      %p124 = scmp.ne.s32.totalorder %s109, %s123
      %p125 = scmp.eq.s32.totalorder %s31, 0
      %p126 = por %p124, %p125
      %s128 = sadd.s32 %s127, 1
      %p131 = scmp.eq.s32.totalorder %s25, 1
      %p132 = scmp.ne.s32.totalorder %s127, %s129
      %p133 = scmp.eq.s32.totalorder %s25, 0
      %p134 = por %p132, %p133
      %p135 = scmp.ne.s32.totalorder %s127, %s129
      %p136 = scmp.eq.s32.totalorder %s30, 1
      %p137 = por %p135, %p136
      %p138 = scmp.ne.s32.totalorder %s129, %s130
      %p139 = scmp.eq.s32.totalorder %s30, 0
      %p140 = por %p138, %p139
      %p141 = scmp.ne.s32.totalorder %s129, %s130
      %p142 = scmp.eq.s32.totalorder %s31, 1
      %p143 = por %p141, %p142
      %p145 = scmp.ne.s32.totalorder %s130, %s144
      %p146 = scmp.eq.s32.totalorder %s31, 0
      %p147 = por %p145, %p146
      %s149 = sadd.s32 %s148, 1
      %p152 = scmp.eq.s32.totalorder %s25, 1
      %p153 = scmp.ne.s32.totalorder %s148, %s150
      %p154 = scmp.eq.s32.totalorder %s25, 0
      %p155 = por %p153, %p154
      %p156 = scmp.ne.s32.totalorder %s148, %s150
      %p157 = scmp.eq.s32.totalorder %s30, 1
      %p158 = por %p156, %p157
      %p159 = scmp.ne.s32.totalorder %s150, %s151
      %p160 = scmp.eq.s32.totalorder %s30, 0
      %p161 = por %p159, %p160
      %p162 = scmp.ne.s32.totalorder %s150, %s151
      %p163 = scmp.eq.s32.totalorder %s31, 1
      %p164 = por %p162, %p163
      %p166 = scmp.ne.s32.totalorder %s151, %s165
      %p167 = scmp.eq.s32.totalorder %s31, 0
      %p168 = por %p166, %p167
      %s170 = sadd.s32 %s169, 1
      %p173 = scmp.eq.s32.totalorder %s25, 1
      %p174 = scmp.ne.s32.totalorder %s169, %s171
      %p175 = scmp.eq.s32.totalorder %s25, 0
      %p176 = por %p174, %p175
      %p177 = scmp.ne.s32.totalorder %s169, %s171
      %p178 = scmp.eq.s32.totalorder %s30, 1
      %p179 = por %p177, %p178
      %p180 = scmp.ne.s32.totalorder %s171, %s172
      %p181 = scmp.eq.s32.totalorder %s30, 0
      %p182 = por %p180, %p181
      %p183 = scmp.ne.s32.totalorder %s171, %s172
      %p184 = scmp.eq.s32.totalorder %s31, 1
      %p185 = por %p183, %p184
      %p187 = scmp.ne.s32.totalorder %s172, %s186
      %p188 = scmp.eq.s32.totalorder %s31, 0
      %p189 = por %p187, %p188
      %s191 = sadd.s32 %s190, 1
      %p194 = scmp.eq.s32.totalorder %s25, 1
      %p195 = scmp.ne.s32.totalorder %s190, %s192
      %p196 = scmp.eq.s32.totalorder %s25, 0
      %p197 = por %p195, %p196
      %p198 = scmp.ne.s32.totalorder %s190, %s192
      %p199 = scmp.eq.s32.totalorder %s30, 1
      %p200 = por %p198, %p199
      %p201 = scmp.ne.s32.totalorder %s192, %s193
      %p202 = scmp.eq.s32.totalorder %s30, 0
      %p203 = por %p201, %p202
      %p204 = scmp.ne.s32.totalorder %s192, %s193
      %p205 = scmp.eq.s32.totalorder %s31, 1
      %p206 = por %p204, %p205
      %p208 = scmp.ne.s32.totalorder %s193, %s207
      %p209 = scmp.eq.s32.totalorder %s31, 0
      %p210 = por %p208, %p209
      %s212 = sadd.s32 %s211, 1
      %p215 = scmp.eq.s32.totalorder %s25, 1
      %p216 = scmp.ne.s32.totalorder %s211, %s213
      %p217 = scmp.eq.s32.totalorder %s25, 0
      %p218 = por %p216, %p217
      %p219 = scmp.ne.s32.totalorder %s211, %s213
      %p220 = scmp.eq.s32.totalorder %s30, 1
      %p221 = por %p219, %p220
      %p222 = scmp.ne.s32.totalorder %s213, %s214
      %p223 = scmp.eq.s32.totalorder %s30, 0
      %p224 = por %p222, %p223
      %p225 = scmp.ne.s32.totalorder %s213, %s214
      %p226 = scmp.eq.s32.totalorder %s31, 1
      %p227 = por %p225, %p226
      %p229 = scmp.ne.s32.totalorder %s214, %s228
      %p230 = scmp.eq.s32.totalorder %s31, 0
      %p231 = por %p229, %p230
      %s233 = sadd.s32 %s232, 1
      %p236 = scmp.eq.s32.totalorder %s25, 1
      %p237 = scmp.ne.s32.totalorder %s232, %s234
      %p238 = scmp.eq.s32.totalorder %s25, 0
      %p239 = por %p237, %p238
      %p240 = scmp.ne.s32.totalorder %s232, %s234
      %p241 = scmp.eq.s32.totalorder %s30, 1
      %p242 = por %p240, %p241
      %p243 = scmp.ne.s32.totalorder %s234, %s235
      %p244 = scmp.eq.s32.totalorder %s30, 0
      %p245 = por %p243, %p244
      %p246 = scmp.ne.s32.totalorder %s234, %s235
      %p247 = scmp.eq.s32.totalorder %s31, 1
      %p248 = por %p246, %p247
      %p250 = scmp.ne.s32.totalorder %s235, %s249
      %p251 = scmp.eq.s32.totalorder %s31, 0
      %p252 = por %p250, %p251
      %s254 = sadd.s32 %s253, 1
      %p257 = scmp.eq.s32.totalorder %s25, 1
      %p258 = scmp.ne.s32.totalorder %s253, %s255
      %p259 = scmp.eq.s32.totalorder %s25, 0
      %p260 = por %p258, %p259
      %p261 = scmp.ne.s32.totalorder %s253, %s255
      %p262 = scmp.eq.s32.totalorder %s30, 1
      %p263 = por %p261, %p262
      %p264 = scmp.ne.s32.totalorder %s255, %s256
      %p265 = scmp.eq.s32.totalorder %s30, 0
      %p266 = por %p264, %p265
      %p267 = scmp.ne.s32.totalorder %s255, %s256
      %p268 = scmp.eq.s32.totalorder %s31, 1
      %p269 = por %p267, %p268
      %p271 = scmp.ne.s32.totalorder %s256, %s270
      %p272 = scmp.eq.s32.totalorder %s31, 0
      %p273 = por %p271, %p272
      %s275 = sadd.s32 %s274, 1
      %p278 = scmp.eq.s32.totalorder %s25, 1
      %p279 = scmp.ne.s32.totalorder %s274, %s276
      %p280 = scmp.eq.s32.totalorder %s25, 0
      %p281 = por %p279, %p280
      %p282 = scmp.ne.s32.totalorder %s274, %s276
      %p283 = scmp.eq.s32.totalorder %s30, 1
      %p284 = por %p282, %p283
      %p285 = scmp.ne.s32.totalorder %s276, %s277
      %p286 = scmp.eq.s32.totalorder %s30, 0
      %p287 = por %p285, %p286
      %p288 = scmp.ne.s32.totalorder %s276, %s277
      %p289 = scmp.eq.s32.totalorder %s31, 1
      %p290 = por %p288, %p289
      %p292 = scmp.ne.s32.totalorder %s277, %s291
      %p293 = scmp.eq.s32.totalorder %s31, 0
      %p294 = por %p292, %p293
      %s296 = sadd.s32 %s295, 1
      %p299 = scmp.eq.s32.totalorder %s25, 1
      %p300 = scmp.ne.s32.totalorder %s295, %s297
      %p301 = scmp.eq.s32.totalorder %s25, 0
      %p302 = por %p300, %p301
      %p303 = scmp.ne.s32.totalorder %s295, %s297
      %p304 = scmp.eq.s32.totalorder %s30, 1
      %p305 = por %p303, %p304
      %p306 = scmp.ne.s32.totalorder %s297, %s298
      %p307 = scmp.eq.s32.totalorder %s30, 0
      %p308 = por %p306, %p307
      %p309 = scmp.ne.s32.totalorder %s297, %s298
      %p310 = scmp.eq.s32.totalorder %s31, 1
      %p311 = por %p309, %p310
      %p313 = scmp.ne.s32.totalorder %s298, %s312
      %p314 = scmp.eq.s32.totalorder %s31, 0
      %p315 = por %p313, %p314
      %s317 = sadd.s32 %s316, 1
      %p320 = scmp.eq.s32.totalorder %s25, 1
      %p321 = scmp.ne.s32.totalorder %s316, %s318
      %p322 = scmp.eq.s32.totalorder %s25, 0
      %p323 = por %p321, %p322
      %p324 = scmp.ne.s32.totalorder %s316, %s318
      %p325 = scmp.eq.s32.totalorder %s30, 1
      %p326 = por %p324, %p325
      %p327 = scmp.ne.s32.totalorder %s318, %s319
      %p328 = scmp.eq.s32.totalorder %s30, 0
      %p329 = por %p327, %p328
      %p330 = scmp.ne.s32.totalorder %s318, %s319
      %p331 = scmp.eq.s32.totalorder %s31, 1
      %p332 = por %p330, %p331
      %p334 = scmp.ne.s32.totalorder %s319, %s333
      %p335 = scmp.eq.s32.totalorder %s31, 0
      %p336 = por %p334, %p335
      %s338 = sadd.s32 %s337, 1
      %p341 = scmp.eq.s32.totalorder %s25, 1
      %p342 = scmp.ne.s32.totalorder %s337, %s339
      %p343 = scmp.eq.s32.totalorder %s25, 0
      %p344 = por %p342, %p343
      %p345 = scmp.ne.s32.totalorder %s337, %s339
      %p346 = scmp.eq.s32.totalorder %s30, 1
      %p347 = por %p345, %p346
      %p348 = scmp.ne.s32.totalorder %s339, %s340
      %p349 = scmp.eq.s32.totalorder %s30, 0
      %p350 = por %p348, %p349
      %p351 = scmp.ne.s32.totalorder %s339, %s340
      %p352 = scmp.eq.s32.totalorder %s31, 1
      %p353 = por %p351, %p352
      %p355 = scmp.ne.s32.totalorder %s340, %s354
      %p356 = scmp.eq.s32.totalorder %s31, 0
      %p357 = por %p355, %p356
      %s359 = sadd.s32 %s358, 1
      %p362 = scmp.eq.s32.totalorder %s25, 1
      %p363 = scmp.ne.s32.totalorder %s358, %s360
      %p364 = scmp.eq.s32.totalorder %s25, 0
      %p365 = por %p363, %p364
      %p366 = scmp.ne.s32.totalorder %s358, %s360
      %p367 = scmp.eq.s32.totalorder %s30, 1
      %p368 = por %p366, %p367
      %p369 = scmp.ne.s32.totalorder %s360, %s361
      %p370 = scmp.eq.s32.totalorder %s30, 0
      %p371 = por %p369, %p370
      %p372 = scmp.ne.s32.totalorder %s360, %s361
      %p373 = scmp.eq.s32.totalorder %s31, 1
      %p374 = por %p372, %p373
      %p376 = scmp.ne.s32.totalorder %s361, %s375
      %p377 = scmp.eq.s32.totalorder %s31, 0
      %p378 = por %p376, %p377
      %s379 = ssub.s32 %s25, %s32
      %p380 = scmp.eq.s32.totalorder %s379, 0
      %s382 = sadd.s32 %s381, 1
      %s383 = scalar_select %p380, %s381, %s382
      %p386 = pneg %p380
      %p387 = scmp.eq.s32.totalorder %s25, 1
      %p388 = por %p386, %p387
      %p389 = scmp.ne.s32.totalorder %s381, %s384
      %p390 = scmp.eq.s32.totalorder %s25, 0
      %p391 = por %p389, %p390
      %p392 = scmp.ne.s32.totalorder %s381, %s384
      %p393 = scmp.eq.s32.totalorder %s30, 1
      %p394 = por %p392, %p393
      %p395 = scmp.ne.s32.totalorder %s384, %s385
      %p396 = scmp.eq.s32.totalorder %s30, 0
      %p397 = por %p395, %p396
      %p398 = scmp.ne.s32.totalorder %s384, %s385
      %p399 = scmp.eq.s32.totalorder %s31, 1
      %p400 = por %p398, %p399
      %p402 = scmp.ne.s32.totalorder %s385, %s401
      %p403 = scmp.eq.s32.totalorder %s31, 0
      %p404 = por %p402, %p403
      %p405 = scmp.le.s32.totalorder 1, %s25
      %p406 = scmp.lt.s32.totalorder %s25, 3
      %p407 = pnand %p405, %p406
      %p408 = pneg %p407
      // Predicated region
      $region9: #{bert_forward_pallas.1} parent=5 // pred_check
        _
      $region10: #{bert_forward_pallas.1} parent=5 // pred_check_branch
        %410 = sbr.rel (%p407) target = $region12
      $region11: #{bert_forward_pallas.1} parent=5 // pred_region
        %s411 = ssub.s32 %s25, 1
        // Predicated region
        $region13: #{bert_forward_pallas.1} parent=11 // pred_check
          %p412 = pneg %p98
        $region14: #{bert_forward_pallas.1} parent=11 // pred_check_branch
          %414 = sbr.rel (%p412) target = $region16
        $region15: #{bert_forward_pallas.1} parent=11 // pred_region
          _
        $region16: #{bert_forward_pallas.1} parent=11 // pred_fallthru
          _
        // Predicated region
        $region17: #{bert_forward_pallas.1} parent=11 // pred_check
          %p415 = pneg %p119
        $region18: #{bert_forward_pallas.1} parent=11 // pred_check_branch
          %417 = sbr.rel (%p415) target = $region20
        $region19: #{bert_forward_pallas.1} parent=11 // pred_region
          _
        $region20: #{bert_forward_pallas.1} parent=11 // pred_fallthru
          _
        // Predicated region
        $region21: #{bert_forward_pallas.1} parent=11 // pred_check
          %p418 = pneg %p140
        $region22: #{bert_forward_pallas.1} parent=11 // pred_check_branch
          %420 = sbr.rel (%p418) target = $region24
        $region23: #{bert_forward_pallas.1} parent=11 // pred_region
          _
        $region24: #{bert_forward_pallas.1} parent=11 // pred_fallthru
          _
        // Predicated region
        $region25: #{bert_forward_pallas.1} parent=11 // pred_check
          %p421 = pneg %p161
        $region26: #{bert_forward_pallas.1} parent=11 // pred_check_branch
          %423 = sbr.rel (%p421) target = $region28
        $region27: #{bert_forward_pallas.1} parent=11 // pred_region
          _
        $region28: #{bert_forward_pallas.1} parent=11 // pred_fallthru
          _
        // Predicated region
        $region29: #{bert_forward_pallas.1} parent=11 // pred_check
          %p424 = pneg %p182
        $region30: #{bert_forward_pallas.1} parent=11 // pred_check_branch
          %426 = sbr.rel (%p424) target = $region32
        $region31: #{bert_forward_pallas.1} parent=11 // pred_region
          _
        $region32: #{bert_forward_pallas.1} parent=11 // pred_fallthru
          _
        // Predicated region
        $region33: #{bert_forward_pallas.1} parent=11 // pred_check
          %p427 = pneg %p203
        $region34: #{bert_forward_pallas.1} parent=11 // pred_check_branch
          %429 = sbr.rel (%p427) target = $region36
        $region35: #{bert_forward_pallas.1} parent=11 // pred_region
          _
        $region36: #{bert_forward_pallas.1} parent=11 // pred_fallthru
          _
        // Predicated region
        $region37: #{bert_forward_pallas.1} parent=11 // pred_check
          %p430 = pneg %p224
        $region38: #{bert_forward_pallas.1} parent=11 // pred_check_branch
          %432 = sbr.rel (%p430) target = $region40
        $region39: #{bert_forward_pallas.1} parent=11 // pred_region
          _
        $region40: #{bert_forward_pallas.1} parent=11 // pred_fallthru
          _
        // Predicated region
        $region41: #{bert_forward_pallas.1} parent=11 // pred_check
          %p433 = pneg %p245
        $region42: #{bert_forward_pallas.1} parent=11 // pred_check_branch
          %435 = sbr.rel (%p433) target = $region44
        $region43: #{bert_forward_pallas.1} parent=11 // pred_region
          _
        $region44: #{bert_forward_pallas.1} parent=11 // pred_fallthru
          _
        // Predicated region
        $region45: #{bert_forward_pallas.1} parent=11 // pred_check
          %p436 = pneg %p266
        $region46: #{bert_forward_pallas.1} parent=11 // pred_check_branch
          %438 = sbr.rel (%p436) target = $region48
        $region47: #{bert_forward_pallas.1} parent=11 // pred_region
          _
        $region48: #{bert_forward_pallas.1} parent=11 // pred_fallthru
          _
        // Predicated region
        $region49: #{bert_forward_pallas.1} parent=11 // pred_check
          %p439 = pneg %p287
        $region50: #{bert_forward_pallas.1} parent=11 // pred_check_branch
          %441 = sbr.rel (%p439) target = $region52
        $region51: #{bert_forward_pallas.1} parent=11 // pred_region
          _
        $region52: #{bert_forward_pallas.1} parent=11 // pred_fallthru
          _
        // Predicated region
        $region53: #{bert_forward_pallas.1} parent=11 // pred_check
          %p442 = pneg %p308
        $region54: #{bert_forward_pallas.1} parent=11 // pred_check_branch
          %444 = sbr.rel (%p442) target = $region56
        $region55: #{bert_forward_pallas.1} parent=11 // pred_region
          _
        $region56: #{bert_forward_pallas.1} parent=11 // pred_fallthru
          _
        // Predicated region
        $region57: #{bert_forward_pallas.1} parent=11 // pred_check
          %p445 = pneg %p329
        $region58: #{bert_forward_pallas.1} parent=11 // pred_check_branch
          %447 = sbr.rel (%p445) target = $region60
        $region59: #{bert_forward_pallas.1} parent=11 // pred_region
          _
        $region60: #{bert_forward_pallas.1} parent=11 // pred_fallthru
          _
        // Predicated region
        $region61: #{bert_forward_pallas.1} parent=11 // pred_check
          %p448 = pneg %p350
        $region62: #{bert_forward_pallas.1} parent=11 // pred_check_branch
          %450 = sbr.rel (%p448) target = $region64
        $region63: #{bert_forward_pallas.1} parent=11 // pred_region
          _
        $region64: #{bert_forward_pallas.1} parent=11 // pred_fallthru
          _
        // Predicated region
        $region65: #{bert_forward_pallas.1} parent=11 // pred_check
          %p451 = pneg %p371
        $region66: #{bert_forward_pallas.1} parent=11 // pred_check_branch
          %453 = sbr.rel (%p451) target = $region68
        $region67: #{bert_forward_pallas.1} parent=11 // pred_region
          _
        $region68: #{bert_forward_pallas.1} parent=11 // pred_fallthru
          _
      $region12: #{bert_forward_pallas.1} parent=5 // pred_fallthru
        _
      %p454 = scmp.lt.s32.totalorder %s25, 2
      // Predicated region
      $region69: #{bert_forward_pallas.1} parent=5 // pred_check
        %p455 = pneg %p454
      $region70: #{bert_forward_pallas.1} parent=5 // pred_check_branch
        %457 = sbr.rel (%p455) target = $region72
      $region71: #{bert_forward_pallas.1} parent=5 // pred_region
        // Predicated region
        $region73: #{bert_forward_pallas.1} parent=71 // pred_check
          %p458 = pneg %p45
        $region74: #{bert_forward_pallas.1} parent=71 // pred_check_branch
          %460 = sbr.rel (%p458) target = $region76
        $region75: #{bert_forward_pallas.1} parent=71 // pred_region
          %p461 = scmp.lt.s32.totalorder %s25, 1
          %s462 = scalar_select %p461, %s25, 1
          %s463 = smul.addr %s462, 8
          %s464 = scalar_lea.vmem %s0, %s463
        $region76: #{bert_forward_pallas.1} parent=71 // pred_fallthru
          _
        // Predicated region
        $region77: #{bert_forward_pallas.1} parent=71 // pred_check
          %p465 = pneg %p71
        $region78: #{bert_forward_pallas.1} parent=71 // pred_check_branch
          %467 = sbr.rel (%p465) target = $region80
        $region79: #{bert_forward_pallas.1} parent=71 // pred_region
          %p468 = scmp.lt.s32.totalorder %s25, 1
          %s469 = scalar_select %p468, %s25, 1
          %s470 = scalar_lea.vmem %s1, %s469
        $region80: #{bert_forward_pallas.1} parent=71 // pred_fallthru
          _
      $region72: #{bert_forward_pallas.1} parent=5 // pred_fallthru
        _
      %p471 = scmp.le.s32.totalorder 1, %s25
      %p472 = scmp.lt.s32.totalorder %s25, 3
      %p473 = pnand %p471, %p472
      %p474 = pneg %p473
      // Predicated region
      $region81: #{bert_forward_pallas.1} parent=5 // pred_check
        _
      $region82: #{bert_forward_pallas.1} parent=5 // pred_check_branch
        %476 = sbr.rel (%p473) target = $region84
      $region83: #{bert_forward_pallas.1} parent=5 // pred_region
        %s477 = ssub.s32 %s25, 1
        %p478 = scmp.lt.s32.totalorder %s30, 1
        %s479 = scalar_select %p478, %s30, 1
        %s480 = smul.addr %s479, 8
        %s481 = scalar_lea.vmem %s0, %s480
        %p482 = pneg %p51
        %p483 = pneg %p48
        %p484 = scmp.lt.s32.totalorder %s30, 1
        %s485 = scalar_select %p484, %s30, 1
        %s486 = scalar_lea.vmem %s1, %s485
        %p487 = pneg %p77
        %p488 = pneg %p74
        %p489 = pneg %p98
        %p490 = pneg %p95
        %p491 = pneg %p119
        %p492 = pneg %p116
        %p493 = pneg %p140
        %p494 = pneg %p137
        %p495 = pneg %p161
        %p496 = pneg %p158
        %p497 = pneg %p182
        %p498 = pneg %p179
        %p499 = pneg %p203
        %p500 = pneg %p200
        %p501 = pneg %p224
        %p502 = pneg %p221
        %p503 = pneg %p245
        %p504 = pneg %p242
        %p505 = pneg %p266
        %p506 = pneg %p263
        %p507 = pneg %p287
        %p508 = pneg %p284
        %p509 = pneg %p308
        %p510 = pneg %p305
        %p511 = pneg %p329
        %p512 = pneg %p326
        %p513 = pneg %p350
        %p514 = pneg %p347
        %p515 = pneg %p371
        %p516 = pneg %p368
        %p517 = pneg %p397
        %p518 = pneg %p394
        %s519 = sand.u32 %s384, 1
        %s520 = scalar_lea.sflag [#allocation3], %s519
        %s521 = sand.u32 %s384, 1
        %s522 = scalar_lea.vmem [#allocation2], %s521
        %p523 = scmp.lt.s32.totalorder %s30, 1
        %s524 = scalar_select %p523, %s30, 1
        %s525 = smul.addr %s524, 8
        %s526 = scalar_lea.vmem %s0, %s525
        %p527 = scmp.lt.s32.totalorder %s30, 1
        %s528 = scalar_select %p527, %s30, 1
        %s529 = scalar_lea.vmem %s1, %s528
        %v530 = vld [vmem:[%s526] sm:$0xff]
        %v531 = vld [vmem:[%s2] sm:$0x1]
        %v532 = vld [vmem:[%s3] sm:$0x1]
        %vm533 = vcmask 261120
        %v534 = vsel %vm533, %v530, 0.0
        %535 = vadd.xlane.f32.xlu0 %v534
        %v536 = vpop.xlane.xlu0 %535
        %v537 = vrcp.pop 32.0
        %v538 = vmul.f32 %v536, %v537
        %v539 = vsub.f32 %v530, %v538
        %v540 = vmul.f32 %v539, %v539
        %v541 = vsel %vm533, %v540, 0.0
        %542 = vadd.xlane.f32.xlu0 %v541
        %v543 = vpop.xlane.xlu0 %542
        %v544 = vmul.f32 %v543, %v537
        %v545 = vadd.f32 %v544, 1e-12
        %v546 = vrsqrt.pop %v545
        %v547 = vmul.f32 %v539, %v546
        %v549 = vlaneseq
        %v550 = vshrl.u32 %v549, 7
        %v551 = vsub.s32 0, %v550
        %v552 = vrot.slane %v531, %v551
        %v554 = vmul.f32 %v547, %v552
        %v556 = vlaneseq
        %v557 = vshrl.u32 %v556, 7
        %v558 = vsub.s32 0, %v557
        %v559 = vrot.slane %v532, %v558
        %v561 = vadd.f32 %v554, %v559
        %v562 = vld [vmem:[%s529] sm:$0x1]
        %v563 = vld [vmem:[%s4] sm:$0xff]
        %v564 = vld [vmem:[%s4 + $0x8] sm:$0xff]
        %v565 = vld [vmem:[%s4 + $0x10] sm:$0xff]
        %v566 = vld [vmem:[%s4 + $0x18] sm:$0xff]
        %v567 = vld [vmem:[%s5] sm:$0x1]
        %v569 = vlaneseq
        %v570 = vshrl.u32 %v569, 7
        %v571 = vsub.s32 0, %v570
        %v572 = vrot.slane %v567, %v571
        %v575 = vsel %vm533, %v561, 0
        %577 = vmatprep.subr.mxu0 0.0
        %578 = vmatpush1.msra.mxu0 %v563
        %579 = vmatprep.subr.mxu0 0.0
        %580 = vmatpush1.msra.mxu0 %v564
        %581 = vmatprep.subr.mxu0 0.0
        %582 = vmatpush1.msra.mxu0 %v565
        %583 = vmatprep.subr.mxu0 0.0
        %584 = vmatpush1.msra.mxu0 %v566
        %585 = vmatprep.subr.mxu0 0.0
        %586 = vmatpush1.msra.mxu0 0.0
        %587 = vmatprep.subr.mxu0 0.0
        %588 = vmatpush1.msra.mxu0 0.0
        %589 = vmatprep.subr.mxu0 0.0
        %590 = vmatpush1.msra.mxu0 0.0
        %591 = vmatprep.subr.mxu0 0.0
        %592 = vmatpush1.msra.mxu0 0.0
        %593 = vmatprep.subr.mxu0 0.0
        %594 = vmatpush1.msra.mxu0 0.0
        %595 = vmatprep.subr.mxu0 0.0
        %596 = vmatpush1.msra.mxu0 0.0
        %597 = vmatprep.subr.mxu0 0.0
        %598 = vmatpush1.msra.mxu0 0.0
        %599 = vmatprep.subr.mxu0 0.0
        %600 = vmatpush1.msra.mxu0 0.0
        %601 = vmatprep.subr.mxu0 0.0
        %602 = vmatpush1.msra.mxu0 0.0
        %603 = vmatprep.subr.mxu0 0.0
        %604 = vmatpush1.msra.mxu0 0.0
        %605 = vmatprep.subr.mxu0 0.0
        %606 = vmatpush1.msra.mxu0 0.0
        %607 = vmatprep.subr.mxu0 0.0
        %608 = vmatpush1.msra.mxu0 0.0
        %609 = vmatprep.subr.mxu0 0.0
        %610 = vmatpush1.msra.mxu0 0.0
        %611 = vmatprep.subr.mxu0 0.0
        %612 = vmatpush1.msra.mxu0 0.0
        %613 = vmatprep.subr.mxu0 0.0
        %614 = vmatpush1.msra.mxu0 0.0
        %615 = vmatprep.subr.mxu0 0.0
        %616 = vmatpush1.msra.mxu0 0.0
        %617 = vmatprep.subr.mxu0 0.0
        %618 = vmatpush1.msra.mxu0 0.0
        %619 = vmatprep.subr.mxu0 0.0
        %620 = vmatpush1.msra.mxu0 0.0
        %621 = vmatprep.subr.mxu0 0.0
        %622 = vmatpush1.msra.mxu0 0.0
        %623 = vmatprep.subr.mxu0 0.0
        %624 = vmatpush1.msra.mxu0 0.0
        %625 = vmatprep.subr.mxu0 0.0
        %626 = vmatpush1.msra.mxu0 0.0
        %627 = vmatprep.subr.mxu0 0.0
        %628 = vmatpush1.msra.mxu0 0.0
        %629 = vmatprep.subr.mxu0 0.0
        %630 = vmatpush1.msra.mxu0 0.0
        %631 = vmatprep.subr.mxu0 0.0
        %632 = vmatpush1.msra.mxu0 0.0
        %633 = vmatprep.subr.mxu0 0.0
        %634 = vmatpush1.msra.mxu0 0.0
        %635 = vmatprep.subr.mxu0 0.0
        %636 = vmatpush1.msra.mxu0 0.0
        %637 = vmatprep.subr.mxu0 0.0
        %638 = vmatpush1.msra.mxu0 0.0
        %639 = vmatprep.subr.mxu0 0.0
        %640 = vmatpush1.msra.mxu0 0.0
        %641 = vmatprep.mubr.f32.mxu0 0.0
        %642 = vmatmul.mubr.f32.gmra.mrb[0].mxu0 %v575
        %v643 = vpop.f32.mrb[0].mxu0
        %v644 = vadd.f32 %v572, %v643
        %v645 = vpop.f32.mrb[0].mxu0
        %646 = vdwg.mxu0
        %v648 = vlaneseq
        %v649 = vshrl.u32 %v648, 7
        %v650 = vsub.s32 0, %v649
        %v651 = vrot.slane %v562, %v650
        %654 = vrot.lane.b32.xlu0 %v644, 96
        %v655 = vpop.permute.xlu0 %654
        %vm656 = vcmask 64512
        %v657 = vsel %vm656, %v644, 0
        %v659 = vsel %vm656, %v655, 0
        %661 = vmatprep.subr.mxu0 0.0
        %662 = vmatpush1.xpose.msra.mxu0 %v659
        %663 = vmatprep.subr.mxu0 0.0
        %664 = vmatpush1.xpose.msra.mxu0 0.0
        %665 = vmatprep.subr.mxu0 0.0
        %666 = vmatpush1.xpose.msra.mxu0 0.0
        %667 = vmatprep.subr.mxu0 0.0
        %668 = vmatpush1.xpose.msra.mxu0 0.0
        %669 = vmatprep.subr.mxu0 0.0
        %670 = vmatpush1.xpose.msra.mxu0 0.0
        %671 = vmatprep.subr.mxu0 0.0
        %672 = vmatpush1.xpose.msra.mxu0 0.0
        %673 = vmatprep.subr.mxu0 0.0
        %674 = vmatpush1.xpose.msra.mxu0 0.0
        %675 = vmatprep.subr.mxu0 0.0
        %676 = vmatpush1.xpose.msra.mxu0 0.0
        %677 = vmatprep.subr.mxu0 0.0
        %678 = vmatpush1.xpose.msra.mxu0 0.0
        %679 = vmatprep.subr.mxu0 0.0
        %680 = vmatpush1.xpose.msra.mxu0 0.0
        %681 = vmatprep.subr.mxu0 0.0
        %682 = vmatpush1.xpose.msra.mxu0 0.0
        %683 = vmatprep.subr.mxu0 0.0
        %684 = vmatpush1.xpose.msra.mxu0 0.0
        %685 = vmatprep.subr.mxu0 0.0
        %686 = vmatpush1.xpose.msra.mxu0 0.0
        %687 = vmatprep.subr.mxu0 0.0
        %688 = vmatpush1.xpose.msra.mxu0 0.0
        %689 = vmatprep.subr.mxu0 0.0
        %690 = vmatpush1.xpose.msra.mxu0 0.0
        %691 = vmatprep.subr.mxu0 0.0
        %692 = vmatpush1.xpose.msra.mxu0 0.0
        %693 = vmatprep.subr.mxu0 0.0
        %694 = vmatpush1.xpose.msra.mxu0 0.0
        %695 = vmatprep.subr.mxu0 0.0
        %696 = vmatpush1.xpose.msra.mxu0 0.0
        %697 = vmatprep.subr.mxu0 0.0
        %698 = vmatpush1.xpose.msra.mxu0 0.0
        %699 = vmatprep.subr.mxu0 0.0
        %700 = vmatpush1.xpose.msra.mxu0 0.0
        %701 = vmatprep.subr.mxu0 0.0
        %702 = vmatpush1.xpose.msra.mxu0 0.0
        %703 = vmatprep.subr.mxu0 0.0
        %704 = vmatpush1.xpose.msra.mxu0 0.0
        %705 = vmatprep.subr.mxu0 0.0
        %706 = vmatpush1.xpose.msra.mxu0 0.0
        %707 = vmatprep.subr.mxu0 0.0
        %708 = vmatpush1.xpose.msra.mxu0 0.0
        %709 = vmatprep.subr.mxu0 0.0
        %710 = vmatpush1.xpose.msra.mxu0 0.0
        %711 = vmatprep.subr.mxu0 0.0
        %712 = vmatpush1.xpose.msra.mxu0 0.0
        %713 = vmatprep.subr.mxu0 0.0
        %714 = vmatpush1.xpose.msra.mxu0 0.0
        %715 = vmatprep.subr.mxu0 0.0
        %716 = vmatpush1.xpose.msra.mxu0 0.0
        %717 = vmatprep.subr.mxu0 0.0
        %718 = vmatpush1.xpose.msra.mxu0 0.0
        %719 = vmatprep.subr.mxu0 0.0
        %720 = vmatpush1.xpose.msra.mxu0 0.0
        %721 = vmatprep.subr.mxu0 0.0
        %722 = vmatpush1.xpose.msra.mxu0 0.0
        %723 = vmatprep.subr.mxu0 0.0
        %724 = vmatpush1.xpose.msra.mxu0 0.0
        %725 = vmatprep.mubr.f32.mxu0 0.0
        %726 = vmatmul.mubr.f32.gmra.mrb[0].mxu0 %v657
        %v727 = vpop.f32.mrb[0].mxu0
        %v728 = vadd.f32 %v651, %v727
        %v729 = vpop.f32.mrb[0].mxu0
        %730 = vdwg.mxu0
        %v731 = vsel %vm656, %v728, -inf
        %732 = vmax.xlane.f32.xlu0 %v731
        %v733 = vpop.xlane.xlu0 %732
        %v734 = vsub.f32 %v728, %v733
        %v735 = vmul.f32 %v734, 1.442695
        %v736 = vpow.pop %v735
        %v737 = vsel %vm656, %v736, 0.0
        %738 = vadd.xlane.f32.xlu0 %v737
        %v739 = vpop.xlane.xlu0 %738
        %v740 = vrcp.pop %v739
        %v741 = vmul.f32 %v736, %v740
        %742 = vrot.lane.b32.xlu0 %v644, 64
        %v743 = vpop.permute.xlu0 %742
        %v746 = vsel %vm656, %v741, 0
        %748 = vmatprep.subr.mxu0 0.0
        %749 = vmatpush1.msra.mxu0 %v743
        %750 = vmatprep.subr.mxu0 0.0
        %751 = vmatpush1.msra.mxu0 0.0
        %752 = vmatprep.subr.mxu0 0.0
        %753 = vmatpush1.msra.mxu0 0.0
        %754 = vmatprep.subr.mxu0 0.0
        %755 = vmatpush1.msra.mxu0 0.0
        %756 = vmatprep.subr.mxu0 0.0
        %757 = vmatpush1.msra.mxu0 0.0
        %758 = vmatprep.subr.mxu0 0.0
        %759 = vmatpush1.msra.mxu0 0.0
        %760 = vmatprep.subr.mxu0 0.0
        %761 = vmatpush1.msra.mxu0 0.0
        %762 = vmatprep.subr.mxu0 0.0
        %763 = vmatpush1.msra.mxu0 0.0
        %764 = vmatprep.subr.mxu0 0.0
        %765 = vmatpush1.msra.mxu0 0.0
        %766 = vmatprep.subr.mxu0 0.0
        %767 = vmatpush1.msra.mxu0 0.0
        %768 = vmatprep.subr.mxu0 0.0
        %769 = vmatpush1.msra.mxu0 0.0
        %770 = vmatprep.subr.mxu0 0.0
        %771 = vmatpush1.msra.mxu0 0.0
        %772 = vmatprep.subr.mxu0 0.0
        %773 = vmatpush1.msra.mxu0 0.0
        %774 = vmatprep.subr.mxu0 0.0
        %775 = vmatpush1.msra.mxu0 0.0
        %776 = vmatprep.subr.mxu0 0.0
        %777 = vmatpush1.msra.mxu0 0.0
        %778 = vmatprep.subr.mxu0 0.0
        %779 = vmatpush1.msra.mxu0 0.0
        %780 = vmatprep.subr.mxu0 0.0
        %781 = vmatpush1.msra.mxu0 0.0
        %782 = vmatprep.subr.mxu0 0.0
        %783 = vmatpush1.msra.mxu0 0.0
        %784 = vmatprep.subr.mxu0 0.0
        %785 = vmatpush1.msra.mxu0 0.0
        %786 = vmatprep.subr.mxu0 0.0
        %787 = vmatpush1.msra.mxu0 0.0
        %788 = vmatprep.subr.mxu0 0.0
        %789 = vmatpush1.msra.mxu0 0.0
        %790 = vmatprep.subr.mxu0 0.0
        %791 = vmatpush1.msra.mxu0 0.0
        %792 = vmatprep.subr.mxu0 0.0
        %793 = vmatpush1.msra.mxu0 0.0
        %794 = vmatprep.subr.mxu0 0.0
        %795 = vmatpush1.msra.mxu0 0.0
        %796 = vmatprep.subr.mxu0 0.0
        %797 = vmatpush1.msra.mxu0 0.0
        %798 = vmatprep.subr.mxu0 0.0
        %799 = vmatpush1.msra.mxu0 0.0
        %800 = vmatprep.subr.mxu0 0.0
        %801 = vmatpush1.msra.mxu0 0.0
        %802 = vmatprep.subr.mxu0 0.0
        %803 = vmatpush1.msra.mxu0 0.0
        %804 = vmatprep.subr.mxu0 0.0
        %805 = vmatpush1.msra.mxu0 0.0
        %806 = vmatprep.subr.mxu0 0.0
        %807 = vmatpush1.msra.mxu0 0.0
        %808 = vmatprep.subr.mxu0 0.0
        %809 = vmatpush1.msra.mxu0 0.0
        %810 = vmatprep.subr.mxu0 0.0
        %811 = vmatpush1.msra.mxu0 0.0
        %812 = vmatprep.mubr.f32.mxu0 0.0
        %813 = vmatmul.mubr.f32.gmra.mrb[0].mxu0 %v746
        %v814 = vpop.f32.mrb[0].mxu0
        %v815 = vadd.f32 0.0, %v814
        %v816 = vpop.f32.mrb[0].mxu0
        %817 = vdwg.mxu0
        %818 = vrot.lane.b32.xlu0 %v644, 120
        %v819 = vpop.permute.xlu0 %818
        %820 = vrot.lane.b32.xlu0 %v644, 88
        %v821 = vpop.permute.xlu0 %820
        %v822 = vsel %vm656, %v819, 0
        %v824 = vsel %vm656, %v821, 0
        %826 = vmatprep.subr.mxu0 0.0
        %827 = vmatpush1.xpose.msra.mxu0 %v824
        %828 = vmatprep.subr.mxu0 0.0
        %829 = vmatpush1.xpose.msra.mxu0 0.0
        %830 = vmatprep.subr.mxu0 0.0
        %831 = vmatpush1.xpose.msra.mxu0 0.0
        %832 = vmatprep.subr.mxu0 0.0
        %833 = vmatpush1.xpose.msra.mxu0 0.0
        %834 = vmatprep.subr.mxu0 0.0
        %835 = vmatpush1.xpose.msra.mxu0 0.0
        %836 = vmatprep.subr.mxu0 0.0
        %837 = vmatpush1.xpose.msra.mxu0 0.0
        %838 = vmatprep.subr.mxu0 0.0
        %839 = vmatpush1.xpose.msra.mxu0 0.0
        %840 = vmatprep.subr.mxu0 0.0
        %841 = vmatpush1.xpose.msra.mxu0 0.0
        %842 = vmatprep.subr.mxu0 0.0
        %843 = vmatpush1.xpose.msra.mxu0 0.0
        %844 = vmatprep.subr.mxu0 0.0
        %845 = vmatpush1.xpose.msra.mxu0 0.0
        %846 = vmatprep.subr.mxu0 0.0
        %847 = vmatpush1.xpose.msra.mxu0 0.0
        %848 = vmatprep.subr.mxu0 0.0
        %849 = vmatpush1.xpose.msra.mxu0 0.0
        %850 = vmatprep.subr.mxu0 0.0
        %851 = vmatpush1.xpose.msra.mxu0 0.0
        %852 = vmatprep.subr.mxu0 0.0
        %853 = vmatpush1.xpose.msra.mxu0 0.0
        %854 = vmatprep.subr.mxu0 0.0
        %855 = vmatpush1.xpose.msra.mxu0 0.0
        %856 = vmatprep.subr.mxu0 0.0
        %857 = vmatpush1.xpose.msra.mxu0 0.0
        %858 = vmatprep.subr.mxu0 0.0
        %859 = vmatpush1.xpose.msra.mxu0 0.0
        %860 = vmatprep.subr.mxu0 0.0
        %861 = vmatpush1.xpose.msra.mxu0 0.0
        %862 = vmatprep.subr.mxu0 0.0
        %863 = vmatpush1.xpose.msra.mxu0 0.0
        %864 = vmatprep.subr.mxu0 0.0
        %865 = vmatpush1.xpose.msra.mxu0 0.0
        %866 = vmatprep.subr.mxu0 0.0
        %867 = vmatpush1.xpose.msra.mxu0 0.0
        %868 = vmatprep.subr.mxu0 0.0
        %869 = vmatpush1.xpose.msra.mxu0 0.0
        %870 = vmatprep.subr.mxu0 0.0
        %871 = vmatpush1.xpose.msra.mxu0 0.0
        %872 = vmatprep.subr.mxu0 0.0
        %873 = vmatpush1.xpose.msra.mxu0 0.0
        %874 = vmatprep.subr.mxu0 0.0
        %875 = vmatpush1.xpose.msra.mxu0 0.0
        %876 = vmatprep.subr.mxu0 0.0
        %877 = vmatpush1.xpose.msra.mxu0 0.0
        %878 = vmatprep.subr.mxu0 0.0
        %879 = vmatpush1.xpose.msra.mxu0 0.0
        %880 = vmatprep.subr.mxu0 0.0
        %881 = vmatpush1.xpose.msra.mxu0 0.0
        %882 = vmatprep.subr.mxu0 0.0
        %883 = vmatpush1.xpose.msra.mxu0 0.0
        %884 = vmatprep.subr.mxu0 0.0
        %885 = vmatpush1.xpose.msra.mxu0 0.0
        %886 = vmatprep.subr.mxu0 0.0
        %887 = vmatpush1.xpose.msra.mxu0 0.0
        %888 = vmatprep.subr.mxu0 0.0
        %889 = vmatpush1.xpose.msra.mxu0 0.0
        %890 = vmatprep.mubr.f32.mxu0 0.0
        %891 = vmatmul.mubr.f32.gmra.mrb[0].mxu0 %v822
        %v892 = vpop.f32.mrb[0].mxu0
        %v893 = vadd.f32 %v651, %v892
        %v894 = vpop.f32.mrb[0].mxu0
        %895 = vdwg.mxu0
        %v896 = vsel %vm656, %v893, -inf
        %897 = vmax.xlane.f32.xlu0 %v896
        %v898 = vpop.xlane.xlu0 %897
        %v899 = vsub.f32 %v893, %v898
        %v900 = vmul.f32 %v899, 1.442695
        %v901 = vpow.pop %v900
        %v902 = vsel %vm656, %v901, 0.0
        %903 = vadd.xlane.f32.xlu0 %v902
        %v904 = vpop.xlane.xlu0 %903
        %v905 = vrcp.pop %v904
        %v906 = vmul.f32 %v901, %v905
        %907 = vrot.lane.b32.xlu0 %v644, 56
        %v908 = vpop.permute.xlu0 %907
        %v911 = vsel %vm656, %v906, 0
        %913 = vmatprep.subr.mxu0 0.0
        %914 = vmatpush1.msra.mxu0 %v908
        %915 = vmatprep.subr.mxu0 0.0
        %916 = vmatpush1.msra.mxu0 0.0
        %917 = vmatprep.subr.mxu0 0.0
        %918 = vmatpush1.msra.mxu0 0.0
        %919 = vmatprep.subr.mxu0 0.0
        %920 = vmatpush1.msra.mxu0 0.0
        %921 = vmatprep.subr.mxu0 0.0
        %922 = vmatpush1.msra.mxu0 0.0
        %923 = vmatprep.subr.mxu0 0.0
        %924 = vmatpush1.msra.mxu0 0.0
        %925 = vmatprep.subr.mxu0 0.0
        %926 = vmatpush1.msra.mxu0 0.0
        %927 = vmatprep.subr.mxu0 0.0
        %928 = vmatpush1.msra.mxu0 0.0
        %929 = vmatprep.subr.mxu0 0.0
        %930 = vmatpush1.msra.mxu0 0.0
        %931 = vmatprep.subr.mxu0 0.0
        %932 = vmatpush1.msra.mxu0 0.0
        %933 = vmatprep.subr.mxu0 0.0
        %934 = vmatpush1.msra.mxu0 0.0
        %935 = vmatprep.subr.mxu0 0.0
        %936 = vmatpush1.msra.mxu0 0.0
        %937 = vmatprep.subr.mxu0 0.0
        %938 = vmatpush1.msra.mxu0 0.0
        %939 = vmatprep.subr.mxu0 0.0
        %940 = vmatpush1.msra.mxu0 0.0
        %941 = vmatprep.subr.mxu0 0.0
        %942 = vmatpush1.msra.mxu0 0.0
        %943 = vmatprep.subr.mxu0 0.0
        %944 = vmatpush1.msra.mxu0 0.0
        %945 = vmatprep.subr.mxu0 0.0
        %946 = vmatpush1.msra.mxu0 0.0
        %947 = vmatprep.subr.mxu0 0.0
        %948 = vmatpush1.msra.mxu0 0.0
        %949 = vmatprep.subr.mxu0 0.0
        %950 = vmatpush1.msra.mxu0 0.0
        %951 = vmatprep.subr.mxu0 0.0
        %952 = vmatpush1.msra.mxu0 0.0
        %953 = vmatprep.subr.mxu0 0.0
        %954 = vmatpush1.msra.mxu0 0.0
        %955 = vmatprep.subr.mxu0 0.0
        %956 = vmatpush1.msra.mxu0 0.0
        %957 = vmatprep.subr.mxu0 0.0
        %958 = vmatpush1.msra.mxu0 0.0
        %959 = vmatprep.subr.mxu0 0.0
        %960 = vmatpush1.msra.mxu0 0.0
        %961 = vmatprep.subr.mxu0 0.0
        %962 = vmatpush1.msra.mxu0 0.0
        %963 = vmatprep.subr.mxu0 0.0
        %964 = vmatpush1.msra.mxu0 0.0
        %965 = vmatprep.subr.mxu0 0.0
        %966 = vmatpush1.msra.mxu0 0.0
        %967 = vmatprep.subr.mxu0 0.0
        %968 = vmatpush1.msra.mxu0 0.0
        %969 = vmatprep.subr.mxu0 0.0
        %970 = vmatpush1.msra.mxu0 0.0
        %971 = vmatprep.subr.mxu0 0.0
        %972 = vmatpush1.msra.mxu0 0.0
        %973 = vmatprep.subr.mxu0 0.0
        %974 = vmatpush1.msra.mxu0 0.0
        %975 = vmatprep.subr.mxu0 0.0
        %976 = vmatpush1.msra.mxu0 0.0
        %977 = vmatprep.mubr.f32.mxu0 0.0
        %978 = vmatmul.mubr.f32.gmra.mrb[0].mxu0 %v911
        %v979 = vpop.f32.mrb[0].mxu0
        %v980 = vadd.f32 0.0, %v979
        %v981 = vpop.f32.mrb[0].mxu0
        %982 = vdwg.mxu0
        %983 = vrot.lane.b32.xlu0 %v644, 112
        %v984 = vpop.permute.xlu0 %983
        %985 = vrot.lane.b32.xlu0 %v644, 80
        %v986 = vpop.permute.xlu0 %985
        %v987 = vsel %vm656, %v984, 0
        %v989 = vsel %vm656, %v986, 0
        %991 = vmatprep.subr.mxu0 0.0
        %992 = vmatpush1.xpose.msra.mxu0 %v989
        %993 = vmatprep.subr.mxu0 0.0
        %994 = vmatpush1.xpose.msra.mxu0 0.0
        %995 = vmatprep.subr.mxu0 0.0
        %996 = vmatpush1.xpose.msra.mxu0 0.0
        %997 = vmatprep.subr.mxu0 0.0
        %998 = vmatpush1.xpose.msra.mxu0 0.0
        %999 = vmatprep.subr.mxu0 0.0
        %1000 = vmatpush1.xpose.msra.mxu0 0.0
        %1001 = vmatprep.subr.mxu0 0.0
        %1002 = vmatpush1.xpose.msra.mxu0 0.0
        %1003 = vmatprep.subr.mxu0 0.0
        %1004 = vmatpush1.xpose.msra.mxu0 0.0
        %1005 = vmatprep.subr.mxu0 0.0
        %1006 = vmatpush1.xpose.msra.mxu0 0.0
        %1007 = vmatprep.subr.mxu0 0.0
        %1008 = vmatpush1.xpose.msra.mxu0 0.0
        %1009 = vmatprep.subr.mxu0 0.0
        %1010 = vmatpush1.xpose.msra.mxu0 0.0
        %1011 = vmatprep.subr.mxu0 0.0
        %1012 = vmatpush1.xpose.msra.mxu0 0.0
        %1013 = vmatprep.subr.mxu0 0.0
        %1014 = vmatpush1.xpose.msra.mxu0 0.0
        %1015 = vmatprep.subr.mxu0 0.0
        %1016 = vmatpush1.xpose.msra.mxu0 0.0
        %1017 = vmatprep.subr.mxu0 0.0
        %1018 = vmatpush1.xpose.msra.mxu0 0.0
        %1019 = vmatprep.subr.mxu0 0.0
        %1020 = vmatpush1.xpose.msra.mxu0 0.0
        %1021 = vmatprep.subr.mxu0 0.0
        %1022 = vmatpush1.xpose.msra.mxu0 0.0
        %1023 = vmatprep.subr.mxu0 0.0
        %1024 = vmatpush1.xpose.msra.mxu0 0.0
        %1025 = vmatprep.subr.mxu0 0.0
        %1026 = vmatpush1.xpose.msra.mxu0 0.0
        %1027 = vmatprep.subr.mxu0 0.0
        %1028 = vmatpush1.xpose.msra.mxu0 0.0
        %1029 = vmatprep.subr.mxu0 0.0
        %1030 = vmatpush1.xpose.msra.mxu0 0.0
        %1031 = vmatprep.subr.mxu0 0.0
        %1032 = vmatpush1.xpose.msra.mxu0 0.0
        %1033 = vmatprep.subr.mxu0 0.0
        %1034 = vmatpush1.xpose.msra.mxu0 0.0
        %1035 = vmatprep.subr.mxu0 0.0
        %1036 = vmatpush1.xpose.msra.mxu0 0.0
        %1037 = vmatprep.subr.mxu0 0.0
        %1038 = vmatpush1.xpose.msra.mxu0 0.0
        %1039 = vmatprep.subr.mxu0 0.0
        %1040 = vmatpush1.xpose.msra.mxu0 0.0
        %1041 = vmatprep.subr.mxu0 0.0
        %1042 = vmatpush1.xpose.msra.mxu0 0.0
        %1043 = vmatprep.subr.mxu0 0.0
        %1044 = vmatpush1.xpose.msra.mxu0 0.0
        %1045 = vmatprep.subr.mxu0 0.0
        %1046 = vmatpush1.xpose.msra.mxu0 0.0
        %1047 = vmatprep.subr.mxu0 0.0
        %1048 = vmatpush1.xpose.msra.mxu0 0.0
        %1049 = vmatprep.subr.mxu0 0.0
        %1050 = vmatpush1.xpose.msra.mxu0 0.0
        %1051 = vmatprep.subr.mxu0 0.0
        %1052 = vmatpush1.xpose.msra.mxu0 0.0
        %1053 = vmatprep.subr.mxu0 0.0
        %1054 = vmatpush1.xpose.msra.mxu0 0.0
        %1055 = vmatprep.mubr.f32.mxu0 0.0
        %1056 = vmatmul.mubr.f32.gmra.mrb[0].mxu0 %v987
        %v1057 = vpop.f32.mrb[0].mxu0
        %v1058 = vadd.f32 %v651, %v1057
        %v1059 = vpop.f32.mrb[0].mxu0
        %1060 = vdwg.mxu0
        %v1061 = vsel %vm656, %v1058, -inf
        %1062 = vmax.xlane.f32.xlu0 %v1061
        %v1063 = vpop.xlane.xlu0 %1062
        %v1064 = vsub.f32 %v1058, %v1063
        %v1065 = vmul.f32 %v1064, 1.442695
        %v1066 = vpow.pop %v1065
        %v1067 = vsel %vm656, %v1066, 0.0
        %1068 = vadd.xlane.f32.xlu0 %v1067
        %v1069 = vpop.xlane.xlu0 %1068
        %v1070 = vrcp.pop %v1069
        %v1071 = vmul.f32 %v1066, %v1070
        %1072 = vrot.lane.b32.xlu0 %v644, 48
        %v1073 = vpop.permute.xlu0 %1072
        %v1076 = vsel %vm656, %v1071, 0
        %1078 = vmatprep.subr.mxu0 0.0
        %1079 = vmatpush1.msra.mxu0 %v1073
        %1080 = vmatprep.subr.mxu0 0.0
        %1081 = vmatpush1.msra.mxu0 0.0
        %1082 = vmatprep.subr.mxu0 0.0
        %1083 = vmatpush1.msra.mxu0 0.0
        %1084 = vmatprep.subr.mxu0 0.0
        %1085 = vmatpush1.msra.mxu0 0.0
        %1086 = vmatprep.subr.mxu0 0.0
        %1087 = vmatpush1.msra.mxu0 0.0
        %1088 = vmatprep.subr.mxu0 0.0
        %1089 = vmatpush1.msra.mxu0 0.0
        %1090 = vmatprep.subr.mxu0 0.0
        %1091 = vmatpush1.msra.mxu0 0.0
        %1092 = vmatprep.subr.mxu0 0.0
        %1093 = vmatpush1.msra.mxu0 0.0
        %1094 = vmatprep.subr.mxu0 0.0
        %1095 = vmatpush1.msra.mxu0 0.0
        %1096 = vmatprep.subr.mxu0 0.0
        %1097 = vmatpush1.msra.mxu0 0.0
        %1098 = vmatprep.subr.mxu0 0.0
        %1099 = vmatpush1.msra.mxu0 0.0
        %1100 = vmatprep.subr.mxu0 0.0
        %1101 = vmatpush1.msra.mxu0 0.0
        %1102 = vmatprep.subr.mxu0 0.0
        %1103 = vmatpush1.msra.mxu0 0.0
        %1104 = vmatprep.subr.mxu0 0.0
        %1105 = vmatpush1.msra.mxu0 0.0
        %1106 = vmatprep.subr.mxu0 0.0
        %1107 = vmatpush1.msra.mxu0 0.0
        %1108 = vmatprep.subr.mxu0 0.0
        %1109 = vmatpush1.msra.mxu0 0.0
        %1110 = vmatprep.subr.mxu0 0.0
        %1111 = vmatpush1.msra.mxu0 0.0
        %1112 = vmatprep.subr.mxu0 0.0
        %1113 = vmatpush1.msra.mxu0 0.0
        %1114 = vmatprep.subr.mxu0 0.0
        %1115 = vmatpush1.msra.mxu0 0.0
        %1116 = vmatprep.subr.mxu0 0.0
        %1117 = vmatpush1.msra.mxu0 0.0
        %1118 = vmatprep.subr.mxu0 0.0
        %1119 = vmatpush1.msra.mxu0 0.0
        %1120 = vmatprep.subr.mxu0 0.0
        %1121 = vmatpush1.msra.mxu0 0.0
        %1122 = vmatprep.subr.mxu0 0.0
        %1123 = vmatpush1.msra.mxu0 0.0
        %1124 = vmatprep.subr.mxu0 0.0
        %1125 = vmatpush1.msra.mxu0 0.0
        %1126 = vmatprep.subr.mxu0 0.0
        %1127 = vmatpush1.msra.mxu0 0.0
        %1128 = vmatprep.subr.mxu0 0.0
        %1129 = vmatpush1.msra.mxu0 0.0
        %1130 = vmatprep.subr.mxu0 0.0
        %1131 = vmatpush1.msra.mxu0 0.0
        %1132 = vmatprep.subr.mxu0 0.0
        %1133 = vmatpush1.msra.mxu0 0.0
        %1134 = vmatprep.subr.mxu0 0.0
        %1135 = vmatpush1.msra.mxu0 0.0
        %1136 = vmatprep.subr.mxu0 0.0
        %1137 = vmatpush1.msra.mxu0 0.0
        %1138 = vmatprep.subr.mxu0 0.0
        %1139 = vmatpush1.msra.mxu0 0.0
        %1140 = vmatprep.subr.mxu0 0.0
        %1141 = vmatpush1.msra.mxu0 0.0
        %1142 = vmatprep.mubr.f32.mxu0 0.0
        %1143 = vmatmul.mubr.f32.gmra.mrb[0].mxu0 %v1076
        %v1144 = vpop.f32.mrb[0].mxu0
        %v1145 = vadd.f32 0.0, %v1144
        %v1146 = vpop.f32.mrb[0].mxu0
        %1147 = vdwg.mxu0
        %1148 = vrot.lane.b32.xlu0 %v644, 104
        %v1149 = vpop.permute.xlu0 %1148
        %1150 = vrot.lane.b32.xlu0 %v644, 72
        %v1151 = vpop.permute.xlu0 %1150
        %v1152 = vsel %vm656, %v1149, 0
        %v1154 = vsel %vm656, %v1151, 0
        %1156 = vmatprep.subr.mxu0 0.0
        %1157 = vmatpush1.xpose.msra.mxu0 %v1154
        %1158 = vmatprep.subr.mxu0 0.0
        %1159 = vmatpush1.xpose.msra.mxu0 0.0
        %1160 = vmatprep.subr.mxu0 0.0
        %1161 = vmatpush1.xpose.msra.mxu0 0.0
        %1162 = vmatprep.subr.mxu0 0.0
        %1163 = vmatpush1.xpose.msra.mxu0 0.0
        %1164 = vmatprep.subr.mxu0 0.0
        %1165 = vmatpush1.xpose.msra.mxu0 0.0
        %1166 = vmatprep.subr.mxu0 0.0
        %1167 = vmatpush1.xpose.msra.mxu0 0.0
        %1168 = vmatprep.subr.mxu0 0.0
        %1169 = vmatpush1.xpose.msra.mxu0 0.0
        %1170 = vmatprep.subr.mxu0 0.0
        %1171 = vmatpush1.xpose.msra.mxu0 0.0
        %1172 = vmatprep.subr.mxu0 0.0
        %1173 = vmatpush1.xpose.msra.mxu0 0.0
        %1174 = vmatprep.subr.mxu0 0.0
        %1175 = vmatpush1.xpose.msra.mxu0 0.0
        %1176 = vmatprep.subr.mxu0 0.0
        %1177 = vmatpush1.xpose.msra.mxu0 0.0
        %1178 = vmatprep.subr.mxu0 0.0
        %1179 = vmatpush1.xpose.msra.mxu0 0.0
        %1180 = vmatprep.subr.mxu0 0.0
        %1181 = vmatpush1.xpose.msra.mxu0 0.0
        %1182 = vmatprep.subr.mxu0 0.0
        %1183 = vmatpush1.xpose.msra.mxu0 0.0
        %1184 = vmatprep.subr.mxu0 0.0
        %1185 = vmatpush1.xpose.msra.mxu0 0.0
        %1186 = vmatprep.subr.mxu0 0.0
        %1187 = vmatpush1.xpose.msra.mxu0 0.0
        %1188 = vmatprep.subr.mxu0 0.0
        %1189 = vmatpush1.xpose.msra.mxu0 0.0
        %1190 = vmatprep.subr.mxu0 0.0
        %1191 = vmatpush1.xpose.msra.mxu0 0.0
        %1192 = vmatprep.subr.mxu0 0.0
        %1193 = vmatpush1.xpose.msra.mxu0 0.0
        %1194 = vmatprep.subr.mxu0 0.0
        %1195 = vmatpush1.xpose.msra.mxu0 0.0
        %1196 = vmatprep.subr.mxu0 0.0
        %1197 = vmatpush1.xpose.msra.mxu0 0.0
        %1198 = vmatprep.subr.mxu0 0.0
        %1199 = vmatpush1.xpose.msra.mxu0 0.0
        %1200 = vmatprep.subr.mxu0 0.0
        %1201 = vmatpush1.xpose.msra.mxu0 0.0
        %1202 = vmatprep.subr.mxu0 0.0
        %1203 = vmatpush1.xpose.msra.mxu0 0.0
        %1204 = vmatprep.subr.mxu0 0.0
        %1205 = vmatpush1.xpose.msra.mxu0 0.0
        %1206 = vmatprep.subr.mxu0 0.0
        %1207 = vmatpush1.xpose.msra.mxu0 0.0
        %1208 = vmatprep.subr.mxu0 0.0
        %1209 = vmatpush1.xpose.msra.mxu0 0.0
        %1210 = vmatprep.subr.mxu0 0.0
        %1211 = vmatpush1.xpose.msra.mxu0 0.0
        %1212 = vmatprep.subr.mxu0 0.0
        %1213 = vmatpush1.xpose.msra.mxu0 0.0
        %1214 = vmatprep.subr.mxu0 0.0
        %1215 = vmatpush1.xpose.msra.mxu0 0.0
        %1216 = vmatprep.subr.mxu0 0.0
        %1217 = vmatpush1.xpose.msra.mxu0 0.0
        %1218 = vmatprep.subr.mxu0 0.0
        %1219 = vmatpush1.xpose.msra.mxu0 0.0
        %1220 = vmatprep.mubr.f32.mxu0 0.0
        %1221 = vmatmul.mubr.f32.gmra.mrb[0].mxu0 %v1152
        %v1222 = vpop.f32.mrb[0].mxu0
        %v1223 = vadd.f32 %v651, %v1222
        %v1224 = vpop.f32.mrb[0].mxu0
        %1225 = vdwg.mxu0
        %v1226 = vsel %vm656, %v1223, -inf
        %1227 = vmax.xlane.f32.xlu0 %v1226
        %v1228 = vpop.xlane.xlu0 %1227
        %v1229 = vsub.f32 %v1223, %v1228
        %v1230 = vmul.f32 %v1229, 1.442695
        %v1231 = vpow.pop %v1230
        %v1232 = vsel %vm656, %v1231, 0.0
        %1233 = vadd.xlane.f32.xlu0 %v1232
        %v1234 = vpop.xlane.xlu0 %1233
        %v1235 = vrcp.pop %v1234
        %v1236 = vmul.f32 %v1231, %v1235
        %1237 = vrot.lane.b32.xlu0 %v644, 40
        %v1238 = vpop.permute.xlu0 %1237
        %v1241 = vsel %vm656, %v1236, 0
        %1243 = vmatprep.subr.mxu0 0.0
        %1244 = vmatpush1.msra.mxu0 %v1238
        %1245 = vmatprep.subr.mxu0 0.0
        %1246 = vmatpush1.msra.mxu0 0.0
        %1247 = vmatprep.subr.mxu0 0.0
        %1248 = vmatpush1.msra.mxu0 0.0
        %1249 = vmatprep.subr.mxu0 0.0
        %1250 = vmatpush1.msra.mxu0 0.0
        %1251 = vmatprep.subr.mxu0 0.0
        %1252 = vmatpush1.msra.mxu0 0.0
        %1253 = vmatprep.subr.mxu0 0.0
        %1254 = vmatpush1.msra.mxu0 0.0
        %1255 = vmatprep.subr.mxu0 0.0
        %1256 = vmatpush1.msra.mxu0 0.0
        %1257 = vmatprep.subr.mxu0 0.0
        %1258 = vmatpush1.msra.mxu0 0.0
        %1259 = vmatprep.subr.mxu0 0.0
        %1260 = vmatpush1.msra.mxu0 0.0
        %1261 = vmatprep.subr.mxu0 0.0
        %1262 = vmatpush1.msra.mxu0 0.0
        %1263 = vmatprep.subr.mxu0 0.0
        %1264 = vmatpush1.msra.mxu0 0.0
        %1265 = vmatprep.subr.mxu0 0.0
        %1266 = vmatpush1.msra.mxu0 0.0
        %1267 = vmatprep.subr.mxu0 0.0
        %1268 = vmatpush1.msra.mxu0 0.0
        %1269 = vmatprep.subr.mxu0 0.0
        %1270 = vmatpush1.msra.mxu0 0.0
        %1271 = vmatprep.subr.mxu0 0.0
        %1272 = vmatpush1.msra.mxu0 0.0
        %1273 = vmatprep.subr.mxu0 0.0
        %1274 = vmatpush1.msra.mxu0 0.0
        %1275 = vmatprep.subr.mxu0 0.0
        %1276 = vmatpush1.msra.mxu0 0.0
        %1277 = vmatprep.subr.mxu0 0.0
        %1278 = vmatpush1.msra.mxu0 0.0
        %1279 = vmatprep.subr.mxu0 0.0
        %1280 = vmatpush1.msra.mxu0 0.0
        %1281 = vmatprep.subr.mxu0 0.0
        %1282 = vmatpush1.msra.mxu0 0.0
        %1283 = vmatprep.subr.mxu0 0.0
        %1284 = vmatpush1.msra.mxu0 0.0
        %1285 = vmatprep.subr.mxu0 0.0
        %1286 = vmatpush1.msra.mxu0 0.0
        %1287 = vmatprep.subr.mxu0 0.0
        %1288 = vmatpush1.msra.mxu0 0.0
        %1289 = vmatprep.subr.mxu0 0.0
        %1290 = vmatpush1.msra.mxu0 0.0
        %1291 = vmatprep.subr.mxu0 0.0
        %1292 = vmatpush1.msra.mxu0 0.0
        %1293 = vmatprep.subr.mxu0 0.0
        %1294 = vmatpush1.msra.mxu0 0.0
        %1295 = vmatprep.subr.mxu0 0.0
        %1296 = vmatpush1.msra.mxu0 0.0
        %1297 = vmatprep.subr.mxu0 0.0
        %1298 = vmatpush1.msra.mxu0 0.0
        %1299 = vmatprep.subr.mxu0 0.0
        %1300 = vmatpush1.msra.mxu0 0.0
        %1301 = vmatprep.subr.mxu0 0.0
        %1302 = vmatpush1.msra.mxu0 0.0
        %1303 = vmatprep.subr.mxu0 0.0
        %1304 = vmatpush1.msra.mxu0 0.0
        %1305 = vmatprep.subr.mxu0 0.0
        %1306 = vmatpush1.msra.mxu0 0.0
        %1307 = vmatprep.mubr.f32.mxu0 0.0
        %1308 = vmatmul.mubr.f32.gmra.mrb[0].mxu0 %v1241
        %v1309 = vpop.f32.mrb[0].mxu0
        %v1310 = vadd.f32 0.0, %v1309
        %v1311 = vpop.f32.mrb[0].mxu0
        %1312 = vdwg.mxu0
        %1314 = vrot.lane.b32.xlu0 %v980, 8
        %v1315 = vpop.permute.xlu0 %1314
        %1318 = vrot.lane.b32.xlu0 %v1145, 16
        %v1319 = vpop.permute.xlu0 %1318
        %1322 = vrot.lane.b32.xlu0 %v1310, 24
        %v1323 = vpop.permute.xlu0 %1322
        %v1325 = vsel %vm656, %v815, %v1315
        %vm1326 = vcmask 130048
        %v1327 = vsel %vm1326, %v1325, %v1319
        %vm1328 = vcmask 195584
        %v1329 = vsel %vm1328, %v1327, %v1323
        %v1330 = vld [vmem:[%s6] sm:$0xff]
        %v1331 = vld [vmem:[%s6 + $0x8] sm:$0xff]
        %v1332 = vld [vmem:[%s6 + $0x10] sm:$0xff]
        %v1333 = vld [vmem:[%s6 + $0x18] sm:$0xff]
        %v1334 = vld [vmem:[%s7] sm:$0x1]
        %v1336 = vlaneseq
        %v1337 = vshrl.u32 %v1336, 7
        %v1338 = vsub.s32 0, %v1337
        %v1339 = vrot.slane %v1334, %v1338
        %v1342 = vsel %vm533, %v1329, 0
        %1344 = vmatprep.subr.mxu0 0.0
        %1345 = vmatpush1.msra.mxu0 %v1330
        %1346 = vmatprep.subr.mxu0 0.0
        %1347 = vmatpush1.msra.mxu0 %v1331
        %1348 = vmatprep.subr.mxu0 0.0
        %1349 = vmatpush1.msra.mxu0 %v1332
        %1350 = vmatprep.subr.mxu0 0.0
        %1351 = vmatpush1.msra.mxu0 %v1333
        %1352 = vmatprep.subr.mxu0 0.0
        %1353 = vmatpush1.msra.mxu0 0.0
        %1354 = vmatprep.subr.mxu0 0.0
        %1355 = vmatpush1.msra.mxu0 0.0
        %1356 = vmatprep.subr.mxu0 0.0
        %1357 = vmatpush1.msra.mxu0 0.0
        %1358 = vmatprep.subr.mxu0 0.0
        %1359 = vmatpush1.msra.mxu0 0.0
        %1360 = vmatprep.subr.mxu0 0.0
        %1361 = vmatpush1.msra.mxu0 0.0
        %1362 = vmatprep.subr.mxu0 0.0
        %1363 = vmatpush1.msra.mxu0 0.0
        %1364 = vmatprep.subr.mxu0 0.0
        %1365 = vmatpush1.msra.mxu0 0.0
        %1366 = vmatprep.subr.mxu0 0.0
        %1367 = vmatpush1.msra.mxu0 0.0
        %1368 = vmatprep.subr.mxu0 0.0
        %1369 = vmatpush1.msra.mxu0 0.0
        %1370 = vmatprep.subr.mxu0 0.0
        %1371 = vmatpush1.msra.mxu0 0.0
        %1372 = vmatprep.subr.mxu0 0.0
        %1373 = vmatpush1.msra.mxu0 0.0
        %1374 = vmatprep.subr.mxu0 0.0
        %1375 = vmatpush1.msra.mxu0 0.0
        %1376 = vmatprep.subr.mxu0 0.0
        %1377 = vmatpush1.msra.mxu0 0.0
        %1378 = vmatprep.subr.mxu0 0.0
        %1379 = vmatpush1.msra.mxu0 0.0
        %1380 = vmatprep.subr.mxu0 0.0
        %1381 = vmatpush1.msra.mxu0 0.0
        %1382 = vmatprep.subr.mxu0 0.0
        %1383 = vmatpush1.msra.mxu0 0.0
        %1384 = vmatprep.subr.mxu0 0.0
        %1385 = vmatpush1.msra.mxu0 0.0
        %1386 = vmatprep.subr.mxu0 0.0
        %1387 = vmatpush1.msra.mxu0 0.0
        %1388 = vmatprep.subr.mxu0 0.0
        %1389 = vmatpush1.msra.mxu0 0.0
        %1390 = vmatprep.subr.mxu0 0.0
        %1391 = vmatpush1.msra.mxu0 0.0
        %1392 = vmatprep.subr.mxu0 0.0
        %1393 = vmatpush1.msra.mxu0 0.0
        %1394 = vmatprep.subr.mxu0 0.0
        %1395 = vmatpush1.msra.mxu0 0.0
        %1396 = vmatprep.subr.mxu0 0.0
        %1397 = vmatpush1.msra.mxu0 0.0
        %1398 = vmatprep.subr.mxu0 0.0
        %1399 = vmatpush1.msra.mxu0 0.0
        %1400 = vmatprep.subr.mxu0 0.0
        %1401 = vmatpush1.msra.mxu0 0.0
        %1402 = vmatprep.subr.mxu0 0.0
        %1403 = vmatpush1.msra.mxu0 0.0
        %1404 = vmatprep.subr.mxu0 0.0
        %1405 = vmatpush1.msra.mxu0 0.0
        %1406 = vmatprep.subr.mxu0 0.0
        %1407 = vmatpush1.msra.mxu0 0.0
        %1408 = vmatprep.mubr.f32.mxu0 0.0
        %1409 = vmatmul.mubr.f32.gmra.mrb[0].mxu0 %v1342
        %v1410 = vpop.f32.mrb[0].mxu0
        %v1411 = vadd.f32 %v1339, %v1410
        %v1412 = vpop.f32.mrb[0].mxu0
        %1413 = vdwg.mxu0
        %v1414 = vadd.f32 %v1411, %v561
        %v1415 = vld [vmem:[%s8] sm:$0x1]
        %v1416 = vld [vmem:[%s9] sm:$0x1]
        %v1417 = vsel %vm533, %v1414, 0.0
        %1418 = vadd.xlane.f32.xlu0 %v1417
        %v1419 = vpop.xlane.xlu0 %1418
        %v1420 = vmul.f32 %v1419, %v537
        %v1421 = vsub.f32 %v1414, %v1420
        %v1422 = vmul.f32 %v1421, %v1421
        %v1423 = vsel %vm533, %v1422, 0.0
        %1424 = vadd.xlane.f32.xlu0 %v1423
        %v1425 = vpop.xlane.xlu0 %1424
        %v1426 = vmul.f32 %v1425, %v537
        %v1427 = vadd.f32 %v1426, 1e-12
        %v1428 = vrsqrt.pop %v1427
        %v1429 = vmul.f32 %v1421, %v1428
        %v1431 = vlaneseq
        %v1432 = vshrl.u32 %v1431, 7
        %v1433 = vsub.s32 0, %v1432
        %v1434 = vrot.slane %v1415, %v1433
        %v1436 = vmul.f32 %v1429, %v1434
        %v1438 = vlaneseq
        %v1439 = vshrl.u32 %v1438, 7
        %v1440 = vsub.s32 0, %v1439
        %v1441 = vrot.slane %v1416, %v1440
        %v1443 = vadd.f32 %v1436, %v1441
        %v1444 = vld [vmem:[%s10] sm:$0xff]
        %v1445 = vld [vmem:[%s10 + $0x8] sm:$0xff]
        %v1446 = vld [vmem:[%s10 + $0x10] sm:$0xff]
        %v1447 = vld [vmem:[%s10 + $0x18] sm:$0xff]
        %v1448 = vld [vmem:[%s11] sm:$0x1]
        %v1450 = vlaneseq
        %v1451 = vshrl.u32 %v1450, 7
        %v1452 = vsub.s32 0, %v1451
        %v1453 = vrot.slane %v1448, %v1452
        %v1456 = vsel %vm533, %v1443, 0
        %1458 = vmatprep.subr.mxu0 0.0
        %1459 = vmatpush1.msra.mxu0 %v1444
        %1460 = vmatprep.subr.mxu0 0.0
        %1461 = vmatpush1.msra.mxu0 %v1445
        %1462 = vmatprep.subr.mxu0 0.0
        %1463 = vmatpush1.msra.mxu0 %v1446
        %1464 = vmatprep.subr.mxu0 0.0
        %1465 = vmatpush1.msra.mxu0 %v1447
        %1466 = vmatprep.subr.mxu0 0.0
        %1467 = vmatpush1.msra.mxu0 0.0
        %1468 = vmatprep.subr.mxu0 0.0
        %1469 = vmatpush1.msra.mxu0 0.0
        %1470 = vmatprep.subr.mxu0 0.0
        %1471 = vmatpush1.msra.mxu0 0.0
        %1472 = vmatprep.subr.mxu0 0.0
        %1473 = vmatpush1.msra.mxu0 0.0
        %1474 = vmatprep.subr.mxu0 0.0
        %1475 = vmatpush1.msra.mxu0 0.0
        %1476 = vmatprep.subr.mxu0 0.0
        %1477 = vmatpush1.msra.mxu0 0.0
        %1478 = vmatprep.subr.mxu0 0.0
        %1479 = vmatpush1.msra.mxu0 0.0
        %1480 = vmatprep.subr.mxu0 0.0
        %1481 = vmatpush1.msra.mxu0 0.0
        %1482 = vmatprep.subr.mxu0 0.0
        %1483 = vmatpush1.msra.mxu0 0.0
        %1484 = vmatprep.subr.mxu0 0.0
        %1485 = vmatpush1.msra.mxu0 0.0
        %1486 = vmatprep.subr.mxu0 0.0
        %1487 = vmatpush1.msra.mxu0 0.0
        %1488 = vmatprep.subr.mxu0 0.0
        %1489 = vmatpush1.msra.mxu0 0.0
        %1490 = vmatprep.subr.mxu0 0.0
        %1491 = vmatpush1.msra.mxu0 0.0
        %1492 = vmatprep.subr.mxu0 0.0
        %1493 = vmatpush1.msra.mxu0 0.0
        %1494 = vmatprep.subr.mxu0 0.0
        %1495 = vmatpush1.msra.mxu0 0.0
        %1496 = vmatprep.subr.mxu0 0.0
        %1497 = vmatpush1.msra.mxu0 0.0
        %1498 = vmatprep.subr.mxu0 0.0
        %1499 = vmatpush1.msra.mxu0 0.0
        %1500 = vmatprep.subr.mxu0 0.0
        %1501 = vmatpush1.msra.mxu0 0.0
        %1502 = vmatprep.subr.mxu0 0.0
        %1503 = vmatpush1.msra.mxu0 0.0
        %1504 = vmatprep.subr.mxu0 0.0
        %1505 = vmatpush1.msra.mxu0 0.0
        %1506 = vmatprep.subr.mxu0 0.0
        %1507 = vmatpush1.msra.mxu0 0.0
        %1508 = vmatprep.subr.mxu0 0.0
        %1509 = vmatpush1.msra.mxu0 0.0
        %1510 = vmatprep.subr.mxu0 0.0
        %1511 = vmatpush1.msra.mxu0 0.0
        %1512 = vmatprep.subr.mxu0 0.0
        %1513 = vmatpush1.msra.mxu0 0.0
        %1514 = vmatprep.subr.mxu0 0.0
        %1515 = vmatpush1.msra.mxu0 0.0
        %1516 = vmatprep.subr.mxu0 0.0
        %1517 = vmatpush1.msra.mxu0 0.0
        %1518 = vmatprep.subr.mxu0 0.0
        %1519 = vmatpush1.msra.mxu0 0.0
        %1520 = vmatprep.subr.mxu0 0.0
        %1521 = vmatpush1.msra.mxu0 0.0
        %1522 = vmatprep.mubr.f32.mxu0 0.0
        %1523 = vmatmul.mubr.f32.gmra.mrb[0].mxu0 %v1456
        %v1524 = vpop.f32.mrb[0].mxu0
        %v1525 = vadd.f32 %v1453, %v1524
        %v1526 = vpop.f32.mrb[0].mxu0
        %1527 = vdwg.mxu0
        %v1528 = vmul.f32 %v1525, 0.5
        %v1529 = vmul.f32 %v1525, 0.044715
        %v1530 = vmul.f32 %v1529, %v1525
        %v1531 = vmul.f32 %v1530, %v1525
        %v1532 = vadd.f32 %v1525, %v1531
        %v1533 = vmul.f32 %v1532, 0.7978846
        %v1534 = vtanh.pop %v1533
        %v1535 = vadd.f32 %v1534, 1.0
        %v1536 = vmul.f32 %v1528, %v1535
        %v1537 = vld [vmem:[%s12] sm:$0xff]
        %v1538 = vld [vmem:[%s12 + $0x8] sm:$0xff]
        %v1539 = vld [vmem:[%s12 + $0x10] sm:$0xff]
        %v1540 = vld [vmem:[%s12 + $0x18] sm:$0xff]
        %v1541 = vld [vmem:[%s12 + $0x20] sm:$0xff]
        %v1542 = vld [vmem:[%s12 + $0x28] sm:$0xff]
        %v1543 = vld [vmem:[%s12 + $0x30] sm:$0xff]
        %v1544 = vld [vmem:[%s12 + $0x38] sm:$0xff]
        %v1545 = vld [vmem:[%s13] sm:$0x1]
        %v1547 = vlaneseq
        %v1548 = vshrl.u32 %v1547, 7
        %v1549 = vsub.s32 0, %v1548
        %v1550 = vrot.slane %v1545, %v1549
        %vm1552 = vcmask 523264
        %v1554 = vsel %vm1552, %v1536, 0
        %1556 = vmatprep.subr.mxu0 0.0
        %1557 = vmatpush1.msra.mxu0 %v1537
        %1558 = vmatprep.subr.mxu0 0.0
        %1559 = vmatpush1.msra.mxu0 %v1538
        %1560 = vmatprep.subr.mxu0 0.0
        %1561 = vmatpush1.msra.mxu0 %v1539
        %1562 = vmatprep.subr.mxu0 0.0
        %1563 = vmatpush1.msra.mxu0 %v1540
        %1564 = vmatprep.subr.mxu0 0.0
        %1565 = vmatpush1.msra.mxu0 %v1541
        %1566 = vmatprep.subr.mxu0 0.0
        %1567 = vmatpush1.msra.mxu0 %v1542
        %1568 = vmatprep.subr.mxu0 0.0
        %1569 = vmatpush1.msra.mxu0 %v1543
        %1570 = vmatprep.subr.mxu0 0.0
        %1571 = vmatpush1.msra.mxu0 %v1544
        %1572 = vmatprep.subr.mxu0 0.0
        %1573 = vmatpush1.msra.mxu0 0.0
        %1574 = vmatprep.subr.mxu0 0.0
        %1575 = vmatpush1.msra.mxu0 0.0
        %1576 = vmatprep.subr.mxu0 0.0
        %1577 = vmatpush1.msra.mxu0 0.0
        %1578 = vmatprep.subr.mxu0 0.0
        %1579 = vmatpush1.msra.mxu0 0.0
        %1580 = vmatprep.subr.mxu0 0.0
        %1581 = vmatpush1.msra.mxu0 0.0
        %1582 = vmatprep.subr.mxu0 0.0
        %1583 = vmatpush1.msra.mxu0 0.0
        %1584 = vmatprep.subr.mxu0 0.0
        %1585 = vmatpush1.msra.mxu0 0.0
        %1586 = vmatprep.subr.mxu0 0.0
        %1587 = vmatpush1.msra.mxu0 0.0
        %1588 = vmatprep.subr.mxu0 0.0
        %1589 = vmatpush1.msra.mxu0 0.0
        %1590 = vmatprep.subr.mxu0 0.0
        %1591 = vmatpush1.msra.mxu0 0.0
        %1592 = vmatprep.subr.mxu0 0.0
        %1593 = vmatpush1.msra.mxu0 0.0
        %1594 = vmatprep.subr.mxu0 0.0
        %1595 = vmatpush1.msra.mxu0 0.0
        %1596 = vmatprep.subr.mxu0 0.0
        %1597 = vmatpush1.msra.mxu0 0.0
        %1598 = vmatprep.subr.mxu0 0.0
        %1599 = vmatpush1.msra.mxu0 0.0
        %1600 = vmatprep.subr.mxu0 0.0
        %1601 = vmatpush1.msra.mxu0 0.0
        %1602 = vmatprep.subr.mxu0 0.0
        %1603 = vmatpush1.msra.mxu0 0.0
        %1604 = vmatprep.subr.mxu0 0.0
        %1605 = vmatpush1.msra.mxu0 0.0
        %1606 = vmatprep.subr.mxu0 0.0
        %1607 = vmatpush1.msra.mxu0 0.0
        %1608 = vmatprep.subr.mxu0 0.0
        %1609 = vmatpush1.msra.mxu0 0.0
        %1610 = vmatprep.subr.mxu0 0.0
        %1611 = vmatpush1.msra.mxu0 0.0
        %1612 = vmatprep.subr.mxu0 0.0
        %1613 = vmatpush1.msra.mxu0 0.0
        %1614 = vmatprep.subr.mxu0 0.0
        %1615 = vmatpush1.msra.mxu0 0.0
        %1616 = vmatprep.subr.mxu0 0.0
        %1617 = vmatpush1.msra.mxu0 0.0
        %1618 = vmatprep.subr.mxu0 0.0
        %1619 = vmatpush1.msra.mxu0 0.0
        %1620 = vmatprep.mubr.f32.mxu0 0.0
        %1621 = vmatmul.mubr.f32.gmra.mrb[0].mxu0 %v1554
        %v1622 = vpop.f32.mrb[0].mxu0
        %v1623 = vadd.f32 %v1550, %v1622
        %v1624 = vpop.f32.mrb[0].mxu0
        %1625 = vdwg.mxu0
        %v1626 = vadd.f32 %v1623, %v1443
        %v1627 = vld [vmem:[%s14] sm:$0x1]
        %v1628 = vld [vmem:[%s15] sm:$0x1]
        %v1629 = vsel %vm533, %v1626, 0.0
        %1630 = vadd.xlane.f32.xlu0 %v1629
        %v1631 = vpop.xlane.xlu0 %1630
        %v1632 = vmul.f32 %v1631, %v537
        %v1633 = vsub.f32 %v1626, %v1632
        %v1634 = vmul.f32 %v1633, %v1633
        %v1635 = vsel %vm533, %v1634, 0.0
        %1636 = vadd.xlane.f32.xlu0 %v1635
        %v1637 = vpop.xlane.xlu0 %1636
        %v1638 = vmul.f32 %v1637, %v537
        %v1639 = vadd.f32 %v1638, 1e-12
        %v1640 = vrsqrt.pop %v1639
        %v1641 = vmul.f32 %v1633, %v1640
        %v1643 = vlaneseq
        %v1644 = vshrl.u32 %v1643, 7
        %v1645 = vsub.s32 0, %v1644
        %v1646 = vrot.slane %v1627, %v1645
        %v1648 = vmul.f32 %v1641, %v1646
        %v1650 = vlaneseq
        %v1651 = vshrl.u32 %v1650, 7
        %v1652 = vsub.s32 0, %v1651
        %v1653 = vrot.slane %v1628, %v1652
        %v1655 = vadd.f32 %v1648, %v1653
        %s1656 = scalar_lea.vmem %s4, 32
        %v1657 = vld [vmem:[%s1656] sm:$0xff]
        %v1658 = vld [vmem:[%s1656 + $0x8] sm:$0xff]
        %v1659 = vld [vmem:[%s1656 + $0x10] sm:$0xff]
        %v1660 = vld [vmem:[%s1656 + $0x18] sm:$0xff]
        %s1661 = scalar_lea.vmem %s5, 1
        %v1662 = vld [vmem:[%s1661] sm:$0x1]
        %v1664 = vlaneseq
        %v1665 = vshrl.u32 %v1664, 7
        %v1666 = vsub.s32 0, %v1665
        %v1667 = vrot.slane %v1662, %v1666
        %v1670 = vsel %vm533, %v1655, 0
        %1672 = vmatprep.subr.mxu0 0.0
        %1673 = vmatpush1.msra.mxu0 %v1657
        %1674 = vmatprep.subr.mxu0 0.0
        %1675 = vmatpush1.msra.mxu0 %v1658
        %1676 = vmatprep.subr.mxu0 0.0
        %1677 = vmatpush1.msra.mxu0 %v1659
        %1678 = vmatprep.subr.mxu0 0.0
        %1679 = vmatpush1.msra.mxu0 %v1660
        %1680 = vmatprep.subr.mxu0 0.0
        %1681 = vmatpush1.msra.mxu0 0.0
        %1682 = vmatprep.subr.mxu0 0.0
        %1683 = vmatpush1.msra.mxu0 0.0
        %1684 = vmatprep.subr.mxu0 0.0
        %1685 = vmatpush1.msra.mxu0 0.0
        %1686 = vmatprep.subr.mxu0 0.0
        %1687 = vmatpush1.msra.mxu0 0.0
        %1688 = vmatprep.subr.mxu0 0.0
        %1689 = vmatpush1.msra.mxu0 0.0
        %1690 = vmatprep.subr.mxu0 0.0
        %1691 = vmatpush1.msra.mxu0 0.0
        %1692 = vmatprep.subr.mxu0 0.0
        %1693 = vmatpush1.msra.mxu0 0.0
        %1694 = vmatprep.subr.mxu0 0.0
        %1695 = vmatpush1.msra.mxu0 0.0
        %1696 = vmatprep.subr.mxu0 0.0
        %1697 = vmatpush1.msra.mxu0 0.0
        %1698 = vmatprep.subr.mxu0 0.0
        %1699 = vmatpush1.msra.mxu0 0.0
        %1700 = vmatprep.subr.mxu0 0.0
        %1701 = vmatpush1.msra.mxu0 0.0
        %1702 = vmatprep.subr.mxu0 0.0
        %1703 = vmatpush1.msra.mxu0 0.0
        %1704 = vmatprep.subr.mxu0 0.0
        %1705 = vmatpush1.msra.mxu0 0.0
        %1706 = vmatprep.subr.mxu0 0.0
        %1707 = vmatpush1.msra.mxu0 0.0
        %1708 = vmatprep.subr.mxu0 0.0
        %1709 = vmatpush1.msra.mxu0 0.0
        %1710 = vmatprep.subr.mxu0 0.0
        %1711 = vmatpush1.msra.mxu0 0.0
        %1712 = vmatprep.subr.mxu0 0.0
        %1713 = vmatpush1.msra.mxu0 0.0
        %1714 = vmatprep.subr.mxu0 0.0
        %1715 = vmatpush1.msra.mxu0 0.0
        %1716 = vmatprep.subr.mxu0 0.0
        %1717 = vmatpush1.msra.mxu0 0.0
        %1718 = vmatprep.subr.mxu0 0.0
        %1719 = vmatpush1.msra.mxu0 0.0
        %1720 = vmatprep.subr.mxu0 0.0
        %1721 = vmatpush1.msra.mxu0 0.0
        %1722 = vmatprep.subr.mxu0 0.0
        %1723 = vmatpush1.msra.mxu0 0.0
        %1724 = vmatprep.subr.mxu0 0.0
        %1725 = vmatpush1.msra.mxu0 0.0
        %1726 = vmatprep.subr.mxu0 0.0
        %1727 = vmatpush1.msra.mxu0 0.0
        %1728 = vmatprep.subr.mxu0 0.0
        %1729 = vmatpush1.msra.mxu0 0.0
        %1730 = vmatprep.subr.mxu0 0.0
        %1731 = vmatpush1.msra.mxu0 0.0
        %1732 = vmatprep.subr.mxu0 0.0
        %1733 = vmatpush1.msra.mxu0 0.0
        %1734 = vmatprep.subr.mxu0 0.0
        %1735 = vmatpush1.msra.mxu0 0.0
        %1736 = vmatprep.mubr.f32.mxu0 0.0
        %1737 = vmatmul.mubr.f32.gmra.mrb[0].mxu0 %v1670
        %v1738 = vpop.f32.mrb[0].mxu0
        %v1739 = vadd.f32 %v1667, %v1738
        %v1740 = vpop.f32.mrb[0].mxu0
        %1741 = vdwg.mxu0
        %1743 = vrot.lane.b32.xlu0 %v1739, 96
        %v1744 = vpop.permute.xlu0 %1743
        %v1745 = vsel %vm656, %v1739, 0
        %v1747 = vsel %vm656, %v1744, 0
        %1749 = vmatprep.subr.mxu0 0.0
        %1750 = vmatpush1.xpose.msra.mxu0 %v1747
        %1751 = vmatprep.subr.mxu0 0.0
        %1752 = vmatpush1.xpose.msra.mxu0 0.0
        %1753 = vmatprep.subr.mxu0 0.0
        %1754 = vmatpush1.xpose.msra.mxu0 0.0
        %1755 = vmatprep.subr.mxu0 0.0
        %1756 = vmatpush1.xpose.msra.mxu0 0.0
        %1757 = vmatprep.subr.mxu0 0.0
        %1758 = vmatpush1.xpose.msra.mxu0 0.0
        %1759 = vmatprep.subr.mxu0 0.0
        %1760 = vmatpush1.xpose.msra.mxu0 0.0
        %1761 = vmatprep.subr.mxu0 0.0
        %1762 = vmatpush1.xpose.msra.mxu0 0.0
        %1763 = vmatprep.subr.mxu0 0.0
        %1764 = vmatpush1.xpose.msra.mxu0 0.0
        %1765 = vmatprep.subr.mxu0 0.0
        %1766 = vmatpush1.xpose.msra.mxu0 0.0
        %1767 = vmatprep.subr.mxu0 0.0
        %1768 = vmatpush1.xpose.msra.mxu0 0.0
        %1769 = vmatprep.subr.mxu0 0.0
        %1770 = vmatpush1.xpose.msra.mxu0 0.0
        %1771 = vmatprep.subr.mxu0 0.0
        %1772 = vmatpush1.xpose.msra.mxu0 0.0
        %1773 = vmatprep.subr.mxu0 0.0
        %1774 = vmatpush1.xpose.msra.mxu0 0.0
        %1775 = vmatprep.subr.mxu0 0.0
        %1776 = vmatpush1.xpose.msra.mxu0 0.0
        %1777 = vmatprep.subr.mxu0 0.0
        %1778 = vmatpush1.xpose.msra.mxu0 0.0
        %1779 = vmatprep.subr.mxu0 0.0
        %1780 = vmatpush1.xpose.msra.mxu0 0.0
        %1781 = vmatprep.subr.mxu0 0.0
        %1782 = vmatpush1.xpose.msra.mxu0 0.0
        %1783 = vmatprep.subr.mxu0 0.0
        %1784 = vmatpush1.xpose.msra.mxu0 0.0
        %1785 = vmatprep.subr.mxu0 0.0
        %1786 = vmatpush1.xpose.msra.mxu0 0.0
        %1787 = vmatprep.subr.mxu0 0.0
        %1788 = vmatpush1.xpose.msra.mxu0 0.0
        %1789 = vmatprep.subr.mxu0 0.0
        %1790 = vmatpush1.xpose.msra.mxu0 0.0
        %1791 = vmatprep.subr.mxu0 0.0
        %1792 = vmatpush1.xpose.msra.mxu0 0.0
        %1793 = vmatprep.subr.mxu0 0.0
        %1794 = vmatpush1.xpose.msra.mxu0 0.0
        %1795 = vmatprep.subr.mxu0 0.0
        %1796 = vmatpush1.xpose.msra.mxu0 0.0
        %1797 = vmatprep.subr.mxu0 0.0
        %1798 = vmatpush1.xpose.msra.mxu0 0.0
        %1799 = vmatprep.subr.mxu0 0.0
        %1800 = vmatpush1.xpose.msra.mxu0 0.0
        %1801 = vmatprep.subr.mxu0 0.0
        %1802 = vmatpush1.xpose.msra.mxu0 0.0
        %1803 = vmatprep.subr.mxu0 0.0
        %1804 = vmatpush1.xpose.msra.mxu0 0.0
        %1805 = vmatprep.subr.mxu0 0.0
        %1806 = vmatpush1.xpose.msra.mxu0 0.0
        %1807 = vmatprep.subr.mxu0 0.0
        %1808 = vmatpush1.xpose.msra.mxu0 0.0
        %1809 = vmatprep.subr.mxu0 0.0
        %1810 = vmatpush1.xpose.msra.mxu0 0.0
        %1811 = vmatprep.subr.mxu0 0.0
        %1812 = vmatpush1.xpose.msra.mxu0 0.0
        %1813 = vmatprep.mubr.f32.mxu0 0.0
        %1814 = vmatmul.mubr.f32.gmra.mrb[0].mxu0 %v1745
        %v1815 = vpop.f32.mrb[0].mxu0
        %v1816 = vadd.f32 %v651, %v1815
        %v1817 = vpop.f32.mrb[0].mxu0
        %1818 = vdwg.mxu0
        %v1819 = vsel %vm656, %v1816, -inf
        %1820 = vmax.xlane.f32.xlu0 %v1819
        %v1821 = vpop.xlane.xlu0 %1820
        %v1822 = vsub.f32 %v1816, %v1821
        %v1823 = vmul.f32 %v1822, 1.442695
        %v1824 = vpow.pop %v1823
        %v1825 = vsel %vm656, %v1824, 0.0
        %1826 = vadd.xlane.f32.xlu0 %v1825
        %v1827 = vpop.xlane.xlu0 %1826
        %v1828 = vrcp.pop %v1827
        %v1829 = vmul.f32 %v1824, %v1828
        %1830 = vrot.lane.b32.xlu0 %v1739, 64
        %v1831 = vpop.permute.xlu0 %1830
        %v1834 = vsel %vm656, %v1829, 0
        %1836 = vmatprep.subr.mxu0 0.0
        %1837 = vmatpush1.msra.mxu0 %v1831
        %1838 = vmatprep.subr.mxu0 0.0
        %1839 = vmatpush1.msra.mxu0 0.0
        %1840 = vmatprep.subr.mxu0 0.0
        %1841 = vmatpush1.msra.mxu0 0.0
        %1842 = vmatprep.subr.mxu0 0.0
        %1843 = vmatpush1.msra.mxu0 0.0
        %1844 = vmatprep.subr.mxu0 0.0
        %1845 = vmatpush1.msra.mxu0 0.0
        %1846 = vmatprep.subr.mxu0 0.0
        %1847 = vmatpush1.msra.mxu0 0.0
        %1848 = vmatprep.subr.mxu0 0.0
        %1849 = vmatpush1.msra.mxu0 0.0
        %1850 = vmatprep.subr.mxu0 0.0
        %1851 = vmatpush1.msra.mxu0 0.0
        %1852 = vmatprep.subr.mxu0 0.0
        %1853 = vmatpush1.msra.mxu0 0.0
        %1854 = vmatprep.subr.mxu0 0.0
        %1855 = vmatpush1.msra.mxu0 0.0
        %1856 = vmatprep.subr.mxu0 0.0
        %1857 = vmatpush1.msra.mxu0 0.0
        %1858 = vmatprep.subr.mxu0 0.0
        %1859 = vmatpush1.msra.mxu0 0.0
        %1860 = vmatprep.subr.mxu0 0.0
        %1861 = vmatpush1.msra.mxu0 0.0
        %1862 = vmatprep.subr.mxu0 0.0
        %1863 = vmatpush1.msra.mxu0 0.0
        %1864 = vmatprep.subr.mxu0 0.0
        %1865 = vmatpush1.msra.mxu0 0.0
        %1866 = vmatprep.subr.mxu0 0.0
        %1867 = vmatpush1.msra.mxu0 0.0
        %1868 = vmatprep.subr.mxu0 0.0
        %1869 = vmatpush1.msra.mxu0 0.0
        %1870 = vmatprep.subr.mxu0 0.0
        %1871 = vmatpush1.msra.mxu0 0.0
        %1872 = vmatprep.subr.mxu0 0.0
        %1873 = vmatpush1.msra.mxu0 0.0
        %1874 = vmatprep.subr.mxu0 0.0
        %1875 = vmatpush1.msra.mxu0 0.0
        %1876 = vmatprep.subr.mxu0 0.0
        %1877 = vmatpush1.msra.mxu0 0.0
        %1878 = vmatprep.subr.mxu0 0.0
        %1879 = vmatpush1.msra.mxu0 0.0
        %1880 = vmatprep.subr.mxu0 0.0
        %1881 = vmatpush1.msra.mxu0 0.0
        %1882 = vmatprep.subr.mxu0 0.0
        %1883 = vmatpush1.msra.mxu0 0.0
        %1884 = vmatprep.subr.mxu0 0.0
        %1885 = vmatpush1.msra.mxu0 0.0
        %1886 = vmatprep.subr.mxu0 0.0
        %1887 = vmatpush1.msra.mxu0 0.0
        %1888 = vmatprep.subr.mxu0 0.0
        %1889 = vmatpush1.msra.mxu0 0.0
        %1890 = vmatprep.subr.mxu0 0.0
        %1891 = vmatpush1.msra.mxu0 0.0
        %1892 = vmatprep.subr.mxu0 0.0
        %1893 = vmatpush1.msra.mxu0 0.0
        %1894 = vmatprep.subr.mxu0 0.0
        %1895 = vmatpush1.msra.mxu0 0.0
        %1896 = vmatprep.subr.mxu0 0.0
        %1897 = vmatpush1.msra.mxu0 0.0
        %1898 = vmatprep.subr.mxu0 0.0
        %1899 = vmatpush1.msra.mxu0 0.0
        %1900 = vmatprep.mubr.f32.mxu0 0.0
        %1901 = vmatmul.mubr.f32.gmra.mrb[0].mxu0 %v1834
        %v1902 = vpop.f32.mrb[0].mxu0
        %v1903 = vadd.f32 0.0, %v1902
        %v1904 = vpop.f32.mrb[0].mxu0
        %1905 = vdwg.mxu0
        %1906 = vrot.lane.b32.xlu0 %v1739, 120
        %v1907 = vpop.permute.xlu0 %1906
        %1908 = vrot.lane.b32.xlu0 %v1739, 88
        %v1909 = vpop.permute.xlu0 %1908
        %v1910 = vsel %vm656, %v1907, 0
        %v1912 = vsel %vm656, %v1909, 0
        %1914 = vmatprep.subr.mxu0 0.0
        %1915 = vmatpush1.xpose.msra.mxu0 %v1912
        %1916 = vmatprep.subr.mxu0 0.0
        %1917 = vmatpush1.xpose.msra.mxu0 0.0
        %1918 = vmatprep.subr.mxu0 0.0
        %1919 = vmatpush1.xpose.msra.mxu0 0.0
        %1920 = vmatprep.subr.mxu0 0.0
        %1921 = vmatpush1.xpose.msra.mxu0 0.0
        %1922 = vmatprep.subr.mxu0 0.0
        %1923 = vmatpush1.xpose.msra.mxu0 0.0
        %1924 = vmatprep.subr.mxu0 0.0
        %1925 = vmatpush1.xpose.msra.mxu0 0.0
        %1926 = vmatprep.subr.mxu0 0.0
        %1927 = vmatpush1.xpose.msra.mxu0 0.0
        %1928 = vmatprep.subr.mxu0 0.0
        %1929 = vmatpush1.xpose.msra.mxu0 0.0
        %1930 = vmatprep.subr.mxu0 0.0
        %1931 = vmatpush1.xpose.msra.mxu0 0.0
        %1932 = vmatprep.subr.mxu0 0.0
        %1933 = vmatpush1.xpose.msra.mxu0 0.0
        %1934 = vmatprep.subr.mxu0 0.0
        %1935 = vmatpush1.xpose.msra.mxu0 0.0
        %1936 = vmatprep.subr.mxu0 0.0
        %1937 = vmatpush1.xpose.msra.mxu0 0.0
        %1938 = vmatprep.subr.mxu0 0.0
        %1939 = vmatpush1.xpose.msra.mxu0 0.0
        %1940 = vmatprep.subr.mxu0 0.0
        %1941 = vmatpush1.xpose.msra.mxu0 0.0
        %1942 = vmatprep.subr.mxu0 0.0
        %1943 = vmatpush1.xpose.msra.mxu0 0.0
        %1944 = vmatprep.subr.mxu0 0.0
        %1945 = vmatpush1.xpose.msra.mxu0 0.0
        %1946 = vmatprep.subr.mxu0 0.0
        %1947 = vmatpush1.xpose.msra.mxu0 0.0
        %1948 = vmatprep.subr.mxu0 0.0
        %1949 = vmatpush1.xpose.msra.mxu0 0.0
        %1950 = vmatprep.subr.mxu0 0.0
        %1951 = vmatpush1.xpose.msra.mxu0 0.0
        %1952 = vmatprep.subr.mxu0 0.0
        %1953 = vmatpush1.xpose.msra.mxu0 0.0
        %1954 = vmatprep.subr.mxu0 0.0
        %1955 = vmatpush1.xpose.msra.mxu0 0.0
        %1956 = vmatprep.subr.mxu0 0.0
        %1957 = vmatpush1.xpose.msra.mxu0 0.0
        %1958 = vmatprep.subr.mxu0 0.0
        %1959 = vmatpush1.xpose.msra.mxu0 0.0
        %1960 = vmatprep.subr.mxu0 0.0
        %1961 = vmatpush1.xpose.msra.mxu0 0.0
        %1962 = vmatprep.subr.mxu0 0.0
        %1963 = vmatpush1.xpose.msra.mxu0 0.0
        %1964 = vmatprep.subr.mxu0 0.0
        %1965 = vmatpush1.xpose.msra.mxu0 0.0
        %1966 = vmatprep.subr.mxu0 0.0
        %1967 = vmatpush1.xpose.msra.mxu0 0.0
        %1968 = vmatprep.subr.mxu0 0.0
        %1969 = vmatpush1.xpose.msra.mxu0 0.0
        %1970 = vmatprep.subr.mxu0 0.0
        %1971 = vmatpush1.xpose.msra.mxu0 0.0
        %1972 = vmatprep.subr.mxu0 0.0
        %1973 = vmatpush1.xpose.msra.mxu0 0.0
        %1974 = vmatprep.subr.mxu0 0.0
        %1975 = vmatpush1.xpose.msra.mxu0 0.0
        %1976 = vmatprep.subr.mxu0 0.0
        %1977 = vmatpush1.xpose.msra.mxu0 0.0
        %1978 = vmatprep.mubr.f32.mxu0 0.0
        %1979 = vmatmul.mubr.f32.gmra.mrb[0].mxu0 %v1910
        %v1980 = vpop.f32.mrb[0].mxu0
        %v1981 = vadd.f32 %v651, %v1980
        %v1982 = vpop.f32.mrb[0].mxu0
        %1983 = vdwg.mxu0
        %v1984 = vsel %vm656, %v1981, -inf
        %1985 = vmax.xlane.f32.xlu0 %v1984
        %v1986 = vpop.xlane.xlu0 %1985
        %v1987 = vsub.f32 %v1981, %v1986
        %v1988 = vmul.f32 %v1987, 1.442695
        %v1989 = vpow.pop %v1988
        %v1990 = vsel %vm656, %v1989, 0.0
        %1991 = vadd.xlane.f32.xlu0 %v1990
        %v1992 = vpop.xlane.xlu0 %1991
        %v1993 = vrcp.pop %v1992
        %v1994 = vmul.f32 %v1989, %v1993
        %1995 = vrot.lane.b32.xlu0 %v1739, 56
        %v1996 = vpop.permute.xlu0 %1995
        %v1999 = vsel %vm656, %v1994, 0
        %2001 = vmatprep.subr.mxu0 0.0
        %2002 = vmatpush1.msra.mxu0 %v1996
        %2003 = vmatprep.subr.mxu0 0.0
        %2004 = vmatpush1.msra.mxu0 0.0
        %2005 = vmatprep.subr.mxu0 0.0
        %2006 = vmatpush1.msra.mxu0 0.0
        %2007 = vmatprep.subr.mxu0 0.0
        %2008 = vmatpush1.msra.mxu0 0.0
        %2009 = vmatprep.subr.mxu0 0.0
        %2010 = vmatpush1.msra.mxu0 0.0
        %2011 = vmatprep.subr.mxu0 0.0
        %2012 = vmatpush1.msra.mxu0 0.0
        %2013 = vmatprep.subr.mxu0 0.0
        %2014 = vmatpush1.msra.mxu0 0.0
        %2015 = vmatprep.subr.mxu0 0.0
        %2016 = vmatpush1.msra.mxu0 0.0
        %2017 = vmatprep.subr.mxu0 0.0
        %2018 = vmatpush1.msra.mxu0 0.0
        %2019 = vmatprep.subr.mxu0 0.0
        %2020 = vmatpush1.msra.mxu0 0.0
        %2021 = vmatprep.subr.mxu0 0.0
        %2022 = vmatpush1.msra.mxu0 0.0
        %2023 = vmatprep.subr.mxu0 0.0
        %2024 = vmatpush1.msra.mxu0 0.0
        %2025 = vmatprep.subr.mxu0 0.0
        %2026 = vmatpush1.msra.mxu0 0.0
        %2027 = vmatprep.subr.mxu0 0.0
        %2028 = vmatpush1.msra.mxu0 0.0
        %2029 = vmatprep.subr.mxu0 0.0
        %2030 = vmatpush1.msra.mxu0 0.0
        %2031 = vmatprep.subr.mxu0 0.0
        %2032 = vmatpush1.msra.mxu0 0.0
        %2033 = vmatprep.subr.mxu0 0.0
        %2034 = vmatpush1.msra.mxu0 0.0
        %2035 = vmatprep.subr.mxu0 0.0
        %2036 = vmatpush1.msra.mxu0 0.0
        %2037 = vmatprep.subr.mxu0 0.0
        %2038 = vmatpush1.msra.mxu0 0.0
        %2039 = vmatprep.subr.mxu0 0.0
        %2040 = vmatpush1.msra.mxu0 0.0
        %2041 = vmatprep.subr.mxu0 0.0
        %2042 = vmatpush1.msra.mxu0 0.0
        %2043 = vmatprep.subr.mxu0 0.0
        %2044 = vmatpush1.msra.mxu0 0.0
        %2045 = vmatprep.subr.mxu0 0.0
        %2046 = vmatpush1.msra.mxu0 0.0
        %2047 = vmatprep.subr.mxu0 0.0
        %2048 = vmatpush1.msra.mxu0 0.0
        %2049 = vmatprep.subr.mxu0 0.0
        %2050 = vmatpush1.msra.mxu0 0.0
        %2051 = vmatprep.subr.mxu0 0.0
        %2052 = vmatpush1.msra.mxu0 0.0
        %2053 = vmatprep.subr.mxu0 0.0
        %2054 = vmatpush1.msra.mxu0 0.0
        %2055 = vmatprep.subr.mxu0 0.0
        %2056 = vmatpush1.msra.mxu0 0.0
        %2057 = vmatprep.subr.mxu0 0.0
        %2058 = vmatpush1.msra.mxu0 0.0
        %2059 = vmatprep.subr.mxu0 0.0
        %2060 = vmatpush1.msra.mxu0 0.0
        %2061 = vmatprep.subr.mxu0 0.0
        %2062 = vmatpush1.msra.mxu0 0.0
        %2063 = vmatprep.subr.mxu0 0.0
        %2064 = vmatpush1.msra.mxu0 0.0
        %2065 = vmatprep.mubr.f32.mxu0 0.0
        %2066 = vmatmul.mubr.f32.gmra.mrb[0].mxu0 %v1999
        %v2067 = vpop.f32.mrb[0].mxu0
        %v2068 = vadd.f32 0.0, %v2067
        %v2069 = vpop.f32.mrb[0].mxu0
        %2070 = vdwg.mxu0
        %2071 = vrot.lane.b32.xlu0 %v1739, 112
        %v2072 = vpop.permute.xlu0 %2071
        %2073 = vrot.lane.b32.xlu0 %v1739, 80
        %v2074 = vpop.permute.xlu0 %2073
        %v2075 = vsel %vm656, %v2072, 0
        %v2077 = vsel %vm656, %v2074, 0
        %2079 = vmatprep.subr.mxu0 0.0
        %2080 = vmatpush1.xpose.msra.mxu0 %v2077
        %2081 = vmatprep.subr.mxu0 0.0
        %2082 = vmatpush1.xpose.msra.mxu0 0.0
        %2083 = vmatprep.subr.mxu0 0.0
        %2084 = vmatpush1.xpose.msra.mxu0 0.0
        %2085 = vmatprep.subr.mxu0 0.0
        %2086 = vmatpush1.xpose.msra.mxu0 0.0
        %2087 = vmatprep.subr.mxu0 0.0
        %2088 = vmatpush1.xpose.msra.mxu0 0.0
        %2089 = vmatprep.subr.mxu0 0.0
        %2090 = vmatpush1.xpose.msra.mxu0 0.0
        %2091 = vmatprep.subr.mxu0 0.0
        %2092 = vmatpush1.xpose.msra.mxu0 0.0
        %2093 = vmatprep.subr.mxu0 0.0
        %2094 = vmatpush1.xpose.msra.mxu0 0.0
        %2095 = vmatprep.subr.mxu0 0.0
        %2096 = vmatpush1.xpose.msra.mxu0 0.0
        %2097 = vmatprep.subr.mxu0 0.0
        %2098 = vmatpush1.xpose.msra.mxu0 0.0
        %2099 = vmatprep.subr.mxu0 0.0
        %2100 = vmatpush1.xpose.msra.mxu0 0.0
        %2101 = vmatprep.subr.mxu0 0.0
        %2102 = vmatpush1.xpose.msra.mxu0 0.0
        %2103 = vmatprep.subr.mxu0 0.0
        %2104 = vmatpush1.xpose.msra.mxu0 0.0
        %2105 = vmatprep.subr.mxu0 0.0
        %2106 = vmatpush1.xpose.msra.mxu0 0.0
        %2107 = vmatprep.subr.mxu0 0.0
        %2108 = vmatpush1.xpose.msra.mxu0 0.0
        %2109 = vmatprep.subr.mxu0 0.0
        %2110 = vmatpush1.xpose.msra.mxu0 0.0
        %2111 = vmatprep.subr.mxu0 0.0
        %2112 = vmatpush1.xpose.msra.mxu0 0.0
        %2113 = vmatprep.subr.mxu0 0.0
        %2114 = vmatpush1.xpose.msra.mxu0 0.0
        %2115 = vmatprep.subr.mxu0 0.0
        %2116 = vmatpush1.xpose.msra.mxu0 0.0
        %2117 = vmatprep.subr.mxu0 0.0
        %2118 = vmatpush1.xpose.msra.mxu0 0.0
        %2119 = vmatprep.subr.mxu0 0.0
        %2120 = vmatpush1.xpose.msra.mxu0 0.0
        %2121 = vmatprep.subr.mxu0 0.0
        %2122 = vmatpush1.xpose.msra.mxu0 0.0
        %2123 = vmatprep.subr.mxu0 0.0
        %2124 = vmatpush1.xpose.msra.mxu0 0.0
        %2125 = vmatprep.subr.mxu0 0.0
        %2126 = vmatpush1.xpose.msra.mxu0 0.0
        %2127 = vmatprep.subr.mxu0 0.0
        %2128 = vmatpush1.xpose.msra.mxu0 0.0
        %2129 = vmatprep.subr.mxu0 0.0
        %2130 = vmatpush1.xpose.msra.mxu0 0.0
        %2131 = vmatprep.subr.mxu0 0.0
        %2132 = vmatpush1.xpose.msra.mxu0 0.0
        %2133 = vmatprep.subr.mxu0 0.0
        %2134 = vmatpush1.xpose.msra.mxu0 0.0
        %2135 = vmatprep.subr.mxu0 0.0
        %2136 = vmatpush1.xpose.msra.mxu0 0.0
        %2137 = vmatprep.subr.mxu0 0.0
        %2138 = vmatpush1.xpose.msra.mxu0 0.0
        %2139 = vmatprep.subr.mxu0 0.0
        %2140 = vmatpush1.xpose.msra.mxu0 0.0
        %2141 = vmatprep.subr.mxu0 0.0
        %2142 = vmatpush1.xpose.msra.mxu0 0.0
        %2143 = vmatprep.mubr.f32.mxu0 0.0
        %2144 = vmatmul.mubr.f32.gmra.mrb[0].mxu0 %v2075
        %v2145 = vpop.f32.mrb[0].mxu0
        %v2146 = vadd.f32 %v651, %v2145
        %v2147 = vpop.f32.mrb[0].mxu0
        %2148 = vdwg.mxu0
        %v2149 = vsel %vm656, %v2146, -inf
        %2150 = vmax.xlane.f32.xlu0 %v2149
        %v2151 = vpop.xlane.xlu0 %2150
        %v2152 = vsub.f32 %v2146, %v2151
        %v2153 = vmul.f32 %v2152, 1.442695
        %v2154 = vpow.pop %v2153
        %v2155 = vsel %vm656, %v2154, 0.0
        %2156 = vadd.xlane.f32.xlu0 %v2155
        %v2157 = vpop.xlane.xlu0 %2156
        %v2158 = vrcp.pop %v2157
        %v2159 = vmul.f32 %v2154, %v2158
        %2160 = vrot.lane.b32.xlu0 %v1739, 48
        %v2161 = vpop.permute.xlu0 %2160
        %v2164 = vsel %vm656, %v2159, 0
        %2166 = vmatprep.subr.mxu0 0.0
        %2167 = vmatpush1.msra.mxu0 %v2161
        %2168 = vmatprep.subr.mxu0 0.0
        %2169 = vmatpush1.msra.mxu0 0.0
        %2170 = vmatprep.subr.mxu0 0.0
        %2171 = vmatpush1.msra.mxu0 0.0
        %2172 = vmatprep.subr.mxu0 0.0
        %2173 = vmatpush1.msra.mxu0 0.0
        %2174 = vmatprep.subr.mxu0 0.0
        %2175 = vmatpush1.msra.mxu0 0.0
        %2176 = vmatprep.subr.mxu0 0.0
        %2177 = vmatpush1.msra.mxu0 0.0
        %2178 = vmatprep.subr.mxu0 0.0
        %2179 = vmatpush1.msra.mxu0 0.0
        %2180 = vmatprep.subr.mxu0 0.0
        %2181 = vmatpush1.msra.mxu0 0.0
        %2182 = vmatprep.subr.mxu0 0.0
        %2183 = vmatpush1.msra.mxu0 0.0
        %2184 = vmatprep.subr.mxu0 0.0
        %2185 = vmatpush1.msra.mxu0 0.0
        %2186 = vmatprep.subr.mxu0 0.0
        %2187 = vmatpush1.msra.mxu0 0.0
        %2188 = vmatprep.subr.mxu0 0.0
        %2189 = vmatpush1.msra.mxu0 0.0
        %2190 = vmatprep.subr.mxu0 0.0
        %2191 = vmatpush1.msra.mxu0 0.0
        %2192 = vmatprep.subr.mxu0 0.0
        %2193 = vmatpush1.msra.mxu0 0.0
        %2194 = vmatprep.subr.mxu0 0.0
        %2195 = vmatpush1.msra.mxu0 0.0
        %2196 = vmatprep.subr.mxu0 0.0
        %2197 = vmatpush1.msra.mxu0 0.0
        %2198 = vmatprep.subr.mxu0 0.0
        %2199 = vmatpush1.msra.mxu0 0.0
        %2200 = vmatprep.subr.mxu0 0.0
        %2201 = vmatpush1.msra.mxu0 0.0
        %2202 = vmatprep.subr.mxu0 0.0
        %2203 = vmatpush1.msra.mxu0 0.0
        %2204 = vmatprep.subr.mxu0 0.0
        %2205 = vmatpush1.msra.mxu0 0.0
        %2206 = vmatprep.subr.mxu0 0.0
        %2207 = vmatpush1.msra.mxu0 0.0
        %2208 = vmatprep.subr.mxu0 0.0
        %2209 = vmatpush1.msra.mxu0 0.0
        %2210 = vmatprep.subr.mxu0 0.0
        %2211 = vmatpush1.msra.mxu0 0.0
        %2212 = vmatprep.subr.mxu0 0.0
        %2213 = vmatpush1.msra.mxu0 0.0
        %2214 = vmatprep.subr.mxu0 0.0
        %2215 = vmatpush1.msra.mxu0 0.0
        %2216 = vmatprep.subr.mxu0 0.0
        %2217 = vmatpush1.msra.mxu0 0.0
        %2218 = vmatprep.subr.mxu0 0.0
        %2219 = vmatpush1.msra.mxu0 0.0
        %2220 = vmatprep.subr.mxu0 0.0
        %2221 = vmatpush1.msra.mxu0 0.0
        %2222 = vmatprep.subr.mxu0 0.0
        %2223 = vmatpush1.msra.mxu0 0.0
        %2224 = vmatprep.subr.mxu0 0.0
        %2225 = vmatpush1.msra.mxu0 0.0
        %2226 = vmatprep.subr.mxu0 0.0
        %2227 = vmatpush1.msra.mxu0 0.0
        %2228 = vmatprep.subr.mxu0 0.0
        %2229 = vmatpush1.msra.mxu0 0.0
        %2230 = vmatprep.mubr.f32.mxu0 0.0
        %2231 = vmatmul.mubr.f32.gmra.mrb[0].mxu0 %v2164
        %v2232 = vpop.f32.mrb[0].mxu0
        %v2233 = vadd.f32 0.0, %v2232
        %v2234 = vpop.f32.mrb[0].mxu0
        %2235 = vdwg.mxu0
        %2236 = vrot.lane.b32.xlu0 %v1739, 104
        %v2237 = vpop.permute.xlu0 %2236
        %2238 = vrot.lane.b32.xlu0 %v1739, 72
        %v2239 = vpop.permute.xlu0 %2238
        %v2240 = vsel %vm656, %v2237, 0
        %v2242 = vsel %vm656, %v2239, 0
        %2244 = vmatprep.subr.mxu0 0.0
        %2245 = vmatpush1.xpose.msra.mxu0 %v2242
        %2246 = vmatprep.subr.mxu0 0.0
        %2247 = vmatpush1.xpose.msra.mxu0 0.0
        %2248 = vmatprep.subr.mxu0 0.0
        %2249 = vmatpush1.xpose.msra.mxu0 0.0
        %2250 = vmatprep.subr.mxu0 0.0
        %2251 = vmatpush1.xpose.msra.mxu0 0.0
        %2252 = vmatprep.subr.mxu0 0.0
        %2253 = vmatpush1.xpose.msra.mxu0 0.0
        %2254 = vmatprep.subr.mxu0 0.0
        %2255 = vmatpush1.xpose.msra.mxu0 0.0
        %2256 = vmatprep.subr.mxu0 0.0
        %2257 = vmatpush1.xpose.msra.mxu0 0.0
        %2258 = vmatprep.subr.mxu0 0.0
        %2259 = vmatpush1.xpose.msra.mxu0 0.0
        %2260 = vmatprep.subr.mxu0 0.0
        %2261 = vmatpush1.xpose.msra.mxu0 0.0
        %2262 = vmatprep.subr.mxu0 0.0
        %2263 = vmatpush1.xpose.msra.mxu0 0.0
        %2264 = vmatprep.subr.mxu0 0.0
        %2265 = vmatpush1.xpose.msra.mxu0 0.0
        %2266 = vmatprep.subr.mxu0 0.0
        %2267 = vmatpush1.xpose.msra.mxu0 0.0
        %2268 = vmatprep.subr.mxu0 0.0
        %2269 = vmatpush1.xpose.msra.mxu0 0.0
        %2270 = vmatprep.subr.mxu0 0.0
        %2271 = vmatpush1.xpose.msra.mxu0 0.0
        %2272 = vmatprep.subr.mxu0 0.0
        %2273 = vmatpush1.xpose.msra.mxu0 0.0
        %2274 = vmatprep.subr.mxu0 0.0
        %2275 = vmatpush1.xpose.msra.mxu0 0.0
        %2276 = vmatprep.subr.mxu0 0.0
        %2277 = vmatpush1.xpose.msra.mxu0 0.0
        %2278 = vmatprep.subr.mxu0 0.0
        %2279 = vmatpush1.xpose.msra.mxu0 0.0
        %2280 = vmatprep.subr.mxu0 0.0
        %2281 = vmatpush1.xpose.msra.mxu0 0.0
        %2282 = vmatprep.subr.mxu0 0.0
        %2283 = vmatpush1.xpose.msra.mxu0 0.0
        %2284 = vmatprep.subr.mxu0 0.0
        %2285 = vmatpush1.xpose.msra.mxu0 0.0
        %2286 = vmatprep.subr.mxu0 0.0
        %2287 = vmatpush1.xpose.msra.mxu0 0.0
        %2288 = vmatprep.subr.mxu0 0.0
        %2289 = vmatpush1.xpose.msra.mxu0 0.0
        %2290 = vmatprep.subr.mxu0 0.0
        %2291 = vmatpush1.xpose.msra.mxu0 0.0
        %2292 = vmatprep.subr.mxu0 0.0
        %2293 = vmatpush1.xpose.msra.mxu0 0.0
        %2294 = vmatprep.subr.mxu0 0.0
        %2295 = vmatpush1.xpose.msra.mxu0 0.0
        %2296 = vmatprep.subr.mxu0 0.0
        %2297 = vmatpush1.xpose.msra.mxu0 0.0
        %2298 = vmatprep.subr.mxu0 0.0
        %2299 = vmatpush1.xpose.msra.mxu0 0.0
        %2300 = vmatprep.subr.mxu0 0.0
        %2301 = vmatpush1.xpose.msra.mxu0 0.0
        %2302 = vmatprep.subr.mxu0 0.0
        %2303 = vmatpush1.xpose.msra.mxu0 0.0
        %2304 = vmatprep.subr.mxu0 0.0
        %2305 = vmatpush1.xpose.msra.mxu0 0.0
        %2306 = vmatprep.subr.mxu0 0.0
        %2307 = vmatpush1.xpose.msra.mxu0 0.0
        %2308 = vmatprep.mubr.f32.mxu0 0.0
        %2309 = vmatmul.mubr.f32.gmra.mrb[0].mxu0 %v2240
        %v2310 = vpop.f32.mrb[0].mxu0
        %v2311 = vadd.f32 %v651, %v2310
        %v2312 = vpop.f32.mrb[0].mxu0
        %2313 = vdwg.mxu0
        %v2314 = vsel %vm656, %v2311, -inf
        %2315 = vmax.xlane.f32.xlu0 %v2314
        %v2316 = vpop.xlane.xlu0 %2315
        %v2317 = vsub.f32 %v2311, %v2316
        %v2318 = vmul.f32 %v2317, 1.442695
        %v2319 = vpow.pop %v2318
        %v2320 = vsel %vm656, %v2319, 0.0
        %2321 = vadd.xlane.f32.xlu0 %v2320
        %v2322 = vpop.xlane.xlu0 %2321
        %v2323 = vrcp.pop %v2322
        %v2324 = vmul.f32 %v2319, %v2323
        %2325 = vrot.lane.b32.xlu0 %v1739, 40
        %v2326 = vpop.permute.xlu0 %2325
        %v2329 = vsel %vm656, %v2324, 0
        %2331 = vmatprep.subr.mxu0 0.0
        %2332 = vmatpush1.msra.mxu0 %v2326
        %2333 = vmatprep.subr.mxu0 0.0
        %2334 = vmatpush1.msra.mxu0 0.0
        %2335 = vmatprep.subr.mxu0 0.0
        %2336 = vmatpush1.msra.mxu0 0.0
        %2337 = vmatprep.subr.mxu0 0.0
        %2338 = vmatpush1.msra.mxu0 0.0
        %2339 = vmatprep.subr.mxu0 0.0
        %2340 = vmatpush1.msra.mxu0 0.0
        %2341 = vmatprep.subr.mxu0 0.0
        %2342 = vmatpush1.msra.mxu0 0.0
        %2343 = vmatprep.subr.mxu0 0.0
        %2344 = vmatpush1.msra.mxu0 0.0
        %2345 = vmatprep.subr.mxu0 0.0
        %2346 = vmatpush1.msra.mxu0 0.0
        %2347 = vmatprep.subr.mxu0 0.0
        %2348 = vmatpush1.msra.mxu0 0.0
        %2349 = vmatprep.subr.mxu0 0.0
        %2350 = vmatpush1.msra.mxu0 0.0
        %2351 = vmatprep.subr.mxu0 0.0
        %2352 = vmatpush1.msra.mxu0 0.0
        %2353 = vmatprep.subr.mxu0 0.0
        %2354 = vmatpush1.msra.mxu0 0.0
        %2355 = vmatprep.subr.mxu0 0.0
        %2356 = vmatpush1.msra.mxu0 0.0
        %2357 = vmatprep.subr.mxu0 0.0
        %2358 = vmatpush1.msra.mxu0 0.0
        %2359 = vmatprep.subr.mxu0 0.0
        %2360 = vmatpush1.msra.mxu0 0.0
        %2361 = vmatprep.subr.mxu0 0.0
        %2362 = vmatpush1.msra.mxu0 0.0
        %2363 = vmatprep.subr.mxu0 0.0
        %2364 = vmatpush1.msra.mxu0 0.0
        %2365 = vmatprep.subr.mxu0 0.0
        %2366 = vmatpush1.msra.mxu0 0.0
        %2367 = vmatprep.subr.mxu0 0.0
        %2368 = vmatpush1.msra.mxu0 0.0
        %2369 = vmatprep.subr.mxu0 0.0
        %2370 = vmatpush1.msra.mxu0 0.0
        %2371 = vmatprep.subr.mxu0 0.0
        %2372 = vmatpush1.msra.mxu0 0.0
        %2373 = vmatprep.subr.mxu0 0.0
        %2374 = vmatpush1.msra.mxu0 0.0
        %2375 = vmatprep.subr.mxu0 0.0
        %2376 = vmatpush1.msra.mxu0 0.0
        %2377 = vmatprep.subr.mxu0 0.0
        %2378 = vmatpush1.msra.mxu0 0.0
        %2379 = vmatprep.subr.mxu0 0.0
        %2380 = vmatpush1.msra.mxu0 0.0
        %2381 = vmatprep.subr.mxu0 0.0
        %2382 = vmatpush1.msra.mxu0 0.0
        %2383 = vmatprep.subr.mxu0 0.0
        %2384 = vmatpush1.msra.mxu0 0.0
        %2385 = vmatprep.subr.mxu0 0.0
        %2386 = vmatpush1.msra.mxu0 0.0
        %2387 = vmatprep.subr.mxu0 0.0
        %2388 = vmatpush1.msra.mxu0 0.0
        %2389 = vmatprep.subr.mxu0 0.0
        %2390 = vmatpush1.msra.mxu0 0.0
        %2391 = vmatprep.subr.mxu0 0.0
        %2392 = vmatpush1.msra.mxu0 0.0
        %2393 = vmatprep.subr.mxu0 0.0
        %2394 = vmatpush1.msra.mxu0 0.0
        %2395 = vmatprep.mubr.f32.mxu0 0.0
        %2396 = vmatmul.mubr.f32.gmra.mrb[0].mxu0 %v2329
        %v2397 = vpop.f32.mrb[0].mxu0
        %v2398 = vadd.f32 0.0, %v2397
        %v2399 = vpop.f32.mrb[0].mxu0
        %2400 = vdwg.mxu0
        %2402 = vrot.lane.b32.xlu0 %v2068, 8
        %v2403 = vpop.permute.xlu0 %2402
        %2406 = vrot.lane.b32.xlu0 %v2233, 16
        %v2407 = vpop.permute.xlu0 %2406
        %2410 = vrot.lane.b32.xlu0 %v2398, 24
        %v2411 = vpop.permute.xlu0 %2410
        %v2413 = vsel %vm656, %v1903, %v2403
        %v2414 = vsel %vm1326, %v2413, %v2407
        %v2415 = vsel %vm1328, %v2414, %v2411
        %s2416 = scalar_lea.vmem %s6, 32
        %v2417 = vld [vmem:[%s2416] sm:$0xff]
        %v2418 = vld [vmem:[%s2416 + $0x8] sm:$0xff]
        %v2419 = vld [vmem:[%s2416 + $0x10] sm:$0xff]
        %v2420 = vld [vmem:[%s2416 + $0x18] sm:$0xff]
        %s2421 = scalar_lea.vmem %s7, 1
        %v2422 = vld [vmem:[%s2421] sm:$0x1]
        %v2424 = vlaneseq
        %v2425 = vshrl.u32 %v2424, 7
        %v2426 = vsub.s32 0, %v2425
        %v2427 = vrot.slane %v2422, %v2426
        %v2430 = vsel %vm533, %v2415, 0
        %2432 = vmatprep.subr.mxu0 0.0
        %2433 = vmatpush1.msra.mxu0 %v2417
        %2434 = vmatprep.subr.mxu0 0.0
        %2435 = vmatpush1.msra.mxu0 %v2418
        %2436 = vmatprep.subr.mxu0 0.0
        %2437 = vmatpush1.msra.mxu0 %v2419
        %2438 = vmatprep.subr.mxu0 0.0
        %2439 = vmatpush1.msra.mxu0 %v2420
        %2440 = vmatprep.subr.mxu0 0.0
        %2441 = vmatpush1.msra.mxu0 0.0
        %2442 = vmatprep.subr.mxu0 0.0
        %2443 = vmatpush1.msra.mxu0 0.0
        %2444 = vmatprep.subr.mxu0 0.0
        %2445 = vmatpush1.msra.mxu0 0.0
        %2446 = vmatprep.subr.mxu0 0.0
        %2447 = vmatpush1.msra.mxu0 0.0
        %2448 = vmatprep.subr.mxu0 0.0
        %2449 = vmatpush1.msra.mxu0 0.0
        %2450 = vmatprep.subr.mxu0 0.0
        %2451 = vmatpush1.msra.mxu0 0.0
        %2452 = vmatprep.subr.mxu0 0.0
        %2453 = vmatpush1.msra.mxu0 0.0
        %2454 = vmatprep.subr.mxu0 0.0
        %2455 = vmatpush1.msra.mxu0 0.0
        %2456 = vmatprep.subr.mxu0 0.0
        %2457 = vmatpush1.msra.mxu0 0.0
        %2458 = vmatprep.subr.mxu0 0.0
        %2459 = vmatpush1.msra.mxu0 0.0
        %2460 = vmatprep.subr.mxu0 0.0
        %2461 = vmatpush1.msra.mxu0 0.0
        %2462 = vmatprep.subr.mxu0 0.0
        %2463 = vmatpush1.msra.mxu0 0.0
        %2464 = vmatprep.subr.mxu0 0.0
        %2465 = vmatpush1.msra.mxu0 0.0
        %2466 = vmatprep.subr.mxu0 0.0
        %2467 = vmatpush1.msra.mxu0 0.0
        %2468 = vmatprep.subr.mxu0 0.0
        %2469 = vmatpush1.msra.mxu0 0.0
        %2470 = vmatprep.subr.mxu0 0.0
        %2471 = vmatpush1.msra.mxu0 0.0
        %2472 = vmatprep.subr.mxu0 0.0
        %2473 = vmatpush1.msra.mxu0 0.0
        %2474 = vmatprep.subr.mxu0 0.0
        %2475 = vmatpush1.msra.mxu0 0.0
        %2476 = vmatprep.subr.mxu0 0.0
        %2477 = vmatpush1.msra.mxu0 0.0
        %2478 = vmatprep.subr.mxu0 0.0
        %2479 = vmatpush1.msra.mxu0 0.0
        %2480 = vmatprep.subr.mxu0 0.0
        %2481 = vmatpush1.msra.mxu0 0.0
        %2482 = vmatprep.subr.mxu0 0.0
        %2483 = vmatpush1.msra.mxu0 0.0
        %2484 = vmatprep.subr.mxu0 0.0
        %2485 = vmatpush1.msra.mxu0 0.0
        %2486 = vmatprep.subr.mxu0 0.0
        %2487 = vmatpush1.msra.mxu0 0.0
        %2488 = vmatprep.subr.mxu0 0.0
        %2489 = vmatpush1.msra.mxu0 0.0
        %2490 = vmatprep.subr.mxu0 0.0
        %2491 = vmatpush1.msra.mxu0 0.0
        %2492 = vmatprep.subr.mxu0 0.0
        %2493 = vmatpush1.msra.mxu0 0.0
        %2494 = vmatprep.subr.mxu0 0.0
        %2495 = vmatpush1.msra.mxu0 0.0
        %2496 = vmatprep.mubr.f32.mxu0 0.0
        %2497 = vmatmul.mubr.f32.gmra.mrb[0].mxu0 %v2430
        %v2498 = vpop.f32.mrb[0].mxu0
        %v2499 = vadd.f32 %v2427, %v2498
        %v2500 = vpop.f32.mrb[0].mxu0
        %2501 = vdwg.mxu0
        %v2502 = vadd.f32 %v2499, %v1655
        %s2503 = scalar_lea.vmem %s8, 1
        %v2504 = vld [vmem:[%s2503] sm:$0x1]
        %s2505 = scalar_lea.vmem %s9, 1
        %v2506 = vld [vmem:[%s2505] sm:$0x1]
        %v2507 = vsel %vm533, %v2502, 0.0
        %2508 = vadd.xlane.f32.xlu0 %v2507
        %v2509 = vpop.xlane.xlu0 %2508
        %v2510 = vmul.f32 %v2509, %v537
        %v2511 = vsub.f32 %v2502, %v2510
        %v2512 = vmul.f32 %v2511, %v2511
        %v2513 = vsel %vm533, %v2512, 0.0
        %2514 = vadd.xlane.f32.xlu0 %v2513
        %v2515 = vpop.xlane.xlu0 %2514
        %v2516 = vmul.f32 %v2515, %v537
        %v2517 = vadd.f32 %v2516, 1e-12
        %v2518 = vrsqrt.pop %v2517
        %v2519 = vmul.f32 %v2511, %v2518
        %v2521 = vlaneseq
        %v2522 = vshrl.u32 %v2521, 7
        %v2523 = vsub.s32 0, %v2522
        %v2524 = vrot.slane %v2504, %v2523
        %v2526 = vmul.f32 %v2519, %v2524
        %v2528 = vlaneseq
        %v2529 = vshrl.u32 %v2528, 7
        %v2530 = vsub.s32 0, %v2529
        %v2531 = vrot.slane %v2506, %v2530
        %v2533 = vadd.f32 %v2526, %v2531
        %s2534 = scalar_lea.vmem %s10, 32
        %v2535 = vld [vmem:[%s2534] sm:$0xff]
        %v2536 = vld [vmem:[%s2534 + $0x8] sm:$0xff]
        %v2537 = vld [vmem:[%s2534 + $0x10] sm:$0xff]
        %v2538 = vld [vmem:[%s2534 + $0x18] sm:$0xff]
        %s2539 = scalar_lea.vmem %s11, 1
        %v2540 = vld [vmem:[%s2539] sm:$0x1]
        %v2542 = vlaneseq
        %v2543 = vshrl.u32 %v2542, 7
        %v2544 = vsub.s32 0, %v2543
        %v2545 = vrot.slane %v2540, %v2544
        %v2548 = vsel %vm533, %v2533, 0
        %2550 = vmatprep.subr.mxu0 0.0
        %2551 = vmatpush1.msra.mxu0 %v2535
        %2552 = vmatprep.subr.mxu0 0.0
        %2553 = vmatpush1.msra.mxu0 %v2536
        %2554 = vmatprep.subr.mxu0 0.0
        %2555 = vmatpush1.msra.mxu0 %v2537
        %2556 = vmatprep.subr.mxu0 0.0
        %2557 = vmatpush1.msra.mxu0 %v2538
        %2558 = vmatprep.subr.mxu0 0.0
        %2559 = vmatpush1.msra.mxu0 0.0
        %2560 = vmatprep.subr.mxu0 0.0
        %2561 = vmatpush1.msra.mxu0 0.0
        %2562 = vmatprep.subr.mxu0 0.0
        %2563 = vmatpush1.msra.mxu0 0.0
        %2564 = vmatprep.subr.mxu0 0.0
        %2565 = vmatpush1.msra.mxu0 0.0
        %2566 = vmatprep.subr.mxu0 0.0
        %2567 = vmatpush1.msra.mxu0 0.0
        %2568 = vmatprep.subr.mxu0 0.0
        %2569 = vmatpush1.msra.mxu0 0.0
        %2570 = vmatprep.subr.mxu0 0.0
        %2571 = vmatpush1.msra.mxu0 0.0
        %2572 = vmatprep.subr.mxu0 0.0
        %2573 = vmatpush1.msra.mxu0 0.0
        %2574 = vmatprep.subr.mxu0 0.0
        %2575 = vmatpush1.msra.mxu0 0.0
        %2576 = vmatprep.subr.mxu0 0.0
        %2577 = vmatpush1.msra.mxu0 0.0
        %2578 = vmatprep.subr.mxu0 0.0
        %2579 = vmatpush1.msra.mxu0 0.0
        %2580 = vmatprep.subr.mxu0 0.0
        %2581 = vmatpush1.msra.mxu0 0.0
        %2582 = vmatprep.subr.mxu0 0.0
        %2583 = vmatpush1.msra.mxu0 0.0
        %2584 = vmatprep.subr.mxu0 0.0
        %2585 = vmatpush1.msra.mxu0 0.0
        %2586 = vmatprep.subr.mxu0 0.0
        %2587 = vmatpush1.msra.mxu0 0.0
        %2588 = vmatprep.subr.mxu0 0.0
        %2589 = vmatpush1.msra.mxu0 0.0
        %2590 = vmatprep.subr.mxu0 0.0
        %2591 = vmatpush1.msra.mxu0 0.0
        %2592 = vmatprep.subr.mxu0 0.0
        %2593 = vmatpush1.msra.mxu0 0.0
        %2594 = vmatprep.subr.mxu0 0.0
        %2595 = vmatpush1.msra.mxu0 0.0
        %2596 = vmatprep.subr.mxu0 0.0
        %2597 = vmatpush1.msra.mxu0 0.0
        %2598 = vmatprep.subr.mxu0 0.0
        %2599 = vmatpush1.msra.mxu0 0.0
        %2600 = vmatprep.subr.mxu0 0.0
        %2601 = vmatpush1.msra.mxu0 0.0
        %2602 = vmatprep.subr.mxu0 0.0
        %2603 = vmatpush1.msra.mxu0 0.0
        %2604 = vmatprep.subr.mxu0 0.0
        %2605 = vmatpush1.msra.mxu0 0.0
        %2606 = vmatprep.subr.mxu0 0.0
        %2607 = vmatpush1.msra.mxu0 0.0
        %2608 = vmatprep.subr.mxu0 0.0
        %2609 = vmatpush1.msra.mxu0 0.0
        %2610 = vmatprep.subr.mxu0 0.0
        %2611 = vmatpush1.msra.mxu0 0.0
        %2612 = vmatprep.subr.mxu0 0.0
        %2613 = vmatpush1.msra.mxu0 0.0
        %2614 = vmatprep.mubr.f32.mxu0 0.0
        %2615 = vmatmul.mubr.f32.gmra.mrb[0].mxu0 %v2548
        %v2616 = vpop.f32.mrb[0].mxu0
        %v2617 = vadd.f32 %v2545, %v2616
        %v2618 = vpop.f32.mrb[0].mxu0
        %2619 = vdwg.mxu0
        %v2620 = vmul.f32 %v2617, 0.5
        %v2621 = vmul.f32 %v2617, 0.044715
        %v2622 = vmul.f32 %v2621, %v2617
        %v2623 = vmul.f32 %v2622, %v2617
        %v2624 = vadd.f32 %v2617, %v2623
        %v2625 = vmul.f32 %v2624, 0.7978846
        %v2626 = vtanh.pop %v2625
        %v2627 = vadd.f32 %v2626, 1.0
        %v2628 = vmul.f32 %v2620, %v2627
        %s2629 = scalar_lea.vmem %s12, 64
        %v2630 = vld [vmem:[%s2629] sm:$0xff]
        %v2631 = vld [vmem:[%s2629 + $0x8] sm:$0xff]
        %v2632 = vld [vmem:[%s2629 + $0x10] sm:$0xff]
        %v2633 = vld [vmem:[%s2629 + $0x18] sm:$0xff]
        %v2634 = vld [vmem:[%s2629 + $0x20] sm:$0xff]
        %v2635 = vld [vmem:[%s2629 + $0x28] sm:$0xff]
        %v2636 = vld [vmem:[%s2629 + $0x30] sm:$0xff]
        %v2637 = vld [vmem:[%s2629 + $0x38] sm:$0xff]
        %s2638 = scalar_lea.vmem %s13, 1
        %v2639 = vld [vmem:[%s2638] sm:$0x1]
        %v2641 = vlaneseq
        %v2642 = vshrl.u32 %v2641, 7
        %v2643 = vsub.s32 0, %v2642
        %v2644 = vrot.slane %v2639, %v2643
        %v2647 = vsel %vm1552, %v2628, 0
        %2649 = vmatprep.subr.mxu0 0.0
        %2650 = vmatpush1.msra.mxu0 %v2630
        %2651 = vmatprep.subr.mxu0 0.0
        %2652 = vmatpush1.msra.mxu0 %v2631
        %2653 = vmatprep.subr.mxu0 0.0
        %2654 = vmatpush1.msra.mxu0 %v2632
        %2655 = vmatprep.subr.mxu0 0.0
        %2656 = vmatpush1.msra.mxu0 %v2633
        %2657 = vmatprep.subr.mxu0 0.0
        %2658 = vmatpush1.msra.mxu0 %v2634
        %2659 = vmatprep.subr.mxu0 0.0
        %2660 = vmatpush1.msra.mxu0 %v2635
        %2661 = vmatprep.subr.mxu0 0.0
        %2662 = vmatpush1.msra.mxu0 %v2636
        %2663 = vmatprep.subr.mxu0 0.0
        %2664 = vmatpush1.msra.mxu0 %v2637
        %2665 = vmatprep.subr.mxu0 0.0
        %2666 = vmatpush1.msra.mxu0 0.0
        %2667 = vmatprep.subr.mxu0 0.0
        %2668 = vmatpush1.msra.mxu0 0.0
        %2669 = vmatprep.subr.mxu0 0.0
        %2670 = vmatpush1.msra.mxu0 0.0
        %2671 = vmatprep.subr.mxu0 0.0
        %2672 = vmatpush1.msra.mxu0 0.0
        %2673 = vmatprep.subr.mxu0 0.0
        %2674 = vmatpush1.msra.mxu0 0.0
        %2675 = vmatprep.subr.mxu0 0.0
        %2676 = vmatpush1.msra.mxu0 0.0
        %2677 = vmatprep.subr.mxu0 0.0
        %2678 = vmatpush1.msra.mxu0 0.0
        %2679 = vmatprep.subr.mxu0 0.0
        %2680 = vmatpush1.msra.mxu0 0.0
        %2681 = vmatprep.subr.mxu0 0.0
        %2682 = vmatpush1.msra.mxu0 0.0
        %2683 = vmatprep.subr.mxu0 0.0
        %2684 = vmatpush1.msra.mxu0 0.0
        %2685 = vmatprep.subr.mxu0 0.0
        %2686 = vmatpush1.msra.mxu0 0.0
        %2687 = vmatprep.subr.mxu0 0.0
        %2688 = vmatpush1.msra.mxu0 0.0
        %2689 = vmatprep.subr.mxu0 0.0
        %2690 = vmatpush1.msra.mxu0 0.0
        %2691 = vmatprep.subr.mxu0 0.0
        %2692 = vmatpush1.msra.mxu0 0.0
        %2693 = vmatprep.subr.mxu0 0.0
        %2694 = vmatpush1.msra.mxu0 0.0
        %2695 = vmatprep.subr.mxu0 0.0
        %2696 = vmatpush1.msra.mxu0 0.0
        %2697 = vmatprep.subr.mxu0 0.0
        %2698 = vmatpush1.msra.mxu0 0.0
        %2699 = vmatprep.subr.mxu0 0.0
        %2700 = vmatpush1.msra.mxu0 0.0
        %2701 = vmatprep.subr.mxu0 0.0
        %2702 = vmatpush1.msra.mxu0 0.0
        %2703 = vmatprep.subr.mxu0 0.0
        %2704 = vmatpush1.msra.mxu0 0.0
        %2705 = vmatprep.subr.mxu0 0.0
        %2706 = vmatpush1.msra.mxu0 0.0
        %2707 = vmatprep.subr.mxu0 0.0
        %2708 = vmatpush1.msra.mxu0 0.0
        %2709 = vmatprep.subr.mxu0 0.0
        %2710 = vmatpush1.msra.mxu0 0.0
        %2711 = vmatprep.subr.mxu0 0.0
        %2712 = vmatpush1.msra.mxu0 0.0
        %2713 = vmatprep.mubr.f32.mxu0 0.0
        %2714 = vmatmul.mubr.f32.gmra.mrb[0].mxu0 %v2647
        %v2715 = vpop.f32.mrb[0].mxu0
        %v2716 = vadd.f32 %v2644, %v2715
        %v2717 = vpop.f32.mrb[0].mxu0
        %2718 = vdwg.mxu0
        %v2719 = vadd.f32 %v2716, %v2533
        %s2720 = scalar_lea.vmem %s14, 1
        %v2721 = vld [vmem:[%s2720] sm:$0x1]
        %s2722 = scalar_lea.vmem %s15, 1
        %v2723 = vld [vmem:[%s2722] sm:$0x1]
        %v2724 = vsel %vm533, %v2719, 0.0
        %2725 = vadd.xlane.f32.xlu0 %v2724
        %v2726 = vpop.xlane.xlu0 %2725
        %v2727 = vmul.f32 %v2726, %v537
        %v2728 = vsub.f32 %v2719, %v2727
        %v2729 = vmul.f32 %v2728, %v2728
        %v2730 = vsel %vm533, %v2729, 0.0
        %2731 = vadd.xlane.f32.xlu0 %v2730
        %v2732 = vpop.xlane.xlu0 %2731
        %v2733 = vmul.f32 %v2732, %v537
        %v2734 = vadd.f32 %v2733, 1e-12
        %v2735 = vrsqrt.pop %v2734
        %v2736 = vmul.f32 %v2728, %v2735
        %v2738 = vlaneseq
        %v2739 = vshrl.u32 %v2738, 7
        %v2740 = vsub.s32 0, %v2739
        %v2741 = vrot.slane %v2721, %v2740
        %v2743 = vmul.f32 %v2736, %v2741
        %v2745 = vlaneseq
        %v2746 = vshrl.u32 %v2745, 7
        %v2747 = vsub.s32 0, %v2746
        %v2748 = vrot.slane %v2723, %v2747
        %v2750 = vadd.f32 %v2743, %v2748
        %vm2751 = vcmask 253952
        %2752 = vst.msk [vmem:[%s522] sm:$0x1] %vm2751, %v2750
        %s2753 = sand.u32 %s384, 1
        %s2754 = scalar_lea.sflag [#allocation3], %s2753
        %s2755 = sand.u32 %s384, 1
        %s2756 = scalar_lea.vmem [#allocation2], %s2755
        // Predicated region
        $region85: #{bert_forward_pallas.1} parent=83 // pred_check
          %p2757 = pneg %p394
        $region86: #{bert_forward_pallas.1} parent=83 // pred_check_branch
          %2759 = sbr.rel (%p2757) target = $region88
        $region87: #{bert_forward_pallas.1} parent=83 // pred_region
          %s2761 = ssub.s32 16, 16
          %2762 = vsyncadd %s2754, %s2761
          %s2763 = smul.addr %s30, 16
          %s2764 = scalar_lea.hbm %s16, %s2763
          %s2766 = sshll.u32 %s2756, 4
          %s2767 = int_to_ptr.vmem [resolvable:$true] %s2766
          %2769 = dma.vmem_to_hbm [thread:$0]  %s2767, 16, %s2764, %s2754
        $region88: #{bert_forward_pallas.1} parent=83 // pred_fallthru
          _
      $region84: #{bert_forward_pallas.1} parent=5 // pred_fallthru
        _
      %p2770 = scmp.le.s32.totalorder 2, %s25
      // Predicated region
      $region89: #{bert_forward_pallas.1} parent=5 // pred_check
        %p2771 = pneg %p2770
      $region90: #{bert_forward_pallas.1} parent=5 // pred_check_branch
        %2773 = sbr.rel (%p2771) target = $region92
      $region91: #{bert_forward_pallas.1} parent=5 // pred_region
        %s2774 = ssub.s32 %s25, 2
        // Predicated region
        $region93: #{bert_forward_pallas.1} parent=91 // pred_check
          %p2775 = pneg %p400
        $region94: #{bert_forward_pallas.1} parent=91 // pred_check_branch
          %2777 = sbr.rel (%p2775) target = $region96
        $region95: #{bert_forward_pallas.1} parent=91 // pred_region
          %s2778 = sand.u32 %s385, 1
          %s2779 = scalar_lea.sflag [#allocation3], %s2778
          %s2780 = sand.u32 %s385, 1
          %s2781 = scalar_lea.vmem [#allocation2], %s2780
          %2782 = dma.done %s2779, 16
        $region96: #{bert_forward_pallas.1} parent=91 // pred_fallthru
          _
      $region92: #{bert_forward_pallas.1} parent=5 // pred_fallthru
        _
    $region6: #{bert_forward_pallas.1} parent=1 // loop_footer
      %s29 = sadd.s32 1, %s25
    $region7: #{bert_forward_pallas.1} parent=1 // loop_footer_branch
      %24 = sbr.rel target = $region3
    $region8: #{bert_forward_pallas.1} parent=1 // loop_exit
      _
    %2783 = vsyncpa [#allocation3], 1
    %s2784 = scalar_lea.sflag [#allocation3], 1
    %2785 = vsyncpa %s2784, 1

</llo_original>
